<compile_context>
chip_gen: v5e
topology: v5e:2x2
jax: 0.10.0
libtpu: 0.0.40
codegen_flags: <defaults>
</compile_context>

<pallas_src>
import functools

import jax
import jax.numpy as jnp
import numpy as np
from jax.experimental import pallas as pl
from jax.experimental.pallas import tpu as pltpu


# --------------------------------------------------------------------------
# Helpers
# --------------------------------------------------------------------------
def _centered_dft_matrix(n):
    """Matrix M such that M @ v == ifftshift(fft(fftshift(v), norm='ortho'))."""
    eye = jnp.eye(n, dtype=jnp.complex64)
    m = jnp.fft.fftshift(eye, axes=0)
    m = jnp.fft.fft(m, axis=0, norm="ortho")
    m = jnp.fft.ifftshift(m, axes=0)
    return m.astype(jnp.complex64)


def _as_planar(z):
    """Accept a complex array or a pre-split (real, imag) pair -> f32 planes."""
    if isinstance(z, (tuple, list)):
        r, i = z
        return jnp.asarray(r, jnp.float32), jnp.asarray(i, jnp.float32)
    z = jnp.asarray(z)
    if jnp.issubdtype(z.dtype, jnp.complexfloating):
        return jnp.real(z).astype(jnp.float32), jnp.imag(z).astype(jnp.float32)
    return z.astype(jnp.float32), jnp.zeros(z.shape, jnp.float32)


def _physical_vmem_bytes():
    try:
        info = pltpu.get_tpu_info()
        for name in ("vmem_capacity_bytes", "vmem_bytes", "vmem_size_bytes"):
            v = getattr(info, name, None)
            if v:
                return int(v)
    except Exception:
        pass
    return 64 * 1024 * 1024  # conservative: v7x per-TC floor


def _footprint_bytes(cb, hp, w):
    """Rough per-step VMEM footprint (double buffers + scratch + temps)."""
    fixed = 16 * (hp * hp + w * w)      # 4 DFT-matrix planes, double-buffered
    fixed += 16 * hp * w                # image planes, double-buffered
    fixed += 8 * hp * hp                # hs / per-coil matmul temps slack
    per_coil = 64 * hp * w              # maps+out dbl-buf + tr/ti scratch + temps
    return fixed + per_coil * cb


def _pick_coil_block(B, C, hp, w, phys_vmem):
    """Largest cb that (a) fits ~70% of VMEM, (b) divides C, (c) keeps >=2 steps."""
    budget = int(phys_vmem * 0.7)
    per_coil = 64 * hp * w
    fixed = _footprint_bytes(0, hp, w)
    cb = max(1, min(C, (budget - fixed) // per_coil if budget > fixed else 1))
    # keep >=2 grid steps (v7x has 2 TensorCores; also enables prefetch overlap)
    if C > 1 and B * pl.cdiv(C, cb) < 2:
        cb = min(cb, max(1, C // 2))
    cb = int(cb)
    while C % cb:
        cb -= 1
    return max(cb, 1)


# --------------------------------------------------------------------------
# Kernel
# --------------------------------------------------------------------------
def _mri_kernel(img_r, img_i, map_r, map_i, mw_r, mw_i, mh_r, mh_i,
                out_r, out_i, tr_s, ti_s, *, cb, h, w, precision):
    # ---- coil combine: x[c] = image * maps[c]  (complex, broadcast over CB)
    ir = img_r[...]                     # [H, W]
    ii = img_i[...]
    mr = map_r[...]                     # [CB, H, W]
    mi = map_i[...]
    xr = (ir * mr - ii * mi).reshape(cb * h, w)   # coils stacked along M
    xi = (ir * mi + ii * mr).reshape(cb * h, w)

    dot = functools.partial(jnp.dot, preferred_element_type=jnp.float32,
                            precision=precision)

    # ---- column transform + mask, all coils in ONE matmul:
    #      t = x @ (M_W^T * mask[b])   (Gauss 3-mult complex matmul)
    cr = mw_r[...]                      # [W, W] (mask already folded in)
    ci = mw_i[...]
    cs = cr + ci
    u1 = dot(xr, cr)
    u2 = dot(xi, ci)
    u3 = dot(xr + xi, cs)
    tr_s[...] = (u1 - u2).reshape(cb, h, w)        # park in VMEM scratch so the
    ti_s[...] = (u3 - u1 - u2).reshape(cb, h, w)   # row loop slices a ref

    # ---- row transform per coil: ksp[c] = M_H @ t[c]  (Gauss 3-mult)
    hr = mh_r[...]                      # [H, H]
    hi = mh_i[...]
    hs = hr + hi                        # hoisted out of the coil loop

    def row_step(c, carry):
        tcr = tr_s[c]                   # dynamic first-axis ref load, [H, W]
        tci = ti_s[c]
        v1 = dot(hr, tcr)
        v2 = dot(hi, tci)
        v3 = dot(hs, tcr + tci)
        out_r[c] = v1 - v2              # dynamic first-axis store
        out_i[c] = v3 - v1 - v2
        return carry

    # fori_loop bounds live ranges (vs. a static Python unroll); unroll only
    # when the coil block is small.
    jax.lax.fori_loop(0, cb, row_step, 0, unroll=(cb <= 4))


# --------------------------------------------------------------------------
# Wrapper
# --------------------------------------------------------------------------
def multicoil_forward_mri(image, maps, mask, orientation="vertical",
                          coil_block=None,
                          precision=jax.lax.Precision.HIGHEST,
                          return_planar=False):
    """image: [B,H,W] c64 (or (r,i) pair), maps: [B,C,H,W] c64 (or pair),
    mask: [B,W] -> ksp [B,C,H,W] c64 (or (real, imag) f32 pair)."""
    if orientation != "vertical":
        raise NotImplementedError("only 'vertical' orientation implemented")

    img_r, img_i = _as_planar(image)
    map_r, map_i = _as_planar(maps)
    mask = jnp.asarray(mask)
    if mask.ndim != 2:
        raise NotImplementedError("only a [B, W] mask is supported")

    B, C, H, W = map_r.shape

    # ---- pad H to a multiple of 8 (f32 sublane tile) so in-kernel reshapes /
    #      per-coil slices never cross (8,128) tile boundaries.
    Hp = -(-H // 8) * 8
    if Hp != H:
        img_r = jnp.pad(img_r, ((0, 0), (0, Hp - H), (0, 0)))
        img_i = jnp.pad(img_i, ((0, 0), (0, Hp - H), (0, 0)))
        map_r = jnp.pad(map_r, ((0, 0), (0, 0), (0, Hp - H), (0, 0)))
        map_i = jnp.pad(map_i, ((0, 0), (0, 0), (0, Hp - H), (0, 0)))

    # ---- DFT matrices; fold the 'vertical' mask into the column transform.
    mh = _centered_dft_matrix(H)                           # [H, H]
    if Hp != H:
        mh = jnp.pad(mh, ((0, Hp - H), (0, Hp - H)))       # zero rows/cols
    mwt = _centered_dft_matrix(W).T                        # [W, W]
    mwt_masked = mwt[None, :, :] * mask.astype(jnp.complex64)[:, None, :]

    mh_r = jnp.real(mh).astype(jnp.float32)
    mh_i = jnp.imag(mh).astype(jnp.float32)
    mw_r = jnp.real(mwt_masked).astype(jnp.float32)
    mw_i = jnp.imag(mwt_masked).astype(jnp.float32)

    # ---- coil-block / VMEM-limit sizing.
    phys_vmem = _physical_vmem_bytes()
    if coil_block is None:
        cb = _pick_coil_block(B, C, Hp, W, phys_vmem)
    else:
        cb = int(coil_block)
        if C % cb != 0:
            raise ValueError("C must be divisible by coil_block")
    needed = _footprint_bytes(cb, Hp, W)
    vmem_limit = int(max(min(needed + (4 << 20), phys_vmem * 9 // 10), 32 << 20))

    kernel = functools.partial(_mri_kernel, cb=cb, h=Hp, w=W, precision=precision)

    img_spec = pl.BlockSpec((None, Hp, W), lambda b, j: (b, 0, 0))
    map_spec = pl.BlockSpec((None, cb, Hp, W), lambda b, j: (b, j, 0, 0))
    mw_spec = pl.BlockSpec((None, W, W), lambda b, j: (b, 0, 0))
    mh_spec = pl.BlockSpec((Hp, Hp), lambda b, j: (0, 0))
    out_spec = pl.BlockSpec((None, cb, Hp, W), lambda b, j: (b, j, 0, 0))

    flops = 6 * B * C * Hp * W * (Hp + W)                  # 6 real matmuls/coil
    bytes_acc = 8 * (B * Hp * W + 2 * B * C * Hp * W) + 8 * (B * W * W + Hp * Hp)

    out_r, out_i = pl.pallas_call(
        kernel,
        out_shape=(jax.ShapeDtypeStruct((B, C, Hp, W), jnp.float32),
                   jax.ShapeDtypeStruct((B, C, Hp, W), jnp.float32)),
        grid=(B, C // cb),
        in_specs=[img_spec, img_spec, map_spec, map_spec,
                  mw_spec, mw_spec, mh_spec, mh_spec],
        out_specs=(out_spec, out_spec),
        scratch_shapes=[pltpu.VMEM((cb, Hp, W), jnp.float32),
                        pltpu.VMEM((cb, Hp, W), jnp.float32)],
        compiler_params=pltpu.CompilerParams(
            dimension_semantics=("parallel", "parallel"),
            vmem_limit_bytes=vmem_limit),
        cost_estimate=pl.CostEstimate(flops=flops, transcendentals=0,
                                      bytes_accessed=bytes_acc),
    )(img_r, img_i, map_r, map_i, mw_r, mw_i, mh_r, mh_i)

    if Hp != H:
        out_r = out_r[:, :, :H, :]
        out_i = out_i[:, :, :H, :]
    if return_planar:
        # Skip the complex recombine (saves ~16*B*C*H*W bytes of HBM traffic)
        return out_r, out_i
    return (out_r + 1j * out_i).astype(jnp.complex64)


# --------------------------------------------------------------------------
# Reference + demo
# --------------------------------------------------------------------------
def _reference_forward(image, maps, mask):
    coils = image[:, None] * maps
    x = jnp.fft.fftshift(coils, axes=(-2, -1))
    x = jnp.fft.fft2(x, axes=(-2, -1), norm="ortho")
    x = jnp.fft.ifftshift(x, axes=(-2, -1))
    return x * mask[:, None, None, :]


if __name__ == "__main__":
    B, C, H, W = 2, 4, 16, 16
    key = jax.random.PRNGKey(0)
    k1, k2, k3, k4, k5 = jax.random.split(key, 5)

    image = (jax.random.normal(k1, (B, H, W), jnp.float32)
             + 1j * jax.random.normal(k2, (B, H, W), jnp.float32)).astype(jnp.complex64)
    maps = (jax.random.normal(k3, (B, C, H, W), jnp.float32)
            + 1j * jax.random.normal(k4, (B, C, H, W), jnp.float32)).astype(jnp.complex64)
    mask = (jax.random.bernoulli(k5, 0.5, (B, W))).astype(jnp.complex64)

    ksp = multicoil_forward_mri(image, maps, mask, orientation="vertical")
    ksp = jax.block_until_ready(ksp)

    ref = _reference_forward(image, maps, mask)
    assert ksp.shape == (B, C, H, W) and ksp.dtype == jnp.complex64
    np.testing.assert_allclose(np.asarray(ksp), np.asarray(ref),
                               rtol=1e-4, atol=1e-4)
    print("KERNEL_OK")
</pallas_src>

<mosaic_0001>
module attributes {stable_mosaic.version = 11 : i64} {
  func.func @_mri_kernel(%arg0: i32, %arg1: i32, %arg2: memref<1x16x16xf32, #tpu.memory_space<vmem>>, %arg3: memref<1x16x16xf32, #tpu.memory_space<vmem>>, %arg4: memref<1x4x16x16xf32, #tpu.memory_space<vmem>>, %arg5: memref<1x4x16x16xf32, #tpu.memory_space<vmem>>, %arg6: memref<1x16x16xf32, #tpu.memory_space<vmem>>, %arg7: memref<1x16x16xf32, #tpu.memory_space<vmem>>, %arg8: memref<16x16xf32, #tpu.memory_space<vmem>>, %arg9: memref<16x16xf32, #tpu.memory_space<vmem>>, %arg10: memref<1x4x16x16xf32, #tpu.memory_space<vmem>>, %arg11: memref<1x4x16x16xf32, #tpu.memory_space<vmem>>, %arg12: memref<4x16x16xf32, #tpu.memory_space<vmem>>, %arg13: memref<4x16x16xf32, #tpu.memory_space<vmem>>) attributes {dimension_semantics = [#tpu.dimension_semantics<parallel>, #tpu.dimension_semantics<parallel>], iteration_bounds = array<i64: 2, 1>, scalar_prefetch = 0 : i64, scratch_operands = 2 : i64, tpu.core_type = #tpu.core_type<tc>, window_params = [{transform_indices = @transform_0, window_bounds = array<i64: 1, 16, 16>}, {transform_indices = @transform_1, window_bounds = array<i64: 1, 16, 16>}, {transform_indices = @transform_2, window_bounds = array<i64: 1, 4, 16, 16>}, {transform_indices = @transform_3, window_bounds = array<i64: 1, 4, 16, 16>}, {transform_indices = @transform_4, window_bounds = array<i64: 1, 16, 16>}, {transform_indices = @transform_5, window_bounds = array<i64: 1, 16, 16>}, {pipeline_mode = #tpu.pipeline_mode<synchronous>, transform_indices = @transform_6, window_bounds = array<i64: 16, 16>}, {pipeline_mode = #tpu.pipeline_mode<synchronous>, transform_indices = @transform_7, window_bounds = array<i64: 16, 16>}, {transform_indices = @transform_8, window_bounds = array<i64: 1, 4, 16, 16>}, {transform_indices = @transform_9, window_bounds = array<i64: 1, 4, 16, 16>}]} {
    %c0 = arith.constant 0 : index
    %c0_0 = arith.constant 0 : index
    %c0_1 = arith.constant 0 : index
    %0 = vector.load %arg2[%c0, %c0_0, %c0_1] : memref<1x16x16xf32, #tpu.memory_space<vmem>>, vector<1x16x16xf32>
    %1 = vector.shape_cast %0 : vector<1x16x16xf32> to vector<16x16xf32>
    %c0_2 = arith.constant 0 : index
    %c0_3 = arith.constant 0 : index
    %c0_4 = arith.constant 0 : index
    %2 = vector.load %arg3[%c0_2, %c0_3, %c0_4] : memref<1x16x16xf32, #tpu.memory_space<vmem>>, vector<1x16x16xf32>
    %3 = vector.shape_cast %2 : vector<1x16x16xf32> to vector<16x16xf32>
    %c0_5 = arith.constant 0 : index
    %c0_6 = arith.constant 0 : index
    %c0_7 = arith.constant 0 : index
    %c0_8 = arith.constant 0 : index
    %4 = vector.load %arg4[%c0_5, %c0_6, %c0_7, %c0_8] : memref<1x4x16x16xf32, #tpu.memory_space<vmem>>, vector<1x4x16x16xf32>
    %5 = vector.shape_cast %4 : vector<1x4x16x16xf32> to vector<4x16x16xf32>
    %c0_9 = arith.constant 0 : index
    %c0_10 = arith.constant 0 : index
    %c0_11 = arith.constant 0 : index
    %c0_12 = arith.constant 0 : index
    %6 = vector.load %arg5[%c0_9, %c0_10, %c0_11, %c0_12] : memref<1x4x16x16xf32, #tpu.memory_space<vmem>>, vector<1x4x16x16xf32>
    %7 = vector.shape_cast %6 : vector<1x4x16x16xf32> to vector<4x16x16xf32>
    %8 = vector.shape_cast %1 : vector<16x16xf32> to vector<1x16x16xf32>
    %9 = vector.broadcast %8 : vector<1x16x16xf32> to vector<4x16x16xf32>
    %10 = arith.mulf %9, %5 : vector<4x16x16xf32>
    %11 = vector.shape_cast %3 : vector<16x16xf32> to vector<1x16x16xf32>
    %12 = vector.broadcast %11 : vector<1x16x16xf32> to vector<4x16x16xf32>
    %13 = arith.mulf %12, %7 : vector<4x16x16xf32>
    %14 = arith.subf %10, %13 : vector<4x16x16xf32>
    %15 = vector.shape_cast %14 : vector<4x16x16xf32> to vector<64x16xf32>
    %16 = vector.shape_cast %1 : vector<16x16xf32> to vector<1x16x16xf32>
    %17 = vector.broadcast %16 : vector<1x16x16xf32> to vector<4x16x16xf32>
    %18 = arith.mulf %17, %7 : vector<4x16x16xf32>
    %19 = vector.shape_cast %3 : vector<16x16xf32> to vector<1x16x16xf32>
    %20 = vector.broadcast %19 : vector<1x16x16xf32> to vector<4x16x16xf32>
    %21 = arith.mulf %20, %5 : vector<4x16x16xf32>
    %22 = arith.addf %18, %21 : vector<4x16x16xf32>
    %23 = vector.shape_cast %22 : vector<4x16x16xf32> to vector<64x16xf32>
    %c0_13 = arith.constant 0 : index
    %c0_14 = arith.constant 0 : index
    %c0_15 = arith.constant 0 : index
    %24 = vector.load %arg6[%c0_13, %c0_14, %c0_15] : memref<1x16x16xf32, #tpu.memory_space<vmem>>, vector<1x16x16xf32>
    %25 = vector.shape_cast %24 : vector<1x16x16xf32> to vector<16x16xf32>
    %c0_16 = arith.constant 0 : index
    %c0_17 = arith.constant 0 : index
    %c0_18 = arith.constant 0 : index
    %26 = vector.load %arg7[%c0_16, %c0_17, %c0_18] : memref<1x16x16xf32, #tpu.memory_space<vmem>>, vector<1x16x16xf32>
    %27 = vector.shape_cast %26 : vector<1x16x16xf32> to vector<16x16xf32>
    %28 = arith.addf %25, %27 : vector<16x16xf32>
    %cst = arith.constant dense<0.000000e+00> : vector<64x16xf32>
    %29 = tpu.matmul %15, %25, %cst {dimension_numbers = #tpu.dot_dimension_numbers<[1], [0], [0], [1], [0, 0, 1, 1], [], []>, precision = #tpu.contract_precision<fp32>} : vector<64x16xf32>, vector<16x16xf32>, vector<64x16xf32> -> vector<64x16xf32>
    %cst_19 = arith.constant dense<0.000000e+00> : vector<64x16xf32>
    %30 = tpu.matmul %23, %27, %cst_19 {dimension_numbers = #tpu.dot_dimension_numbers<[1], [0], [0], [1], [0, 0, 1, 1], [], []>, precision = #tpu.contract_precision<fp32>} : vector<64x16xf32>, vector<16x16xf32>, vector<64x16xf32> -> vector<64x16xf32>
    %31 = arith.addf %15, %23 : vector<64x16xf32>
    %cst_20 = arith.constant dense<0.000000e+00> : vector<64x16xf32>
    %32 = tpu.matmul %31, %28, %cst_20 {dimension_numbers = #tpu.dot_dimension_numbers<[1], [0], [0], [1], [0, 0, 1, 1], [], []>, precision = #tpu.contract_precision<fp32>} : vector<64x16xf32>, vector<16x16xf32>, vector<64x16xf32> -> vector<64x16xf32>
    %33 = arith.subf %29, %30 : vector<64x16xf32>
    %34 = vector.shape_cast %33 : vector<64x16xf32> to vector<4x16x16xf32>
    %c0_21 = arith.constant 0 : index
    %c0_22 = arith.constant 0 : index
    %c0_23 = arith.constant 0 : index
    %35 = vector.load %arg12[%c0_21, %c0_22, %c0_23] : memref<4x16x16xf32, #tpu.memory_space<vmem>>, vector<4x16x16xf32>
    tpu.vector_store %arg12[%c0_21, %c0_22, %c0_23], %34 {strides = array<i32>} : memref<4x16x16xf32, #tpu.memory_space<vmem>>, vector<4x16x16xf32>,
    %36 = arith.subf %32, %29 : vector<64x16xf32>
    %37 = arith.subf %36, %30 : vector<64x16xf32>
    %38 = vector.shape_cast %37 : vector<64x16xf32> to vector<4x16x16xf32>
    %c0_24 = arith.constant 0 : index
    %c0_25 = arith.constant 0 : index
    %c0_26 = arith.constant 0 : index
    %39 = vector.load %arg13[%c0_24, %c0_25, %c0_26] : memref<4x16x16xf32, #tpu.memory_space<vmem>>, vector<4x16x16xf32>
    tpu.vector_store %arg13[%c0_24, %c0_25, %c0_26], %38 {strides = array<i32>} : memref<4x16x16xf32, #tpu.memory_space<vmem>>, vector<4x16x16xf32>,
    %c0_27 = arith.constant 0 : index
    %c0_28 = arith.constant 0 : index
    %40 = vector.load %arg8[%c0_27, %c0_28] : memref<16x16xf32, #tpu.memory_space<vmem>>, vector<16x16xf32>
    %c0_29 = arith.constant 0 : index
    %c0_30 = arith.constant 0 : index
    %41 = vector.load %arg9[%c0_29, %c0_30] : memref<16x16xf32, #tpu.memory_space<vmem>>, vector<16x16xf32>
    %42 = arith.addf %40, %41 : vector<16x16xf32>
    %c0_i32 = arith.constant 0 : i32
    %43 = arith.index_cast %c0_i32 : i32 to index
    %c0_31 = arith.constant 0 : index
    %c0_32 = arith.constant 0 : index
    %44 = vector.load %arg12[%43, %c0_31, %c0_32] : memref<4x16x16xf32, #tpu.memory_space<vmem>>, vector<1x16x16xf32>
    %45 = vector.shape_cast %44 : vector<1x16x16xf32> to vector<16x16xf32>
    %46 = arith.index_cast %c0_i32 : i32 to index
    %c0_33 = arith.constant 0 : index
    %c0_34 = arith.constant 0 : index
    %47 = vector.load %arg13[%46, %c0_33, %c0_34] : memref<4x16x16xf32, #tpu.memory_space<vmem>>, vector<1x16x16xf32>
    %48 = vector.shape_cast %47 : vector<1x16x16xf32> to vector<16x16xf32>
    %cst_35 = arith.constant dense<0.000000e+00> : vector<16x16xf32>
    %49 = tpu.matmul %40, %45, %cst_35 {dimension_numbers = #tpu.dot_dimension_numbers<[1], [0], [0], [1], [0, 0, 1, 1], [], []>, precision = #tpu.contract_precision<fp32>} : vector<16x16xf32>, vector<16x16xf32>, vector<16x16xf32> -> vector<16x16xf32>
    %cst_36 = arith.constant dense<0.000000e+00> : vector<16x16xf32>
    %50 = tpu.matmul %41, %48, %cst_36 {dimension_numbers = #tpu.dot_dimension_numbers<[1], [0], [0], [1], [0, 0, 1, 1], [], []>, precision = #tpu.contract_precision<fp32>} : vector<16x16xf32>, vector<16x16xf32>, vector<16x16xf32> -> vector<16x16xf32>
    %51 = arith.addf %45, %48 : vector<16x16xf32>
    %cst_37 = arith.constant dense<0.000000e+00> : vector<16x16xf32>
    %52 = tpu.matmul %42, %51, %cst_37 {dimension_numbers = #tpu.dot_dimension_numbers<[1], [0], [0], [1], [0, 0, 1, 1], [], []>, precision = #tpu.contract_precision<fp32>} : vector<16x16xf32>, vector<16x16xf32>, vector<16x16xf32> -> vector<16x16xf32>
    %53 = arith.subf %49, %50 : vector<16x16xf32>
    %c0_38 = arith.constant 0 : index
    %54 = arith.index_cast %c0_i32 : i32 to index
    %c0_39 = arith.constant 0 : index
    %c0_40 = arith.constant 0 : index
    %55 = vector.load %arg10[%c0_38, %54, %c0_39, %c0_40] : memref<1x4x16x16xf32, #tpu.memory_space<vmem>>, vector<1x1x16x16xf32>
    %56 = vector.shape_cast %55 : vector<1x1x16x16xf32> to vector<16x16xf32>
    %57 = vector.shape_cast %53 : vector<16x16xf32> to vector<1x1x16x16xf32>
    tpu.vector_store %arg10[%c0_38, %54, %c0_39, %c0_40], %57 {strides = array<i32>} : memref<1x4x16x16xf32, #tpu.memory_space<vmem>>, vector<1x1x16x16xf32>,
    %58 = arith.subf %52, %49 : vector<16x16xf32>
    %59 = arith.subf %58, %50 : vector<16x16xf32>
    %c0_41 = arith.constant 0 : index
    %60 = arith.index_cast %c0_i32 : i32 to index
    %c0_42 = arith.constant 0 : index
    %c0_43 = arith.constant 0 : index
    %61 = vector.load %arg11[%c0_41, %60, %c0_42, %c0_43] : memref<1x4x16x16xf32, #tpu.memory_space<vmem>>, vector<1x1x16x16xf32>
    %62 = vector.shape_cast %61 : vector<1x1x16x16xf32> to vector<16x16xf32>
    %63 = vector.shape_cast %59 : vector<16x16xf32> to vector<1x1x16x16xf32>
    tpu.vector_store %arg11[%c0_41, %60, %c0_42, %c0_43], %63 {strides = array<i32>} : memref<1x4x16x16xf32, #tpu.memory_space<vmem>>, vector<1x1x16x16xf32>,
    %c1_i32 = arith.constant 1 : i32
    %64 = arith.index_cast %c1_i32 : i32 to index
    %c0_44 = arith.constant 0 : index
    %c0_45 = arith.constant 0 : index
    %65 = vector.load %arg12[%64, %c0_44, %c0_45] : memref<4x16x16xf32, #tpu.memory_space<vmem>>, vector<1x16x16xf32>
    %66 = vector.shape_cast %65 : vector<1x16x16xf32> to vector<16x16xf32>
    %67 = arith.index_cast %c1_i32 : i32 to index
    %c0_46 = arith.constant 0 : index
    %c0_47 = arith.constant 0 : index
    %68 = vector.load %arg13[%67, %c0_46, %c0_47] : memref<4x16x16xf32, #tpu.memory_space<vmem>>, vector<1x16x16xf32>
    %69 = vector.shape_cast %68 : vector<1x16x16xf32> to vector<16x16xf32>
    %cst_48 = arith.constant dense<0.000000e+00> : vector<16x16xf32>
    %70 = tpu.matmul %40, %66, %cst_48 {dimension_numbers = #tpu.dot_dimension_numbers<[1], [0], [0], [1], [0, 0, 1, 1], [], []>, precision = #tpu.contract_precision<fp32>} : vector<16x16xf32>, vector<16x16xf32>, vector<16x16xf32> -> vector<16x16xf32>
    %cst_49 = arith.constant dense<0.000000e+00> : vector<16x16xf32>
    %71 = tpu.matmul %41, %69, %cst_49 {dimension_numbers = #tpu.dot_dimension_numbers<[1], [0], [0], [1], [0, 0, 1, 1], [], []>, precision = #tpu.contract_precision<fp32>} : vector<16x16xf32>, vector<16x16xf32>, vector<16x16xf32> -> vector<16x16xf32>
    %72 = arith.addf %66, %69 : vector<16x16xf32>
    %cst_50 = arith.constant dense<0.000000e+00> : vector<16x16xf32>
    %73 = tpu.matmul %42, %72, %cst_50 {dimension_numbers = #tpu.dot_dimension_numbers<[1], [0], [0], [1], [0, 0, 1, 1], [], []>, precision = #tpu.contract_precision<fp32>} : vector<16x16xf32>, vector<16x16xf32>, vector<16x16xf32> -> vector<16x16xf32>
    %74 = arith.subf %70, %71 : vector<16x16xf32>
    %c0_51 = arith.constant 0 : index
    %75 = arith.index_cast %c1_i32 : i32 to index
    %c0_52 = arith.constant 0 : index
    %c0_53 = arith.constant 0 : index
    %76 = vector.load %arg10[%c0_51, %75, %c0_52, %c0_53] : memref<1x4x16x16xf32, #tpu.memory_space<vmem>>, vector<1x1x16x16xf32>
    %77 = vector.shape_cast %76 : vector<1x1x16x16xf32> to vector<16x16xf32>
    %78 = vector.shape_cast %74 : vector<16x16xf32> to vector<1x1x16x16xf32>
    tpu.vector_store %arg10[%c0_51, %75, %c0_52, %c0_53], %78 {strides = array<i32>} : memref<1x4x16x16xf32, #tpu.memory_space<vmem>>, vector<1x1x16x16xf32>,
    %79 = arith.subf %73, %70 : vector<16x16xf32>
    %80 = arith.subf %79, %71 : vector<16x16xf32>
    %c0_54 = arith.constant 0 : index
    %81 = arith.index_cast %c1_i32 : i32 to index
    %c0_55 = arith.constant 0 : index
    %c0_56 = arith.constant 0 : index
    %82 = vector.load %arg11[%c0_54, %81, %c0_55, %c0_56] : memref<1x4x16x16xf32, #tpu.memory_space<vmem>>, vector<1x1x16x16xf32>
    %83 = vector.shape_cast %82 : vector<1x1x16x16xf32> to vector<16x16xf32>
    %84 = vector.shape_cast %80 : vector<16x16xf32> to vector<1x1x16x16xf32>
    tpu.vector_store %arg11[%c0_54, %81, %c0_55, %c0_56], %84 {strides = array<i32>} : memref<1x4x16x16xf32, #tpu.memory_space<vmem>>, vector<1x1x16x16xf32>,
    %c2_i32 = arith.constant 2 : i32
    %85 = arith.index_cast %c2_i32 : i32 to index
    %c0_57 = arith.constant 0 : index
    %c0_58 = arith.constant 0 : index
    %86 = vector.load %arg12[%85, %c0_57, %c0_58] : memref<4x16x16xf32, #tpu.memory_space<vmem>>, vector<1x16x16xf32>
    %87 = vector.shape_cast %86 : vector<1x16x16xf32> to vector<16x16xf32>
    %88 = arith.index_cast %c2_i32 : i32 to index
    %c0_59 = arith.constant 0 : index
    %c0_60 = arith.constant 0 : index
    %89 = vector.load %arg13[%88, %c0_59, %c0_60] : memref<4x16x16xf32, #tpu.memory_space<vmem>>, vector<1x16x16xf32>
    %90 = vector.shape_cast %89 : vector<1x16x16xf32> to vector<16x16xf32>
    %cst_61 = arith.constant dense<0.000000e+00> : vector<16x16xf32>
    %91 = tpu.matmul %40, %87, %cst_61 {dimension_numbers = #tpu.dot_dimension_numbers<[1], [0], [0], [1], [0, 0, 1, 1], [], []>, precision = #tpu.contract_precision<fp32>} : vector<16x16xf32>, vector<16x16xf32>, vector<16x16xf32> -> vector<16x16xf32>
    %cst_62 = arith.constant dense<0.000000e+00> : vector<16x16xf32>
    %92 = tpu.matmul %41, %90, %cst_62 {dimension_numbers = #tpu.dot_dimension_numbers<[1], [0], [0], [1], [0, 0, 1, 1], [], []>, precision = #tpu.contract_precision<fp32>} : vector<16x16xf32>, vector<16x16xf32>, vector<16x16xf32> -> vector<16x16xf32>
    %93 = arith.addf %87, %90 : vector<16x16xf32>
    %cst_63 = arith.constant dense<0.000000e+00> : vector<16x16xf32>
    %94 = tpu.matmul %42, %93, %cst_63 {dimension_numbers = #tpu.dot_dimension_numbers<[1], [0], [0], [1], [0, 0, 1, 1], [], []>, precision = #tpu.contract_precision<fp32>} : vector<16x16xf32>, vector<16x16xf32>, vector<16x16xf32> -> vector<16x16xf32>
    %95 = arith.subf %91, %92 : vector<16x16xf32>
    %c0_64 = arith.constant 0 : index
    %96 = arith.index_cast %c2_i32 : i32 to index
    %c0_65 = arith.constant 0 : index
    %c0_66 = arith.constant 0 : index
    %97 = vector.load %arg10[%c0_64, %96, %c0_65, %c0_66] : memref<1x4x16x16xf32, #tpu.memory_space<vmem>>, vector<1x1x16x16xf32>
    %98 = vector.shape_cast %97 : vector<1x1x16x16xf32> to vector<16x16xf32>
    %99 = vector.shape_cast %95 : vector<16x16xf32> to vector<1x1x16x16xf32>
    tpu.vector_store %arg10[%c0_64, %96, %c0_65, %c0_66], %99 {strides = array<i32>} : memref<1x4x16x16xf32, #tpu.memory_space<vmem>>, vector<1x1x16x16xf32>,
    %100 = arith.subf %94, %91 : vector<16x16xf32>
    %101 = arith.subf %100, %92 : vector<16x16xf32>
    %c0_67 = arith.constant 0 : index
    %102 = arith.index_cast %c2_i32 : i32 to index
    %c0_68 = arith.constant 0 : index
    %c0_69 = arith.constant 0 : index
    %103 = vector.load %arg11[%c0_67, %102, %c0_68, %c0_69] : memref<1x4x16x16xf32, #tpu.memory_space<vmem>>, vector<1x1x16x16xf32>
    %104 = vector.shape_cast %103 : vector<1x1x16x16xf32> to vector<16x16xf32>
    %105 = vector.shape_cast %101 : vector<16x16xf32> to vector<1x1x16x16xf32>
    tpu.vector_store %arg11[%c0_67, %102, %c0_68, %c0_69], %105 {strides = array<i32>} : memref<1x4x16x16xf32, #tpu.memory_space<vmem>>, vector<1x1x16x16xf32>,
    %c3_i32 = arith.constant 3 : i32
    %106 = arith.index_cast %c3_i32 : i32 to index
    %c0_70 = arith.constant 0 : index
    %c0_71 = arith.constant 0 : index
    %107 = vector.load %arg12[%106, %c0_70, %c0_71] : memref<4x16x16xf32, #tpu.memory_space<vmem>>, vector<1x16x16xf32>
    %108 = vector.shape_cast %107 : vector<1x16x16xf32> to vector<16x16xf32>
    %109 = arith.index_cast %c3_i32 : i32 to index
    %c0_72 = arith.constant 0 : index
    %c0_73 = arith.constant 0 : index
    %110 = vector.load %arg13[%109, %c0_72, %c0_73] : memref<4x16x16xf32, #tpu.memory_space<vmem>>, vector<1x16x16xf32>
    %111 = vector.shape_cast %110 : vector<1x16x16xf32> to vector<16x16xf32>
    %cst_74 = arith.constant dense<0.000000e+00> : vector<16x16xf32>
    %112 = tpu.matmul %40, %108, %cst_74 {dimension_numbers = #tpu.dot_dimension_numbers<[1], [0], [0], [1], [0, 0, 1, 1], [], []>, precision = #tpu.contract_precision<fp32>} : vector<16x16xf32>, vector<16x16xf32>, vector<16x16xf32> -> vector<16x16xf32>
    %cst_75 = arith.constant dense<0.000000e+00> : vector<16x16xf32>
    %113 = tpu.matmul %41, %111, %cst_75 {dimension_numbers = #tpu.dot_dimension_numbers<[1], [0], [0], [1], [0, 0, 1, 1], [], []>, precision = #tpu.contract_precision<fp32>} : vector<16x16xf32>, vector<16x16xf32>, vector<16x16xf32> -> vector<16x16xf32>
    %114 = arith.addf %108, %111 : vector<16x16xf32>
    %cst_76 = arith.constant dense<0.000000e+00> : vector<16x16xf32>
    %115 = tpu.matmul %42, %114, %cst_76 {dimension_numbers = #tpu.dot_dimension_numbers<[1], [0], [0], [1], [0, 0, 1, 1], [], []>, precision = #tpu.contract_precision<fp32>} : vector<16x16xf32>, vector<16x16xf32>, vector<16x16xf32> -> vector<16x16xf32>
    %116 = arith.subf %112, %113 : vector<16x16xf32>
    %c0_77 = arith.constant 0 : index
    %117 = arith.index_cast %c3_i32 : i32 to index
    %c0_78 = arith.constant 0 : index
    %c0_79 = arith.constant 0 : index
    %118 = vector.load %arg10[%c0_77, %117, %c0_78, %c0_79] : memref<1x4x16x16xf32, #tpu.memory_space<vmem>>, vector<1x1x16x16xf32>
    %119 = vector.shape_cast %118 : vector<1x1x16x16xf32> to vector<16x16xf32>
    %120 = vector.shape_cast %116 : vector<16x16xf32> to vector<1x1x16x16xf32>
    tpu.vector_store %arg10[%c0_77, %117, %c0_78, %c0_79], %120 {strides = array<i32>} : memref<1x4x16x16xf32, #tpu.memory_space<vmem>>, vector<1x1x16x16xf32>,
    %121 = arith.subf %115, %112 : vector<16x16xf32>
    %122 = arith.subf %121, %113 : vector<16x16xf32>
    %c0_80 = arith.constant 0 : index
    %123 = arith.index_cast %c3_i32 : i32 to index
    %c0_81 = arith.constant 0 : index
    %c0_82 = arith.constant 0 : index
    %124 = vector.load %arg11[%c0_80, %123, %c0_81, %c0_82] : memref<1x4x16x16xf32, #tpu.memory_space<vmem>>, vector<1x1x16x16xf32>
    %125 = vector.shape_cast %124 : vector<1x1x16x16xf32> to vector<16x16xf32>
    %126 = vector.shape_cast %122 : vector<16x16xf32> to vector<1x1x16x16xf32>
    tpu.vector_store %arg11[%c0_80, %123, %c0_81, %c0_82], %126 {strides = array<i32>} : memref<1x4x16x16xf32, #tpu.memory_space<vmem>>, vector<1x1x16x16xf32>,
    %c4_i32 = arith.constant 4 : i32
    return
  }
  func.func @transform_0(%arg0: i32, %arg1: i32) -> (i32, i32, i32) {
    %c0_i32 = arith.constant 0 : i32
    %c0_i32_0 = arith.constant 0 : i32
    %c0_i32_1 = arith.constant 0 : i32
    return %arg0, %c0_i32, %c0_i32_0 : i32, i32, i32
  }
  func.func @transform_1(%arg0: i32, %arg1: i32) -> (i32, i32, i32) {
    %c0_i32 = arith.constant 0 : i32
    %c0_i32_0 = arith.constant 0 : i32
    %c0_i32_1 = arith.constant 0 : i32
    return %arg0, %c0_i32, %c0_i32_0 : i32, i32, i32
  }
  func.func @transform_2(%arg0: i32, %arg1: i32) -> (i32, i32, i32, i32) {
    %c0_i32 = arith.constant 0 : i32
    %c0_i32_0 = arith.constant 0 : i32
    %c0_i32_1 = arith.constant 0 : i32
    return %arg0, %arg1, %c0_i32, %c0_i32_0 : i32, i32, i32, i32
  }
  func.func @transform_3(%arg0: i32, %arg1: i32) -> (i32, i32, i32, i32) {
    %c0_i32 = arith.constant 0 : i32
    %c0_i32_0 = arith.constant 0 : i32
    %c0_i32_1 = arith.constant 0 : i32
    return %arg0, %arg1, %c0_i32, %c0_i32_0 : i32, i32, i32, i32
  }
  func.func @transform_4(%arg0: i32, %arg1: i32) -> (i32, i32, i32) {
    %c0_i32 = arith.constant 0 : i32
    %c0_i32_0 = arith.constant 0 : i32
    %c0_i32_1 = arith.constant 0 : i32
    return %arg0, %c0_i32, %c0_i32_0 : i32, i32, i32
  }
  func.func @transform_5(%arg0: i32, %arg1: i32) -> (i32, i32, i32) {
    %c0_i32 = arith.constant 0 : i32
    %c0_i32_0 = arith.constant 0 : i32
    %c0_i32_1 = arith.constant 0 : i32
    return %arg0, %c0_i32, %c0_i32_0 : i32, i32, i32
  }
  func.func @transform_6(%arg0: i32, %arg1: i32) -> (i32, i32) {
    %c0_i32 = arith.constant 0 : i32
    %c0_i32_0 = arith.constant 0 : i32
    %c0_i32_1 = arith.constant 0 : i32
    return %c0_i32, %c0_i32_0 : i32, i32
  }
  func.func @transform_7(%arg0: i32, %arg1: i32) -> (i32, i32) {
    %c0_i32 = arith.constant 0 : i32
    %c0_i32_0 = arith.constant 0 : i32
    %c0_i32_1 = arith.constant 0 : i32
    return %c0_i32, %c0_i32_0 : i32, i32
  }
  func.func @transform_8(%arg0: i32, %arg1: i32) -> (i32, i32, i32, i32) {
    %c0_i32 = arith.constant 0 : i32
    %c0_i32_0 = arith.constant 0 : i32
    %c0_i32_1 = arith.constant 0 : i32
    return %arg0, %arg1, %c0_i32, %c0_i32_0 : i32, i32, i32, i32
  }
  func.func @transform_9(%arg0: i32, %arg1: i32) -> (i32, i32, i32, i32) {
    %c0_i32 = arith.constant 0 : i32
    %c0_i32_0 = arith.constant 0 : i32
    %c0_i32_1 = arith.constant 0 : i32
    return %arg0, %arg1, %c0_i32, %c0_i32_0 : i32, i32, i32, i32
  }
}

</mosaic_0001>

<llo_original>
// kernel: tpu_custom_call.1
$region0: #{tpu_custom_call.1}
  #allocation0 [shape = 'u32[]', space=smem, size = 0x4, offset = 0x4, fixed_abs, tag = 'smem constant byte address 0x4 - core index']
  #allocation1 [shape = 'u32[72,128]{1,0:T(1,128)}', space=vmem, size = 0x9000, scoped, tag = 'internal scratch']
  #allocation2 [shape = 'f32[4,16,16]{2,1,0:T(8,128)}', space=vmem, size = 0x8000, scoped, tag = 'scratch operand']
  #allocation3 [shape = 'f32[4,16,16]{2,1,0:T(8,128)}', space=vmem, size = 0x8000, scoped, tag = 'scratch operand']
  %s0 = inlined_call_operand.hbm [shape: f32[2,16,16], index: 0, kind: input, shape index: {}]
  %s1 = inlined_call_operand.hbm [shape: f32[2,16,16], index: 1, kind: input, shape index: {}]
  %s2 = inlined_call_operand.hbm [shape: f32[2,4,16,16], index: 2, kind: input, shape index: {}]
  %s3 = inlined_call_operand.hbm [shape: f32[2,4,16,16], index: 3, kind: input, shape index: {}]
  %s4 = inlined_call_operand.hbm [shape: f32[2,16,16], index: 4, kind: input, shape index: {}]
  %s5 = inlined_call_operand.hbm [shape: f32[2,16,16], index: 5, kind: input, shape index: {}]
  %s6 = inlined_call_operand.hbm [shape: f32[16,16], index: 6, kind: input, shape index: {}]
  %s7 = inlined_call_operand.hbm [shape: f32[16,16], index: 7, kind: input, shape index: {}]
  %s8 = inlined_call_operand.hbm [shape: f32[2,4,16,16], index: 8, kind: output, shape index: {0}]
  %s9 = inlined_call_operand.hbm [shape: f32[2,4,16,16], index: 9, kind: output, shape index: {1}]
  %10 = xla_tuple %s8, %s9
  %s11 = sld [smem:[#allocation0]]
  $region105: #{tpu_custom_call.1} parent=0
    _
  %s13 = ssub.s32 1, %s11
  %s14 = scalar_select 0, %s13, %s11
  $region1: #{tpu_custom_call.1} parent=0
    #allocation4 [shape = 'u8[16384]{0}', space=vmem, size = 0x4000, scoped, tag = 'input window, operand 0']
    #allocation5 [shape = 's32[2]{0}', space=sflag, size = 0x8, scoped, tag = 'scoped memory for tpu_custom_call.1']
    #allocation6 [shape = 's32[2]{0}', space=sflag, size = 0x8, scoped, tag = 'scoped memory for tpu_custom_call.1']
    #allocation7 [shape = 'u8[16384]{0}', space=vmem, size = 0x4000, scoped, tag = 'input window, operand 1']
    #allocation8 [shape = 's32[2]{0}', space=sflag, size = 0x8, scoped, tag = 'scoped memory for tpu_custom_call.1']
    #allocation9 [shape = 'u8[65536]{0}', space=vmem, size = 0x10000, scoped, tag = 'input window, operand 2']
    #allocation10 [shape = 'u8[65536]{0}', space=vmem, size = 0x10000, scoped, tag = 'input window, operand 3']
    #allocation11 [shape = 's32[2]{0}', space=sflag, size = 0x8, scoped, tag = 'scoped memory for tpu_custom_call.1']
    #allocation12 [shape = 'u8[16384]{0}', space=vmem, size = 0x4000, scoped, tag = 'input window, operand 4']
    #allocation13 [shape = 'u8[16384]{0}', space=vmem, size = 0x4000, scoped, tag = 'input window, operand 5']
    #allocation14 [shape = 's32[2]{0}', space=sflag, size = 0x8, scoped, tag = 'scoped memory for tpu_custom_call.1']
    #allocation15 [shape = 'u8[8192]{0}', space=vmem, size = 0x2000, scoped, tag = 'input window, operand 6, single buffered']
    #allocation16 [shape = 'u8[8192]{0}', space=vmem, size = 0x2000, scoped, tag = 'input window, operand 7, single buffered']
    #allocation17 [shape = 's32[1]{0}', space=sflag, size = 0x4, scoped, tag = 'scoped memory for tpu_custom_call.1']
    #allocation18 [shape = 'u8[65536]{0}', space=vmem, size = 0x10000, scoped, tag = 'output window, operand 0']
    #allocation19 [shape = 'u8[65536]{0}', space=vmem, size = 0x10000, scoped, tag = 'output window, operand 1']
    #allocation20 [shape = 's32[2]{0}', space=sflag, size = 0x8, scoped, tag = 'scoped memory for tpu_custom_call.1']
    %15 = vsyncpa [#allocation5], 0
    %s16 = scalar_lea.sflag [#allocation5], 1
    %17 = vsyncpa %s16, 0
    %18 = vsyncpa [#allocation8], 0
    %s19 = scalar_lea.sflag [#allocation8], 1
    %20 = vsyncpa %s19, 0
    %21 = vsyncpa [#allocation11], 0
    %s22 = scalar_lea.sflag [#allocation11], 1
    %23 = vsyncpa %s22, 0
    %24 = vsyncpa [#allocation14], 0
    %s25 = scalar_lea.sflag [#allocation14], 1
    %26 = vsyncpa %s25, 0
    %27 = vsyncpa [#allocation17], 0
    %28 = vsyncpa [#allocation6], 0
    %s29 = scalar_lea.sflag [#allocation6], 1
    %30 = vsyncpa %s29, 0
    %31 = vsyncpa [#allocation20], 0
    %s32 = scalar_lea.sflag [#allocation20], 1
    %33 = vsyncpa %s32, 0
    loop: start=0, step=1, limit=4
    $region2: #{tpu_custom_call.1} parent=1 // loop_pre_header
      _
    $region3: #{tpu_custom_call.1} parent=1 // loop_header
      %s35 = sphi 0, %s39
      %p36 = scmp.ge.s32.totalorder %s35, 4
      %s42 = sphi 0, %s54
      %s43 = sphi 0, %s50
      %s44 = sphi 0, %s42
      %s45 = sphi 0, %s43
      %s46 = sphi 0, %s44
      %s47 = sphi 0, %s45
      %s57 = sphi 0, %s59
      %s60 = sphi 0, %s57
      %s61 = sphi 0, %s60
      %s77 = sphi 0, %s61
      %s83 = sphi 0, %s85
      %s86 = sphi 0, %s83
      %s87 = sphi 0, %s86
      %s103 = sphi 0, %s87
      %s111 = sphi 0, %s113
      %s114 = sphi 0, %s111
      %s115 = sphi 0, %s114
      %s131 = sphi 0, %s115
      %s139 = sphi 0, %s141
      %s142 = sphi 0, %s139
      %s143 = sphi 0, %s142
      %s159 = sphi 0, %s143
      %s165 = sphi 0, %s167
      %s168 = sphi 0, %s165
      %s169 = sphi 0, %s168
      %s185 = sphi 0, %s169
      %s191 = sphi 0, %s193
      %s194 = sphi 0, %s191
      %s195 = sphi 0, %s194
      %s211 = sphi 0, %s195
      %s215 = sphi 0, %s215
      %s217 = sphi 0, %s215
      %s218 = sphi 0, %s217
      %s232 = sphi 0, %s218
      %s236 = sphi 0, %s236
      %s238 = sphi 0, %s236
      %s239 = sphi 0, %s238
      %s253 = sphi 0, %s239
      %s261 = sphi 0, %s263
      %s264 = sphi 0, %s261
      %s265 = sphi 0, %s264
      %s281 = sphi 0, %s265
      %s289 = sphi 0, %s291
      %s292 = sphi 0, %s289
      %s293 = sphi 0, %s292
      %s309 = sphi 0, %s293
    $region4: #{tpu_custom_call.1} parent=1 // loop_header_branch
      %38 = sbr.rel (%p36) target = $region8
    $region5: #{tpu_custom_call.1} parent=1 // loop_body
      %s40 = ssub.s32 %s35, 1
      %s41 = ssub.s32 %s35, 2
      %s48 = sadd.s32 1, %s43
      %p49 = scmp.ge.s32.totalorder %s48, 1
      %s50 = scalar_select %p49, 0, %s48
      %s51 = sadd.s32 1, %s42
      %s52 = scalar_select %p49, %s51, %s42
      %p53 = scmp.ge.s32.totalorder %s52, 2
      %s54 = scalar_select %p53, 0, %s52
      %s55 = ssub.s32 %s42, %s54
      %p56 = scmp.eq.s32.totalorder %s55, 0
      %s58 = sadd.s32 %s57, 1
      %s59 = scalar_select %p56, %s57, %s58
      %p62 = pneg %p56
      %p63 = scmp.eq.s32.totalorder %s35, 1
      %p64 = por %p62, %p63
      %p65 = scmp.ne.s32.totalorder %s57, %s60
      %p66 = scmp.eq.s32.totalorder %s35, 0
      %p67 = por %p65, %p66
      %p68 = scmp.ne.s32.totalorder %s57, %s60
      %p69 = scmp.eq.s32.totalorder %s40, 1
      %p70 = por %p68, %p69
      %p71 = scmp.ne.s32.totalorder %s60, %s61
      %p72 = scmp.eq.s32.totalorder %s40, 0
      %p73 = por %p71, %p72
      %p74 = scmp.ne.s32.totalorder %s60, %s61
      %p75 = scmp.eq.s32.totalorder %s41, 1
      %p76 = por %p74, %p75
      %p78 = scmp.ne.s32.totalorder %s61, %s77
      %p79 = scmp.eq.s32.totalorder %s41, 0
      %p80 = por %p78, %p79
      %s81 = ssub.s32 %s42, %s54
      %p82 = scmp.eq.s32.totalorder %s81, 0
      %s84 = sadd.s32 %s83, 1
      %s85 = scalar_select %p82, %s83, %s84
      %p88 = pneg %p82
      %p89 = scmp.eq.s32.totalorder %s35, 1
      %p90 = por %p88, %p89
      %p91 = scmp.ne.s32.totalorder %s83, %s86
      %p92 = scmp.eq.s32.totalorder %s35, 0
      %p93 = por %p91, %p92
      %p94 = scmp.ne.s32.totalorder %s83, %s86
      %p95 = scmp.eq.s32.totalorder %s40, 1
      %p96 = por %p94, %p95
      %p97 = scmp.ne.s32.totalorder %s86, %s87
      %p98 = scmp.eq.s32.totalorder %s40, 0
      %p99 = por %p97, %p98
      %p100 = scmp.ne.s32.totalorder %s86, %s87
      %p101 = scmp.eq.s32.totalorder %s41, 1
      %p102 = por %p100, %p101
      %p104 = scmp.ne.s32.totalorder %s87, %s103
      %p105 = scmp.eq.s32.totalorder %s41, 0
      %p106 = por %p104, %p105
      %s107 = ssub.s32 %s42, %s54
      %s108 = ssub.s32 %s43, %s50
      %s109 = sor.u32 %s107, %s108
      %p110 = scmp.eq.s32.totalorder %s109, 0
      %s112 = sadd.s32 %s111, 1
      %s113 = scalar_select %p110, %s111, %s112
      %p116 = pneg %p110
      %p117 = scmp.eq.s32.totalorder %s35, 1
      %p118 = por %p116, %p117
      %p119 = scmp.ne.s32.totalorder %s111, %s114
      %p120 = scmp.eq.s32.totalorder %s35, 0
      %p121 = por %p119, %p120
      %p122 = scmp.ne.s32.totalorder %s111, %s114
      %p123 = scmp.eq.s32.totalorder %s40, 1
      %p124 = por %p122, %p123
      %p125 = scmp.ne.s32.totalorder %s114, %s115
      %p126 = scmp.eq.s32.totalorder %s40, 0
      %p127 = por %p125, %p126
      %p128 = scmp.ne.s32.totalorder %s114, %s115
      %p129 = scmp.eq.s32.totalorder %s41, 1
      %p130 = por %p128, %p129
      %p132 = scmp.ne.s32.totalorder %s115, %s131
      %p133 = scmp.eq.s32.totalorder %s41, 0
      %p134 = por %p132, %p133
      %s135 = ssub.s32 %s42, %s54
      %s136 = ssub.s32 %s43, %s50
      %s137 = sor.u32 %s135, %s136
      %p138 = scmp.eq.s32.totalorder %s137, 0
      %s140 = sadd.s32 %s139, 1
      %s141 = scalar_select %p138, %s139, %s140
      %p144 = pneg %p138
      %p145 = scmp.eq.s32.totalorder %s35, 1
      %p146 = por %p144, %p145
      %p147 = scmp.ne.s32.totalorder %s139, %s142
      %p148 = scmp.eq.s32.totalorder %s35, 0
      %p149 = por %p147, %p148
      %p150 = scmp.ne.s32.totalorder %s139, %s142
      %p151 = scmp.eq.s32.totalorder %s40, 1
      %p152 = por %p150, %p151
      %p153 = scmp.ne.s32.totalorder %s142, %s143
      %p154 = scmp.eq.s32.totalorder %s40, 0
      %p155 = por %p153, %p154
      %p156 = scmp.ne.s32.totalorder %s142, %s143
      %p157 = scmp.eq.s32.totalorder %s41, 1
      %p158 = por %p156, %p157
      %p160 = scmp.ne.s32.totalorder %s143, %s159
      %p161 = scmp.eq.s32.totalorder %s41, 0
      %p162 = por %p160, %p161
      %s163 = ssub.s32 %s42, %s54
      %p164 = scmp.eq.s32.totalorder %s163, 0
      %s166 = sadd.s32 %s165, 1
      %s167 = scalar_select %p164, %s165, %s166
      %p170 = pneg %p164
      %p171 = scmp.eq.s32.totalorder %s35, 1
      %p172 = por %p170, %p171
      %p173 = scmp.ne.s32.totalorder %s165, %s168
      %p174 = scmp.eq.s32.totalorder %s35, 0
      %p175 = por %p173, %p174
      %p176 = scmp.ne.s32.totalorder %s165, %s168
      %p177 = scmp.eq.s32.totalorder %s40, 1
      %p178 = por %p176, %p177
      %p179 = scmp.ne.s32.totalorder %s168, %s169
      %p180 = scmp.eq.s32.totalorder %s40, 0
      %p181 = por %p179, %p180
      %p182 = scmp.ne.s32.totalorder %s168, %s169
      %p183 = scmp.eq.s32.totalorder %s41, 1
      %p184 = por %p182, %p183
      %p186 = scmp.ne.s32.totalorder %s169, %s185
      %p187 = scmp.eq.s32.totalorder %s41, 0
      %p188 = por %p186, %p187
      %s189 = ssub.s32 %s42, %s54
      %p190 = scmp.eq.s32.totalorder %s189, 0
      %s192 = sadd.s32 %s191, 1
      %s193 = scalar_select %p190, %s191, %s192
      %p196 = pneg %p190
      %p197 = scmp.eq.s32.totalorder %s35, 1
      %p198 = por %p196, %p197
      %p199 = scmp.ne.s32.totalorder %s191, %s194
      %p200 = scmp.eq.s32.totalorder %s35, 0
      %p201 = por %p199, %p200
      %p202 = scmp.ne.s32.totalorder %s191, %s194
      %p203 = scmp.eq.s32.totalorder %s40, 1
      %p204 = por %p202, %p203
      %p205 = scmp.ne.s32.totalorder %s194, %s195
      %p206 = scmp.eq.s32.totalorder %s40, 0
      %p207 = por %p205, %p206
      %p208 = scmp.ne.s32.totalorder %s194, %s195
      %p209 = scmp.eq.s32.totalorder %s41, 1
      %p210 = por %p208, %p209
      %p212 = scmp.ne.s32.totalorder %s195, %s211
      %p213 = scmp.eq.s32.totalorder %s41, 0
      %p214 = por %p212, %p213
      %s216 = sadd.s32 %s215, 1
      %p219 = scmp.eq.s32.totalorder %s35, 1
      %p220 = scmp.ne.s32.totalorder %s215, %s217
      %p221 = scmp.eq.s32.totalorder %s35, 0
      %p222 = por %p220, %p221
      %p223 = scmp.ne.s32.totalorder %s215, %s217
      %p224 = scmp.eq.s32.totalorder %s40, 1
      %p225 = por %p223, %p224
      %p226 = scmp.ne.s32.totalorder %s217, %s218
      %p227 = scmp.eq.s32.totalorder %s40, 0
      %p228 = por %p226, %p227
      %p229 = scmp.ne.s32.totalorder %s217, %s218
      %p230 = scmp.eq.s32.totalorder %s41, 1
      %p231 = por %p229, %p230
      %p233 = scmp.ne.s32.totalorder %s218, %s232
      %p234 = scmp.eq.s32.totalorder %s41, 0
      %p235 = por %p233, %p234
      %s237 = sadd.s32 %s236, 1
      %p240 = scmp.eq.s32.totalorder %s35, 1
      %p241 = scmp.ne.s32.totalorder %s236, %s238
      %p242 = scmp.eq.s32.totalorder %s35, 0
      %p243 = por %p241, %p242
      %p244 = scmp.ne.s32.totalorder %s236, %s238
      %p245 = scmp.eq.s32.totalorder %s40, 1
      %p246 = por %p244, %p245
      %p247 = scmp.ne.s32.totalorder %s238, %s239
      %p248 = scmp.eq.s32.totalorder %s40, 0
      %p249 = por %p247, %p248
      %p250 = scmp.ne.s32.totalorder %s238, %s239
      %p251 = scmp.eq.s32.totalorder %s41, 1
      %p252 = por %p250, %p251
      %p254 = scmp.ne.s32.totalorder %s239, %s253
      %p255 = scmp.eq.s32.totalorder %s41, 0
      %p256 = por %p254, %p255
      %s257 = ssub.s32 %s42, %s54
      %s258 = ssub.s32 %s43, %s50
      %s259 = sor.u32 %s257, %s258
      %p260 = scmp.eq.s32.totalorder %s259, 0
      %s262 = sadd.s32 %s261, 1
      %s263 = scalar_select %p260, %s261, %s262
      %p266 = pneg %p260
      %p267 = scmp.eq.s32.totalorder %s35, 1
      %p268 = por %p266, %p267
      %p269 = scmp.ne.s32.totalorder %s261, %s264
      %p270 = scmp.eq.s32.totalorder %s35, 0
      %p271 = por %p269, %p270
      %p272 = scmp.ne.s32.totalorder %s261, %s264
      %p273 = scmp.eq.s32.totalorder %s40, 1
      %p274 = por %p272, %p273
      %p275 = scmp.ne.s32.totalorder %s264, %s265
      %p276 = scmp.eq.s32.totalorder %s40, 0
      %p277 = por %p275, %p276
      %p278 = scmp.ne.s32.totalorder %s264, %s265
      %p279 = scmp.eq.s32.totalorder %s41, 1
      %p280 = por %p278, %p279
      %p282 = scmp.ne.s32.totalorder %s265, %s281
      %p283 = scmp.eq.s32.totalorder %s41, 0
      %p284 = por %p282, %p283
      %s285 = ssub.s32 %s42, %s54
      %s286 = ssub.s32 %s43, %s50
      %s287 = sor.u32 %s285, %s286
      %p288 = scmp.eq.s32.totalorder %s287, 0
      %s290 = sadd.s32 %s289, 1
      %s291 = scalar_select %p288, %s289, %s290
      %p294 = pneg %p288
      %p295 = scmp.eq.s32.totalorder %s35, 1
      %p296 = por %p294, %p295
      %p297 = scmp.ne.s32.totalorder %s289, %s292
      %p298 = scmp.eq.s32.totalorder %s35, 0
      %p299 = por %p297, %p298
      %p300 = scmp.ne.s32.totalorder %s289, %s292
      %p301 = scmp.eq.s32.totalorder %s40, 1
      %p302 = por %p300, %p301
      %p303 = scmp.ne.s32.totalorder %s292, %s293
      %p304 = scmp.eq.s32.totalorder %s40, 0
      %p305 = por %p303, %p304
      %p306 = scmp.ne.s32.totalorder %s292, %s293
      %p307 = scmp.eq.s32.totalorder %s41, 1
      %p308 = por %p306, %p307
      %p310 = scmp.ne.s32.totalorder %s293, %s309
      %p311 = scmp.eq.s32.totalorder %s41, 0
      %p312 = por %p310, %p311
      %p313 = scmp.le.s32.totalorder 1, %s35
      %p314 = scmp.lt.s32.totalorder %s35, 3
      %p315 = pnand %p313, %p314
      %p316 = pneg %p315
      // Predicated region
      $region9: #{tpu_custom_call.1} parent=5 // pred_check
        _
      $region10: #{tpu_custom_call.1} parent=5 // pred_check_branch
        %318 = sbr.rel (%p315) target = $region12
      $region11: #{tpu_custom_call.1} parent=5 // pred_region
        %s319 = ssub.s32 %s35, 1
        // Predicated region
        $region13: #{tpu_custom_call.1} parent=11 // pred_check
          %p320 = pneg %p228
        $region14: #{tpu_custom_call.1} parent=11 // pred_check_branch
          %322 = sbr.rel (%p320) target = $region16
        $region15: #{tpu_custom_call.1} parent=11 // pred_region
          %324 = vsyncadd [#allocation14], 0
          %s325 = sshll.u32 %s6, 4
          %s326 = int_to_ptr.hbm [resolvable:$true] %s325
          %s327 = sshll.u32 [#allocation15], 4
          %s328 = int_to_ptr.vmem [resolvable:$true] %s327
          %333 = dma.hbm_to_vmem [thread:$0]  %s326, 256, %s328, [#allocation14], 128, 128, 8
        $region16: #{tpu_custom_call.1} parent=11 // pred_fallthru
          _
        // Predicated region
        $region17: #{tpu_custom_call.1} parent=11 // pred_check
          %p334 = pneg %p249
        $region18: #{tpu_custom_call.1} parent=11 // pred_check_branch
          %336 = sbr.rel (%p334) target = $region20
        $region19: #{tpu_custom_call.1} parent=11 // pred_region
          %338 = vsyncadd [#allocation17], 0
          %s339 = sshll.u32 %s7, 4
          %s340 = int_to_ptr.hbm [resolvable:$true] %s339
          %s341 = sshll.u32 [#allocation16], 4
          %s342 = int_to_ptr.vmem [resolvable:$true] %s341
          %347 = dma.hbm_to_vmem [thread:$0]  %s340, 256, %s342, [#allocation17], 128, 128, 8
        $region20: #{tpu_custom_call.1} parent=11 // pred_fallthru
          _
      $region12: #{tpu_custom_call.1} parent=5 // pred_fallthru
        _
      %p348 = scmp.lt.s32.totalorder %s35, 2
      // Predicated region
      $region21: #{tpu_custom_call.1} parent=5 // pred_check
        %p349 = pneg %p348
      $region22: #{tpu_custom_call.1} parent=5 // pred_check_branch
        %351 = sbr.rel (%p349) target = $region24
      $region23: #{tpu_custom_call.1} parent=5 // pred_region
        // Predicated region
        $region25: #{tpu_custom_call.1} parent=23 // pred_check
          %p352 = pneg %p67
        $region26: #{tpu_custom_call.1} parent=23 // pred_check_branch
          %354 = sbr.rel (%p352) target = $region28
        $region27: #{tpu_custom_call.1} parent=23 // pred_region
          %s355 = sand.u32 %s57, 1
          %s356 = scalar_lea.sflag [#allocation5], %s355
          %s357 = sand.u32 %s57, 1
          %s358 = smul.addr %s357, 16
          %s359 = scalar_lea.vmem [#allocation4], %s358
          %361 = vsyncadd %s356, 0
          %s362 = smul.addr %s42, 2
          %s363 = smul.addr %s362, 8
          %s364 = scalar_lea.hbm %s0, %s363
          %s365 = sshll.u32 %s364, 4
          %s366 = int_to_ptr.hbm [resolvable:$true] %s365
          %s367 = sshll.u32 %s359, 4
          %s368 = int_to_ptr.vmem [resolvable:$true] %s367
          %373 = dma.hbm_to_vmem [thread:$0]  %s366, 256, %s368, %s356, 128, 128, 8
        $region28: #{tpu_custom_call.1} parent=23 // pred_fallthru
          _
        // Predicated region
        $region29: #{tpu_custom_call.1} parent=23 // pred_check
          %p374 = pneg %p93
        $region30: #{tpu_custom_call.1} parent=23 // pred_check_branch
          %376 = sbr.rel (%p374) target = $region32
        $region31: #{tpu_custom_call.1} parent=23 // pred_region
          %s377 = sand.u32 %s35, 1
          %s378 = scalar_lea.sflag [#allocation8], %s377
          %s379 = sand.u32 %s83, 1
          %s380 = smul.addr %s379, 16
          %s381 = scalar_lea.vmem [#allocation7], %s380
          %383 = vsyncadd %s378, 0
          %s384 = smul.addr %s42, 2
          %s385 = smul.addr %s384, 8
          %s386 = scalar_lea.hbm %s1, %s385
          %s387 = sshll.u32 %s386, 4
          %s388 = int_to_ptr.hbm [resolvable:$true] %s387
          %s389 = sshll.u32 %s381, 4
          %s390 = int_to_ptr.vmem [resolvable:$true] %s389
          %395 = dma.hbm_to_vmem [thread:$0]  %s388, 256, %s390, %s378, 128, 128, 8
        $region32: #{tpu_custom_call.1} parent=23 // pred_fallthru
          _
        // Predicated region
        $region33: #{tpu_custom_call.1} parent=23 // pred_check
          %p396 = pneg %p121
        $region34: #{tpu_custom_call.1} parent=23 // pred_check_branch
          %398 = sbr.rel (%p396) target = $region36
        $region35: #{tpu_custom_call.1} parent=23 // pred_region
          %s399 = sand.u32 %s35, 1
          %s400 = scalar_lea.sflag [#allocation8], %s399
          %s401 = sand.u32 %s111, 1
          %s402 = smul.addr %s401, 64
          %s403 = scalar_lea.vmem [#allocation9], %s402
          %s404 = smul.u32 4, %s43
          %406 = vsyncadd %s400, 0
          %s407 = smul.addr %s404, 2
          %s408 = smul.addr %s42, 8
          %s409 = sadd.s32 %s407, %s408
          %s410 = smul.addr %s409, 8
          %s411 = scalar_lea.hbm %s2, %s410
          %s412 = sshll.u32 %s411, 4
          %s413 = int_to_ptr.hbm [resolvable:$true] %s412
          %s414 = sshll.u32 %s403, 4
          %s415 = int_to_ptr.vmem [resolvable:$true] %s414
          %420 = dma.hbm_to_vmem [thread:$0]  %s413, 1024, %s415, %s400, 128, 128, 8
        $region36: #{tpu_custom_call.1} parent=23 // pred_fallthru
          _
        // Predicated region
        $region37: #{tpu_custom_call.1} parent=23 // pred_check
          %p421 = pneg %p149
        $region38: #{tpu_custom_call.1} parent=23 // pred_check_branch
          %423 = sbr.rel (%p421) target = $region40
        $region39: #{tpu_custom_call.1} parent=23 // pred_region
          %s424 = sand.u32 %s35, 1
          %s425 = scalar_lea.sflag [#allocation11], %s424
          %s426 = sand.u32 %s139, 1
          %s427 = smul.addr %s426, 64
          %s428 = scalar_lea.vmem [#allocation10], %s427
          %s429 = smul.u32 4, %s43
          %431 = vsyncadd %s425, 0
          %s432 = smul.addr %s429, 2
          %s433 = smul.addr %s42, 8
          %s434 = sadd.s32 %s432, %s433
          %s435 = smul.addr %s434, 8
          %s436 = scalar_lea.hbm %s3, %s435
          %s437 = sshll.u32 %s436, 4
          %s438 = int_to_ptr.hbm [resolvable:$true] %s437
          %s439 = sshll.u32 %s428, 4
          %s440 = int_to_ptr.vmem [resolvable:$true] %s439
          %445 = dma.hbm_to_vmem [thread:$0]  %s438, 1024, %s440, %s425, 128, 128, 8
        $region40: #{tpu_custom_call.1} parent=23 // pred_fallthru
          _
        // Predicated region
        $region41: #{tpu_custom_call.1} parent=23 // pred_check
          %p446 = pneg %p175
        $region42: #{tpu_custom_call.1} parent=23 // pred_check_branch
          %448 = sbr.rel (%p446) target = $region44
        $region43: #{tpu_custom_call.1} parent=23 // pred_region
          %s449 = sand.u32 %s35, 1
          %s450 = scalar_lea.sflag [#allocation11], %s449
          %s451 = sand.u32 %s165, 1
          %s452 = smul.addr %s451, 16
          %s453 = scalar_lea.vmem [#allocation12], %s452
          %455 = vsyncadd %s450, 0
          %s456 = smul.addr %s42, 2
          %s457 = smul.addr %s456, 8
          %s458 = scalar_lea.hbm %s4, %s457
          %s459 = sshll.u32 %s458, 4
          %s460 = int_to_ptr.hbm [resolvable:$true] %s459
          %s461 = sshll.u32 %s453, 4
          %s462 = int_to_ptr.vmem [resolvable:$true] %s461
          %467 = dma.hbm_to_vmem [thread:$0]  %s460, 256, %s462, %s450, 128, 128, 8
        $region44: #{tpu_custom_call.1} parent=23 // pred_fallthru
          _
        // Predicated region
        $region45: #{tpu_custom_call.1} parent=23 // pred_check
          %p468 = pneg %p201
        $region46: #{tpu_custom_call.1} parent=23 // pred_check_branch
          %470 = sbr.rel (%p468) target = $region48
        $region47: #{tpu_custom_call.1} parent=23 // pred_region
          %s471 = sand.u32 %s35, 1
          %s472 = scalar_lea.sflag [#allocation14], %s471
          %s473 = sand.u32 %s191, 1
          %s474 = smul.addr %s473, 16
          %s475 = scalar_lea.vmem [#allocation13], %s474
          %477 = vsyncadd %s472, 0
          %s478 = smul.addr %s42, 2
          %s479 = smul.addr %s478, 8
          %s480 = scalar_lea.hbm %s5, %s479
          %s481 = sshll.u32 %s480, 4
          %s482 = int_to_ptr.hbm [resolvable:$true] %s481
          %s483 = sshll.u32 %s475, 4
          %s484 = int_to_ptr.vmem [resolvable:$true] %s483
          %489 = dma.hbm_to_vmem [thread:$0]  %s482, 256, %s484, %s472, 128, 128, 8
        $region48: #{tpu_custom_call.1} parent=23 // pred_fallthru
          _
      $region24: #{tpu_custom_call.1} parent=5 // pred_fallthru
        _
      %p490 = scmp.le.s32.totalorder 1, %s35
      %p491 = scmp.lt.s32.totalorder %s35, 3
      %p492 = pnand %p490, %p491
      %p493 = pneg %p492
      // Predicated region
      $region49: #{tpu_custom_call.1} parent=5 // pred_check
        _
      $region50: #{tpu_custom_call.1} parent=5 // pred_check_branch
        %495 = sbr.rel (%p492) target = $region52
      $region51: #{tpu_custom_call.1} parent=5 // pred_region
        %s496 = ssub.s32 %s35, 1
        %s497 = sand.u32 %s60, 1
        %s498 = scalar_lea.sflag [#allocation5], %s497
        %s499 = sand.u32 %s60, 1
        %s500 = smul.addr %s499, 16
        %s501 = scalar_lea.vmem [#allocation4], %s500
        // Predicated region
        $region53: #{tpu_custom_call.1} parent=51 // pred_check
          %p502 = pneg %p73
        $region54: #{tpu_custom_call.1} parent=51 // pred_check_branch
          %504 = sbr.rel (%p502) target = $region56
        $region55: #{tpu_custom_call.1} parent=51 // pred_region
          %506 = dma.done %s498, 256
        $region56: #{tpu_custom_call.1} parent=51 // pred_fallthru
          _
        %s507 = sand.u32 %s40, 1
        %s508 = scalar_lea.sflag [#allocation8], %s507
        %s509 = sand.u32 %s86, 1
        %s510 = smul.addr %s509, 16
        %s511 = scalar_lea.vmem [#allocation7], %s510
        // Predicated region
        $region57: #{tpu_custom_call.1} parent=51 // pred_check
          %p512 = pneg %p99
        $region58: #{tpu_custom_call.1} parent=51 // pred_check_branch
          %514 = sbr.rel (%p512) target = $region60
        $region59: #{tpu_custom_call.1} parent=51 // pred_region
          %516 = dma.done %s508, 256
        $region60: #{tpu_custom_call.1} parent=51 // pred_fallthru
          _
        %s517 = sand.u32 %s40, 1
        %s518 = scalar_lea.sflag [#allocation8], %s517
        %s519 = sand.u32 %s114, 1
        %s520 = smul.addr %s519, 64
        %s521 = scalar_lea.vmem [#allocation9], %s520
        // Predicated region
        $region61: #{tpu_custom_call.1} parent=51 // pred_check
          %p522 = pneg %p127
        $region62: #{tpu_custom_call.1} parent=51 // pred_check_branch
          %524 = sbr.rel (%p522) target = $region64
        $region63: #{tpu_custom_call.1} parent=51 // pred_region
          %526 = dma.done %s518, 1024
        $region64: #{tpu_custom_call.1} parent=51 // pred_fallthru
          _
        %s527 = sand.u32 %s40, 1
        %s528 = scalar_lea.sflag [#allocation11], %s527
        %s529 = sand.u32 %s142, 1
        %s530 = smul.addr %s529, 64
        %s531 = scalar_lea.vmem [#allocation10], %s530
        // Predicated region
        $region65: #{tpu_custom_call.1} parent=51 // pred_check
          %p532 = pneg %p155
        $region66: #{tpu_custom_call.1} parent=51 // pred_check_branch
          %534 = sbr.rel (%p532) target = $region68
        $region67: #{tpu_custom_call.1} parent=51 // pred_region
          %536 = dma.done %s528, 1024
        $region68: #{tpu_custom_call.1} parent=51 // pred_fallthru
          _
        %s537 = sand.u32 %s40, 1
        %s538 = scalar_lea.sflag [#allocation11], %s537
        %s539 = sand.u32 %s168, 1
        %s540 = smul.addr %s539, 16
        %s541 = scalar_lea.vmem [#allocation12], %s540
        // Predicated region
        $region69: #{tpu_custom_call.1} parent=51 // pred_check
          %p542 = pneg %p181
        $region70: #{tpu_custom_call.1} parent=51 // pred_check_branch
          %544 = sbr.rel (%p542) target = $region72
        $region71: #{tpu_custom_call.1} parent=51 // pred_region
          %546 = dma.done %s538, 256
        $region72: #{tpu_custom_call.1} parent=51 // pred_fallthru
          _
        %s547 = sand.u32 %s40, 1
        %s548 = scalar_lea.sflag [#allocation14], %s547
        %s549 = sand.u32 %s194, 1
        %s550 = smul.addr %s549, 16
        %s551 = scalar_lea.vmem [#allocation13], %s550
        // Predicated region
        $region73: #{tpu_custom_call.1} parent=51 // pred_check
          %p552 = pneg %p207
        $region74: #{tpu_custom_call.1} parent=51 // pred_check_branch
          %554 = sbr.rel (%p552) target = $region76
        $region75: #{tpu_custom_call.1} parent=51 // pred_region
          %556 = dma.done %s548, 256
        $region76: #{tpu_custom_call.1} parent=51 // pred_fallthru
          _
        // Predicated region
        $region77: #{tpu_custom_call.1} parent=51 // pred_check
          %p557 = pneg %p228
        $region78: #{tpu_custom_call.1} parent=51 // pred_check_branch
          %559 = sbr.rel (%p557) target = $region80
        $region79: #{tpu_custom_call.1} parent=51 // pred_region
          %561 = dma.done [#allocation14], 256
        $region80: #{tpu_custom_call.1} parent=51 // pred_fallthru
          _
        // Predicated region
        $region81: #{tpu_custom_call.1} parent=51 // pred_check
          %p562 = pneg %p249
        $region82: #{tpu_custom_call.1} parent=51 // pred_check_branch
          %564 = sbr.rel (%p562) target = $region84
        $region83: #{tpu_custom_call.1} parent=51 // pred_region
          %566 = dma.done [#allocation17], 256
        $region84: #{tpu_custom_call.1} parent=51 // pred_fallthru
          _
        %s567 = sand.u32 %s60, 1
        %s568 = scalar_lea.sflag [#allocation5], %s567
        %s569 = sand.u32 %s60, 1
        %s570 = smul.addr %s569, 16
        %s571 = scalar_lea.vmem [#allocation4], %s570
        %p572 = pneg %p73
        %p573 = pneg %p70
        %s574 = sand.u32 %s40, 1
        %s575 = scalar_lea.sflag [#allocation8], %s574
        %s576 = sand.u32 %s86, 1
        %s577 = smul.addr %s576, 16
        %s578 = scalar_lea.vmem [#allocation7], %s577
        %p579 = pneg %p99
        %p580 = pneg %p96
        %s581 = sand.u32 %s40, 1
        %s582 = scalar_lea.sflag [#allocation8], %s581
        %s583 = sand.u32 %s114, 1
        %s584 = smul.addr %s583, 64
        %s585 = scalar_lea.vmem [#allocation9], %s584
        %p586 = pneg %p127
        %p587 = pneg %p124
        %s588 = sand.u32 %s40, 1
        %s589 = scalar_lea.sflag [#allocation11], %s588
        %s590 = sand.u32 %s142, 1
        %s591 = smul.addr %s590, 64
        %s592 = scalar_lea.vmem [#allocation10], %s591
        %p593 = pneg %p155
        %p594 = pneg %p152
        %s595 = sand.u32 %s40, 1
        %s596 = scalar_lea.sflag [#allocation11], %s595
        %s597 = sand.u32 %s168, 1
        %s598 = smul.addr %s597, 16
        %s599 = scalar_lea.vmem [#allocation12], %s598
        %p600 = pneg %p181
        %p601 = pneg %p178
        %s602 = sand.u32 %s40, 1
        %s603 = scalar_lea.sflag [#allocation14], %s602
        %s604 = sand.u32 %s194, 1
        %s605 = smul.addr %s604, 16
        %s606 = scalar_lea.vmem [#allocation13], %s605
        %p607 = pneg %p207
        %p608 = pneg %p204
        %p609 = pneg %p228
        %p610 = pneg %p225
        %p611 = pneg %p249
        %p612 = pneg %p246
        %p613 = pneg %p277
        %p614 = pneg %p274
        %s615 = sand.u32 %s264, 1
        %s616 = scalar_lea.sflag [#allocation6], %s615
        %s617 = sand.u32 %s264, 1
        %s618 = smul.addr %s617, 64
        %s619 = scalar_lea.vmem [#allocation18], %s618
        %p620 = pneg %p305
        %p621 = pneg %p302
        %s622 = sand.u32 %s292, 1
        %s623 = scalar_lea.sflag [#allocation20], %s622
        %s624 = sand.u32 %s292, 1
        %s625 = smul.addr %s624, 64
        %s626 = scalar_lea.vmem [#allocation19], %s625
        %s627 = smul.u32 4, %s45
        %s628 = smul.u32 4, %s45
        %s629 = smul.u32 4, %s45
        %s630 = smul.u32 4, %s45
        %v631 = vld [vmem:[%s501] sm:$0xff]
        %v632 = vld [vmem:[%s501 + $0x8] sm:$0xff]
        %v633 = vld [vmem:[%s511] sm:$0xff]
        %v634 = vld [vmem:[%s511 + $0x8] sm:$0xff]
        %v635 = vld [vmem:[%s521] sm:$0xff]
        %v636 = vld [vmem:[%s521 + $0x8] sm:$0xff]
        %v637 = vld [vmem:[%s521 + $0x10] sm:$0xff]
        %v638 = vld [vmem:[%s521 + $0x18] sm:$0xff]
        %v639 = vld [vmem:[%s521 + $0x20] sm:$0xff]
        %v640 = vld [vmem:[%s521 + $0x28] sm:$0xff]
        %v641 = vld [vmem:[%s521 + $0x30] sm:$0xff]
        %v642 = vld [vmem:[%s521 + $0x38] sm:$0xff]
        %v643 = vld [vmem:[%s531] sm:$0xff]
        %v644 = vld [vmem:[%s531 + $0x8] sm:$0xff]
        %v645 = vld [vmem:[%s531 + $0x10] sm:$0xff]
        %v646 = vld [vmem:[%s531 + $0x18] sm:$0xff]
        %v647 = vld [vmem:[%s531 + $0x20] sm:$0xff]
        %v648 = vld [vmem:[%s531 + $0x28] sm:$0xff]
        %v649 = vld [vmem:[%s531 + $0x30] sm:$0xff]
        %v650 = vld [vmem:[%s531 + $0x38] sm:$0xff]
        %v651 = vmul.f32 %v631, %v635
        %v652 = vmul.f32 %v632, %v636
        %v653 = vmul.f32 %v631, %v637
        %v654 = vmul.f32 %v632, %v638
        %v655 = vmul.f32 %v631, %v639
        %v656 = vmul.f32 %v632, %v640
        %v657 = vmul.f32 %v631, %v641
        %v658 = vmul.f32 %v632, %v642
        %v659 = vmul.f32 %v633, %v643
        %v660 = vmul.f32 %v634, %v644
        %v661 = vmul.f32 %v633, %v645
        %v662 = vmul.f32 %v634, %v646
        %v663 = vmul.f32 %v633, %v647
        %v664 = vmul.f32 %v634, %v648
        %v665 = vmul.f32 %v633, %v649
        %v666 = vmul.f32 %v634, %v650
        %v667 = vsub.f32 %v651, %v659
        %v668 = vsub.f32 %v652, %v660
        %v669 = vsub.f32 %v653, %v661
        %v670 = vsub.f32 %v654, %v662
        %v671 = vsub.f32 %v655, %v663
        %v672 = vsub.f32 %v656, %v664
        %v673 = vsub.f32 %v657, %v665
        %v674 = vsub.f32 %v658, %v666
        %v675 = vmul.f32 %v631, %v643
        %v676 = vmul.f32 %v632, %v644
        %v677 = vmul.f32 %v631, %v645
        %v678 = vmul.f32 %v632, %v646
        %v679 = vmul.f32 %v631, %v647
        %v680 = vmul.f32 %v632, %v648
        %v681 = vmul.f32 %v631, %v649
        %v682 = vmul.f32 %v632, %v650
        %v683 = vmul.f32 %v633, %v635
        %v684 = vmul.f32 %v634, %v636
        %v685 = vmul.f32 %v633, %v637
        %v686 = vmul.f32 %v634, %v638
        %v687 = vmul.f32 %v633, %v639
        %v688 = vmul.f32 %v634, %v640
        %v689 = vmul.f32 %v633, %v641
        %v690 = vmul.f32 %v634, %v642
        %v691 = vadd.f32 %v675, %v683
        %v692 = vadd.f32 %v676, %v684
        %v693 = vadd.f32 %v677, %v685
        %v694 = vadd.f32 %v678, %v686
        %v695 = vadd.f32 %v679, %v687
        %v696 = vadd.f32 %v680, %v688
        %v697 = vadd.f32 %v681, %v689
        %v698 = vadd.f32 %v682, %v690
        %v699 = vld [vmem:[%s541] sm:$0xff]
        %v700 = vld [vmem:[%s541 + $0x8] sm:$0xff]
        %v701 = vld [vmem:[%s551] sm:$0xff]
        %v702 = vld [vmem:[%s551 + $0x8] sm:$0xff]
        %v703 = vadd.f32 %v699, %v701
        %v704 = vadd.f32 %v700, %v702
        %vm705 = vcmask 130048
        %v707 = vsel %vm705, %v667, 0
        %v710 = vsel %vm705, %v668, 0
        %v713 = vsel %vm705, %v669, 0
        %v716 = vsel %vm705, %v670, 0
        %v719 = vsel %vm705, %v671, 0
        %v722 = vsel %vm705, %v672, 0
        %v725 = vsel %vm705, %v673, 0
        %v728 = vsel %vm705, %v674, 0
        %730 = vmatpush.msra.mxu0 0.0
        %731 = vmatpush.msra.mxu0 0.0
        %732 = vmatpush.msra.mxu0 0.0
        %733 = vmatpush.msra.mxu0 0.0
        %734 = vmatpush.msra.mxu0 0.0
        %735 = vmatpush.msra.mxu0 0.0
        %736 = vmatpush.msra.mxu0 0.0
        %737 = vmatpush.msra.mxu0 0.0
        %738 = vmatpush.msra.mxu0 0.0
        %739 = vmatpush.msra.mxu0 0.0
        %740 = vmatpush.msra.mxu0 0.0
        %741 = vmatpush.msra.mxu0 0.0
        %742 = vmatpush.msra.mxu0 0.0
        %743 = vmatpush.msra.mxu0 0.0
        %v744 = vand.u32 %v700, 4294901760
        %745 = vmatpush.msra.mxu0 %v744
        %v746 = vand.u32 %v699, 4294901760
        %747 = vmatpush.msra.mxu0 %v746
        %v748 = vand.u32 %v707, 4294901760
        %v749 = vsub.f32 %v707, %v748
        %v750 = vand.u32 %v749, 4294901760
        %v751 = vsub.f32 %v749, %v750
        %v752 = vand.u32 %v751, 4294901760
        %753 = vmatmul.f32.gmra.mxu0 %v752
        %v754 = vpop.f32.mrf.mxu0
        %v755 = vadd.f32 0.0, %v754
        %v756 = vand.u32 %v710, 4294901760
        %v757 = vsub.f32 %v710, %v756
        %v758 = vand.u32 %v757, 4294901760
        %v759 = vsub.f32 %v757, %v758
        %v760 = vand.u32 %v759, 4294901760
        %761 = vmatmul.f32.gmra.mxu0 %v760
        %v762 = vpop.f32.mrf.mxu0
        %v763 = vadd.f32 0.0, %v762
        %v764 = vand.u32 %v713, 4294901760
        %v765 = vsub.f32 %v713, %v764
        %v766 = vand.u32 %v765, 4294901760
        %v767 = vsub.f32 %v765, %v766
        %v768 = vand.u32 %v767, 4294901760
        %769 = vmatmul.f32.gmra.mxu0 %v768
        %v770 = vpop.f32.mrf.mxu0
        %v771 = vadd.f32 0.0, %v770
        %v772 = vand.u32 %v716, 4294901760
        %v773 = vsub.f32 %v716, %v772
        %v774 = vand.u32 %v773, 4294901760
        %v775 = vsub.f32 %v773, %v774
        %v776 = vand.u32 %v775, 4294901760
        %777 = vmatmul.f32.gmra.mxu0 %v776
        %v778 = vpop.f32.mrf.mxu0
        %v779 = vadd.f32 0.0, %v778
        %v780 = vand.u32 %v719, 4294901760
        %v781 = vsub.f32 %v719, %v780
        %v782 = vand.u32 %v781, 4294901760
        %v783 = vsub.f32 %v781, %v782
        %v784 = vand.u32 %v783, 4294901760
        %785 = vmatmul.f32.gmra.mxu0 %v784
        %v786 = vpop.f32.mrf.mxu0
        %v787 = vadd.f32 0.0, %v786
        %v788 = vand.u32 %v722, 4294901760
        %v789 = vsub.f32 %v722, %v788
        %v790 = vand.u32 %v789, 4294901760
        %v791 = vsub.f32 %v789, %v790
        %v792 = vand.u32 %v791, 4294901760
        %793 = vmatmul.f32.gmra.mxu0 %v792
        %v794 = vpop.f32.mrf.mxu0
        %v795 = vadd.f32 0.0, %v794
        %v796 = vand.u32 %v725, 4294901760
        %v797 = vsub.f32 %v725, %v796
        %v798 = vand.u32 %v797, 4294901760
        %v799 = vsub.f32 %v797, %v798
        %v800 = vand.u32 %v799, 4294901760
        %801 = vmatmul.f32.gmra.mxu0 %v800
        %v802 = vpop.f32.mrf.mxu0
        %v803 = vadd.f32 0.0, %v802
        %v804 = vand.u32 %v728, 4294901760
        %v805 = vsub.f32 %v728, %v804
        %v806 = vand.u32 %v805, 4294901760
        %v807 = vsub.f32 %v805, %v806
        %v808 = vand.u32 %v807, 4294901760
        %809 = vmatmul.f32.gmra.mxu0 %v808
        %v810 = vpop.f32.mrf.mxu0
        %v811 = vadd.f32 0.0, %v810
        %812 = vdwg.mxu0
        %813 = vmatpush.msra.mxu0 0.0
        %814 = vmatpush.msra.mxu0 0.0
        %815 = vmatpush.msra.mxu0 0.0
        %816 = vmatpush.msra.mxu0 0.0
        %817 = vmatpush.msra.mxu0 0.0
        %818 = vmatpush.msra.mxu0 0.0
        %819 = vmatpush.msra.mxu0 0.0
        %820 = vmatpush.msra.mxu0 0.0
        %821 = vmatpush.msra.mxu0 0.0
        %822 = vmatpush.msra.mxu0 0.0
        %823 = vmatpush.msra.mxu0 0.0
        %824 = vmatpush.msra.mxu0 0.0
        %825 = vmatpush.msra.mxu0 0.0
        %826 = vmatpush.msra.mxu0 0.0
        %v827 = vand.u32 %v700, 4294901760
        %v828 = vsub.f32 %v700, %v827
        %v829 = vand.u32 %v828, 4294901760
        %v830 = vsub.f32 %v828, %v829
        %v831 = vand.u32 %v830, 4294901760
        %832 = vmatpush.msra.mxu0 %v831
        %v833 = vand.u32 %v699, 4294901760
        %v834 = vsub.f32 %v699, %v833
        %v835 = vand.u32 %v834, 4294901760
        %v836 = vsub.f32 %v834, %v835
        %v837 = vand.u32 %v836, 4294901760
        %838 = vmatpush.msra.mxu0 %v837
        %v839 = vand.u32 %v707, 4294901760
        %840 = vmatmul.f32.gmra.mxu0 %v839
        %v841 = vpop.f32.mrf.mxu0
        %v842 = vadd.f32 %v755, %v841
        %v843 = vand.u32 %v710, 4294901760
        %844 = vmatmul.f32.gmra.mxu0 %v843
        %v845 = vpop.f32.mrf.mxu0
        %v846 = vadd.f32 %v763, %v845
        %v847 = vand.u32 %v713, 4294901760
        %848 = vmatmul.f32.gmra.mxu0 %v847
        %v849 = vpop.f32.mrf.mxu0
        %v850 = vadd.f32 %v771, %v849
        %v851 = vand.u32 %v716, 4294901760
        %852 = vmatmul.f32.gmra.mxu0 %v851
        %v853 = vpop.f32.mrf.mxu0
        %v854 = vadd.f32 %v779, %v853
        %v855 = vand.u32 %v719, 4294901760
        %856 = vmatmul.f32.gmra.mxu0 %v855
        %v857 = vpop.f32.mrf.mxu0
        %v858 = vadd.f32 %v787, %v857
        %v859 = vand.u32 %v722, 4294901760
        %860 = vmatmul.f32.gmra.mxu0 %v859
        %v861 = vpop.f32.mrf.mxu0
        %v862 = vadd.f32 %v795, %v861
        %v863 = vand.u32 %v725, 4294901760
        %864 = vmatmul.f32.gmra.mxu0 %v863
        %v865 = vpop.f32.mrf.mxu0
        %v866 = vadd.f32 %v803, %v865
        %v867 = vand.u32 %v728, 4294901760
        %868 = vmatmul.f32.gmra.mxu0 %v867
        %v869 = vpop.f32.mrf.mxu0
        %v870 = vadd.f32 %v811, %v869
        %871 = vdwg.mxu0
        %872 = vmatpush.msra.mxu0 0.0
        %873 = vmatpush.msra.mxu0 0.0
        %874 = vmatpush.msra.mxu0 0.0
        %875 = vmatpush.msra.mxu0 0.0
        %876 = vmatpush.msra.mxu0 0.0
        %877 = vmatpush.msra.mxu0 0.0
        %878 = vmatpush.msra.mxu0 0.0
        %879 = vmatpush.msra.mxu0 0.0
        %880 = vmatpush.msra.mxu0 0.0
        %881 = vmatpush.msra.mxu0 0.0
        %882 = vmatpush.msra.mxu0 0.0
        %883 = vmatpush.msra.mxu0 0.0
        %884 = vmatpush.msra.mxu0 0.0
        %885 = vmatpush.msra.mxu0 0.0
        %v886 = vand.u32 %v700, 4294901760
        %v887 = vsub.f32 %v700, %v886
        %888 = vmatpush.msra.mxu0 %v887
        %v889 = vand.u32 %v699, 4294901760
        %v890 = vsub.f32 %v699, %v889
        %891 = vmatpush.msra.mxu0 %v890
        %v892 = vand.u32 %v707, 4294901760
        %v893 = vsub.f32 %v707, %v892
        %894 = vmatmul.f32.gmra.mxu0 %v893
        %v895 = vpop.f32.mrf.mxu0
        %v896 = vadd.f32 %v842, %v895
        %v897 = vand.u32 %v710, 4294901760
        %v898 = vsub.f32 %v710, %v897
        %899 = vmatmul.f32.gmra.mxu0 %v898
        %v900 = vpop.f32.mrf.mxu0
        %v901 = vadd.f32 %v846, %v900
        %v902 = vand.u32 %v713, 4294901760
        %v903 = vsub.f32 %v713, %v902
        %904 = vmatmul.f32.gmra.mxu0 %v903
        %v905 = vpop.f32.mrf.mxu0
        %v906 = vadd.f32 %v850, %v905
        %v907 = vand.u32 %v716, 4294901760
        %v908 = vsub.f32 %v716, %v907
        %909 = vmatmul.f32.gmra.mxu0 %v908
        %v910 = vpop.f32.mrf.mxu0
        %v911 = vadd.f32 %v854, %v910
        %v912 = vand.u32 %v719, 4294901760
        %v913 = vsub.f32 %v719, %v912
        %914 = vmatmul.f32.gmra.mxu0 %v913
        %v915 = vpop.f32.mrf.mxu0
        %v916 = vadd.f32 %v858, %v915
        %v917 = vand.u32 %v722, 4294901760
        %v918 = vsub.f32 %v722, %v917
        %919 = vmatmul.f32.gmra.mxu0 %v918
        %v920 = vpop.f32.mrf.mxu0
        %v921 = vadd.f32 %v862, %v920
        %v922 = vand.u32 %v725, 4294901760
        %v923 = vsub.f32 %v725, %v922
        %924 = vmatmul.f32.gmra.mxu0 %v923
        %v925 = vpop.f32.mrf.mxu0
        %v926 = vadd.f32 %v866, %v925
        %v927 = vand.u32 %v728, 4294901760
        %v928 = vsub.f32 %v728, %v927
        %929 = vmatmul.f32.gmra.mxu0 %v928
        %v930 = vpop.f32.mrf.mxu0
        %v931 = vadd.f32 %v870, %v930
        %932 = vdwg.mxu0
        %933 = vmatpush.msra.mxu0 0.0
        %934 = vmatpush.msra.mxu0 0.0
        %935 = vmatpush.msra.mxu0 0.0
        %936 = vmatpush.msra.mxu0 0.0
        %937 = vmatpush.msra.mxu0 0.0
        %938 = vmatpush.msra.mxu0 0.0
        %939 = vmatpush.msra.mxu0 0.0
        %940 = vmatpush.msra.mxu0 0.0
        %941 = vmatpush.msra.mxu0 0.0
        %942 = vmatpush.msra.mxu0 0.0
        %943 = vmatpush.msra.mxu0 0.0
        %944 = vmatpush.msra.mxu0 0.0
        %945 = vmatpush.msra.mxu0 0.0
        %946 = vmatpush.msra.mxu0 0.0
        %v947 = vand.u32 %v700, 4294901760
        %948 = vmatpush.msra.mxu0 %v947
        %v949 = vand.u32 %v699, 4294901760
        %950 = vmatpush.msra.mxu0 %v949
        %v951 = vand.u32 %v707, 4294901760
        %v952 = vsub.f32 %v707, %v951
        %v953 = vand.u32 %v952, 4294901760
        %954 = vmatmul.f32.gmra.mxu0 %v953
        %v955 = vpop.f32.mrf.mxu0
        %v956 = vadd.f32 %v896, %v955
        %v957 = vand.u32 %v710, 4294901760
        %v958 = vsub.f32 %v710, %v957
        %v959 = vand.u32 %v958, 4294901760
        %960 = vmatmul.f32.gmra.mxu0 %v959
        %v961 = vpop.f32.mrf.mxu0
        %v962 = vadd.f32 %v901, %v961
        %v963 = vand.u32 %v713, 4294901760
        %v964 = vsub.f32 %v713, %v963
        %v965 = vand.u32 %v964, 4294901760
        %966 = vmatmul.f32.gmra.mxu0 %v965
        %v967 = vpop.f32.mrf.mxu0
        %v968 = vadd.f32 %v906, %v967
        %v969 = vand.u32 %v716, 4294901760
        %v970 = vsub.f32 %v716, %v969
        %v971 = vand.u32 %v970, 4294901760
        %972 = vmatmul.f32.gmra.mxu0 %v971
        %v973 = vpop.f32.mrf.mxu0
        %v974 = vadd.f32 %v911, %v973
        %v975 = vand.u32 %v719, 4294901760
        %v976 = vsub.f32 %v719, %v975
        %v977 = vand.u32 %v976, 4294901760
        %978 = vmatmul.f32.gmra.mxu0 %v977
        %v979 = vpop.f32.mrf.mxu0
        %v980 = vadd.f32 %v916, %v979
        %v981 = vand.u32 %v722, 4294901760
        %v982 = vsub.f32 %v722, %v981
        %v983 = vand.u32 %v982, 4294901760
        %984 = vmatmul.f32.gmra.mxu0 %v983
        %v985 = vpop.f32.mrf.mxu0
        %v986 = vadd.f32 %v921, %v985
        %v987 = vand.u32 %v725, 4294901760
        %v988 = vsub.f32 %v725, %v987
        %v989 = vand.u32 %v988, 4294901760
        %990 = vmatmul.f32.gmra.mxu0 %v989
        %v991 = vpop.f32.mrf.mxu0
        %v992 = vadd.f32 %v926, %v991
        %v993 = vand.u32 %v728, 4294901760
        %v994 = vsub.f32 %v728, %v993
        %v995 = vand.u32 %v994, 4294901760
        %996 = vmatmul.f32.gmra.mxu0 %v995
        %v997 = vpop.f32.mrf.mxu0
        %v998 = vadd.f32 %v931, %v997
        %999 = vdwg.mxu0
        %1000 = vmatpush.msra.mxu0 0.0
        %1001 = vmatpush.msra.mxu0 0.0
        %1002 = vmatpush.msra.mxu0 0.0
        %1003 = vmatpush.msra.mxu0 0.0
        %1004 = vmatpush.msra.mxu0 0.0
        %1005 = vmatpush.msra.mxu0 0.0
        %1006 = vmatpush.msra.mxu0 0.0
        %1007 = vmatpush.msra.mxu0 0.0
        %1008 = vmatpush.msra.mxu0 0.0
        %1009 = vmatpush.msra.mxu0 0.0
        %1010 = vmatpush.msra.mxu0 0.0
        %1011 = vmatpush.msra.mxu0 0.0
        %1012 = vmatpush.msra.mxu0 0.0
        %1013 = vmatpush.msra.mxu0 0.0
        %v1014 = vand.u32 %v700, 4294901760
        %v1015 = vsub.f32 %v700, %v1014
        %v1016 = vand.u32 %v1015, 4294901760
        %1017 = vmatpush.msra.mxu0 %v1016
        %v1018 = vand.u32 %v699, 4294901760
        %v1019 = vsub.f32 %v699, %v1018
        %v1020 = vand.u32 %v1019, 4294901760
        %1021 = vmatpush.msra.mxu0 %v1020
        %v1022 = vand.u32 %v707, 4294901760
        %1023 = vmatmul.f32.gmra.mxu0 %v1022
        %v1024 = vpop.f32.mrf.mxu0
        %v1025 = vadd.f32 %v956, %v1024
        %v1026 = vand.u32 %v710, 4294901760
        %1027 = vmatmul.f32.gmra.mxu0 %v1026
        %v1028 = vpop.f32.mrf.mxu0
        %v1029 = vadd.f32 %v962, %v1028
        %v1030 = vand.u32 %v713, 4294901760
        %1031 = vmatmul.f32.gmra.mxu0 %v1030
        %v1032 = vpop.f32.mrf.mxu0
        %v1033 = vadd.f32 %v968, %v1032
        %v1034 = vand.u32 %v716, 4294901760
        %1035 = vmatmul.f32.gmra.mxu0 %v1034
        %v1036 = vpop.f32.mrf.mxu0
        %v1037 = vadd.f32 %v974, %v1036
        %v1038 = vand.u32 %v719, 4294901760
        %1039 = vmatmul.f32.gmra.mxu0 %v1038
        %v1040 = vpop.f32.mrf.mxu0
        %v1041 = vadd.f32 %v980, %v1040
        %v1042 = vand.u32 %v722, 4294901760
        %1043 = vmatmul.f32.gmra.mxu0 %v1042
        %v1044 = vpop.f32.mrf.mxu0
        %v1045 = vadd.f32 %v986, %v1044
        %v1046 = vand.u32 %v725, 4294901760
        %1047 = vmatmul.f32.gmra.mxu0 %v1046
        %v1048 = vpop.f32.mrf.mxu0
        %v1049 = vadd.f32 %v992, %v1048
        %v1050 = vand.u32 %v728, 4294901760
        %1051 = vmatmul.f32.gmra.mxu0 %v1050
        %v1052 = vpop.f32.mrf.mxu0
        %v1053 = vadd.f32 %v998, %v1052
        %1054 = vdwg.mxu0
        %1055 = vmatpush.msra.mxu0 0.0
        %1056 = vmatpush.msra.mxu0 0.0
        %1057 = vmatpush.msra.mxu0 0.0
        %1058 = vmatpush.msra.mxu0 0.0
        %1059 = vmatpush.msra.mxu0 0.0
        %1060 = vmatpush.msra.mxu0 0.0
        %1061 = vmatpush.msra.mxu0 0.0
        %1062 = vmatpush.msra.mxu0 0.0
        %1063 = vmatpush.msra.mxu0 0.0
        %1064 = vmatpush.msra.mxu0 0.0
        %1065 = vmatpush.msra.mxu0 0.0
        %1066 = vmatpush.msra.mxu0 0.0
        %1067 = vmatpush.msra.mxu0 0.0
        %1068 = vmatpush.msra.mxu0 0.0
        %v1069 = vand.u32 %v700, 4294901760
        %1070 = vmatpush.msra.mxu0 %v1069
        %v1071 = vand.u32 %v699, 4294901760
        %1072 = vmatpush.msra.mxu0 %v1071
        %v1073 = vand.u32 %v707, 4294901760
        %1074 = vmatmul.f32.gmra.mxu0 %v1073
        %v1075 = vpop.f32.mrf.mxu0
        %v1076 = vadd.f32 %v1025, %v1075
        %v1077 = vand.u32 %v710, 4294901760
        %1078 = vmatmul.f32.gmra.mxu0 %v1077
        %v1079 = vpop.f32.mrf.mxu0
        %v1080 = vadd.f32 %v1029, %v1079
        %v1081 = vand.u32 %v713, 4294901760
        %1082 = vmatmul.f32.gmra.mxu0 %v1081
        %v1083 = vpop.f32.mrf.mxu0
        %v1084 = vadd.f32 %v1033, %v1083
        %v1085 = vand.u32 %v716, 4294901760
        %1086 = vmatmul.f32.gmra.mxu0 %v1085
        %v1087 = vpop.f32.mrf.mxu0
        %v1088 = vadd.f32 %v1037, %v1087
        %v1089 = vand.u32 %v719, 4294901760
        %1090 = vmatmul.f32.gmra.mxu0 %v1089
        %v1091 = vpop.f32.mrf.mxu0
        %v1092 = vadd.f32 %v1041, %v1091
        %v1093 = vand.u32 %v722, 4294901760
        %1094 = vmatmul.f32.gmra.mxu0 %v1093
        %v1095 = vpop.f32.mrf.mxu0
        %v1096 = vadd.f32 %v1045, %v1095
        %v1097 = vand.u32 %v725, 4294901760
        %1098 = vmatmul.f32.gmra.mxu0 %v1097
        %v1099 = vpop.f32.mrf.mxu0
        %v1100 = vadd.f32 %v1049, %v1099
        %v1101 = vand.u32 %v728, 4294901760
        %1102 = vmatmul.f32.gmra.mxu0 %v1101
        %v1103 = vpop.f32.mrf.mxu0
        %v1104 = vadd.f32 %v1053, %v1103
        %1105 = vdwg.mxu0
        %v1107 = vsel %vm705, %v691, 0
        %v1110 = vsel %vm705, %v692, 0
        %v1113 = vsel %vm705, %v693, 0
        %v1116 = vsel %vm705, %v694, 0
        %v1119 = vsel %vm705, %v695, 0
        %v1122 = vsel %vm705, %v696, 0
        %v1125 = vsel %vm705, %v697, 0
        %v1128 = vsel %vm705, %v698, 0
        %1130 = vmatpush.msra.mxu0 0.0
        %1131 = vmatpush.msra.mxu0 0.0
        %1132 = vmatpush.msra.mxu0 0.0
        %1133 = vmatpush.msra.mxu0 0.0
        %1134 = vmatpush.msra.mxu0 0.0
        %1135 = vmatpush.msra.mxu0 0.0
        %1136 = vmatpush.msra.mxu0 0.0
        %1137 = vmatpush.msra.mxu0 0.0
        %1138 = vmatpush.msra.mxu0 0.0
        %1139 = vmatpush.msra.mxu0 0.0
        %1140 = vmatpush.msra.mxu0 0.0
        %1141 = vmatpush.msra.mxu0 0.0
        %1142 = vmatpush.msra.mxu0 0.0
        %1143 = vmatpush.msra.mxu0 0.0
        %v1144 = vand.u32 %v702, 4294901760
        %1145 = vmatpush.msra.mxu0 %v1144
        %v1146 = vand.u32 %v701, 4294901760
        %1147 = vmatpush.msra.mxu0 %v1146
        %v1148 = vand.u32 %v1107, 4294901760
        %v1149 = vsub.f32 %v1107, %v1148
        %v1150 = vand.u32 %v1149, 4294901760
        %v1151 = vsub.f32 %v1149, %v1150
        %v1152 = vand.u32 %v1151, 4294901760
        %1153 = vmatmul.f32.gmra.mxu0 %v1152
        %v1154 = vpop.f32.mrf.mxu0
        %v1155 = vadd.f32 0.0, %v1154
        %v1156 = vand.u32 %v1110, 4294901760
        %v1157 = vsub.f32 %v1110, %v1156
        %v1158 = vand.u32 %v1157, 4294901760
        %v1159 = vsub.f32 %v1157, %v1158
        %v1160 = vand.u32 %v1159, 4294901760
        %1161 = vmatmul.f32.gmra.mxu0 %v1160
        %v1162 = vpop.f32.mrf.mxu0
        %v1163 = vadd.f32 0.0, %v1162
        %v1164 = vand.u32 %v1113, 4294901760
        %v1165 = vsub.f32 %v1113, %v1164
        %v1166 = vand.u32 %v1165, 4294901760
        %v1167 = vsub.f32 %v1165, %v1166
        %v1168 = vand.u32 %v1167, 4294901760
        %1169 = vmatmul.f32.gmra.mxu0 %v1168
        %v1170 = vpop.f32.mrf.mxu0
        %v1171 = vadd.f32 0.0, %v1170
        %v1172 = vand.u32 %v1116, 4294901760
        %v1173 = vsub.f32 %v1116, %v1172
        %v1174 = vand.u32 %v1173, 4294901760
        %v1175 = vsub.f32 %v1173, %v1174
        %v1176 = vand.u32 %v1175, 4294901760
        %1177 = vmatmul.f32.gmra.mxu0 %v1176
        %v1178 = vpop.f32.mrf.mxu0
        %v1179 = vadd.f32 0.0, %v1178
        %v1180 = vand.u32 %v1119, 4294901760
        %v1181 = vsub.f32 %v1119, %v1180
        %v1182 = vand.u32 %v1181, 4294901760
        %v1183 = vsub.f32 %v1181, %v1182
        %v1184 = vand.u32 %v1183, 4294901760
        %1185 = vmatmul.f32.gmra.mxu0 %v1184
        %v1186 = vpop.f32.mrf.mxu0
        %v1187 = vadd.f32 0.0, %v1186
        %v1188 = vand.u32 %v1122, 4294901760
        %v1189 = vsub.f32 %v1122, %v1188
        %v1190 = vand.u32 %v1189, 4294901760
        %v1191 = vsub.f32 %v1189, %v1190
        %v1192 = vand.u32 %v1191, 4294901760
        %1193 = vmatmul.f32.gmra.mxu0 %v1192
        %v1194 = vpop.f32.mrf.mxu0
        %v1195 = vadd.f32 0.0, %v1194
        %v1196 = vand.u32 %v1125, 4294901760
        %v1197 = vsub.f32 %v1125, %v1196
        %v1198 = vand.u32 %v1197, 4294901760
        %v1199 = vsub.f32 %v1197, %v1198
        %v1200 = vand.u32 %v1199, 4294901760
        %1201 = vmatmul.f32.gmra.mxu0 %v1200
        %v1202 = vpop.f32.mrf.mxu0
        %v1203 = vadd.f32 0.0, %v1202
        %v1204 = vand.u32 %v1128, 4294901760
        %v1205 = vsub.f32 %v1128, %v1204
        %v1206 = vand.u32 %v1205, 4294901760
        %v1207 = vsub.f32 %v1205, %v1206
        %v1208 = vand.u32 %v1207, 4294901760
        %1209 = vmatmul.f32.gmra.mxu0 %v1208
        %v1210 = vpop.f32.mrf.mxu0
        %v1211 = vadd.f32 0.0, %v1210
        %1212 = vdwg.mxu0
        %1213 = vmatpush.msra.mxu0 0.0
        %1214 = vmatpush.msra.mxu0 0.0
        %1215 = vmatpush.msra.mxu0 0.0
        %1216 = vmatpush.msra.mxu0 0.0
        %1217 = vmatpush.msra.mxu0 0.0
        %1218 = vmatpush.msra.mxu0 0.0
        %1219 = vmatpush.msra.mxu0 0.0
        %1220 = vmatpush.msra.mxu0 0.0
        %1221 = vmatpush.msra.mxu0 0.0
        %1222 = vmatpush.msra.mxu0 0.0
        %1223 = vmatpush.msra.mxu0 0.0
        %1224 = vmatpush.msra.mxu0 0.0
        %1225 = vmatpush.msra.mxu0 0.0
        %1226 = vmatpush.msra.mxu0 0.0
        %v1227 = vand.u32 %v702, 4294901760
        %v1228 = vsub.f32 %v702, %v1227
        %v1229 = vand.u32 %v1228, 4294901760
        %v1230 = vsub.f32 %v1228, %v1229
        %v1231 = vand.u32 %v1230, 4294901760
        %1232 = vmatpush.msra.mxu0 %v1231
        %v1233 = vand.u32 %v701, 4294901760
        %v1234 = vsub.f32 %v701, %v1233
        %v1235 = vand.u32 %v1234, 4294901760
        %v1236 = vsub.f32 %v1234, %v1235
        %v1237 = vand.u32 %v1236, 4294901760
        %1238 = vmatpush.msra.mxu0 %v1237
        %v1239 = vand.u32 %v1107, 4294901760
        %1240 = vmatmul.f32.gmra.mxu0 %v1239
        %v1241 = vpop.f32.mrf.mxu0
        %v1242 = vadd.f32 %v1155, %v1241
        %v1243 = vand.u32 %v1110, 4294901760
        %1244 = vmatmul.f32.gmra.mxu0 %v1243
        %v1245 = vpop.f32.mrf.mxu0
        %v1246 = vadd.f32 %v1163, %v1245
        %v1247 = vand.u32 %v1113, 4294901760
        %1248 = vmatmul.f32.gmra.mxu0 %v1247
        %v1249 = vpop.f32.mrf.mxu0
        %v1250 = vadd.f32 %v1171, %v1249
        %v1251 = vand.u32 %v1116, 4294901760
        %1252 = vmatmul.f32.gmra.mxu0 %v1251
        %v1253 = vpop.f32.mrf.mxu0
        %v1254 = vadd.f32 %v1179, %v1253
        %v1255 = vand.u32 %v1119, 4294901760
        %1256 = vmatmul.f32.gmra.mxu0 %v1255
        %v1257 = vpop.f32.mrf.mxu0
        %v1258 = vadd.f32 %v1187, %v1257
        %v1259 = vand.u32 %v1122, 4294901760
        %1260 = vmatmul.f32.gmra.mxu0 %v1259
        %v1261 = vpop.f32.mrf.mxu0
        %v1262 = vadd.f32 %v1195, %v1261
        %v1263 = vand.u32 %v1125, 4294901760
        %1264 = vmatmul.f32.gmra.mxu0 %v1263
        %v1265 = vpop.f32.mrf.mxu0
        %v1266 = vadd.f32 %v1203, %v1265
        %v1267 = vand.u32 %v1128, 4294901760
        %1268 = vmatmul.f32.gmra.mxu0 %v1267
        %v1269 = vpop.f32.mrf.mxu0
        %v1270 = vadd.f32 %v1211, %v1269
        %1271 = vdwg.mxu0
        %1272 = vmatpush.msra.mxu0 0.0
        %1273 = vmatpush.msra.mxu0 0.0
        %1274 = vmatpush.msra.mxu0 0.0
        %1275 = vmatpush.msra.mxu0 0.0
        %1276 = vmatpush.msra.mxu0 0.0
        %1277 = vmatpush.msra.mxu0 0.0
        %1278 = vmatpush.msra.mxu0 0.0
        %1279 = vmatpush.msra.mxu0 0.0
        %1280 = vmatpush.msra.mxu0 0.0
        %1281 = vmatpush.msra.mxu0 0.0
        %1282 = vmatpush.msra.mxu0 0.0
        %1283 = vmatpush.msra.mxu0 0.0
        %1284 = vmatpush.msra.mxu0 0.0
        %1285 = vmatpush.msra.mxu0 0.0
        %v1286 = vand.u32 %v702, 4294901760
        %v1287 = vsub.f32 %v702, %v1286
        %1288 = vmatpush.msra.mxu0 %v1287
        %v1289 = vand.u32 %v701, 4294901760
        %v1290 = vsub.f32 %v701, %v1289
        %1291 = vmatpush.msra.mxu0 %v1290
        %v1292 = vand.u32 %v1107, 4294901760
        %v1293 = vsub.f32 %v1107, %v1292
        %1294 = vmatmul.f32.gmra.mxu0 %v1293
        %v1295 = vpop.f32.mrf.mxu0
        %v1296 = vadd.f32 %v1242, %v1295
        %v1297 = vand.u32 %v1110, 4294901760
        %v1298 = vsub.f32 %v1110, %v1297
        %1299 = vmatmul.f32.gmra.mxu0 %v1298
        %v1300 = vpop.f32.mrf.mxu0
        %v1301 = vadd.f32 %v1246, %v1300
        %v1302 = vand.u32 %v1113, 4294901760
        %v1303 = vsub.f32 %v1113, %v1302
        %1304 = vmatmul.f32.gmra.mxu0 %v1303
        %v1305 = vpop.f32.mrf.mxu0
        %v1306 = vadd.f32 %v1250, %v1305
        %v1307 = vand.u32 %v1116, 4294901760
        %v1308 = vsub.f32 %v1116, %v1307
        %1309 = vmatmul.f32.gmra.mxu0 %v1308
        %v1310 = vpop.f32.mrf.mxu0
        %v1311 = vadd.f32 %v1254, %v1310
        %v1312 = vand.u32 %v1119, 4294901760
        %v1313 = vsub.f32 %v1119, %v1312
        %1314 = vmatmul.f32.gmra.mxu0 %v1313
        %v1315 = vpop.f32.mrf.mxu0
        %v1316 = vadd.f32 %v1258, %v1315
        %v1317 = vand.u32 %v1122, 4294901760
        %v1318 = vsub.f32 %v1122, %v1317
        %1319 = vmatmul.f32.gmra.mxu0 %v1318
        %v1320 = vpop.f32.mrf.mxu0
        %v1321 = vadd.f32 %v1262, %v1320
        %v1322 = vand.u32 %v1125, 4294901760
        %v1323 = vsub.f32 %v1125, %v1322
        %1324 = vmatmul.f32.gmra.mxu0 %v1323
        %v1325 = vpop.f32.mrf.mxu0
        %v1326 = vadd.f32 %v1266, %v1325
        %v1327 = vand.u32 %v1128, 4294901760
        %v1328 = vsub.f32 %v1128, %v1327
        %1329 = vmatmul.f32.gmra.mxu0 %v1328
        %v1330 = vpop.f32.mrf.mxu0
        %v1331 = vadd.f32 %v1270, %v1330
        %1332 = vdwg.mxu0
        %1333 = vmatpush.msra.mxu0 0.0
        %1334 = vmatpush.msra.mxu0 0.0
        %1335 = vmatpush.msra.mxu0 0.0
        %1336 = vmatpush.msra.mxu0 0.0
        %1337 = vmatpush.msra.mxu0 0.0
        %1338 = vmatpush.msra.mxu0 0.0
        %1339 = vmatpush.msra.mxu0 0.0
        %1340 = vmatpush.msra.mxu0 0.0
        %1341 = vmatpush.msra.mxu0 0.0
        %1342 = vmatpush.msra.mxu0 0.0
        %1343 = vmatpush.msra.mxu0 0.0
        %1344 = vmatpush.msra.mxu0 0.0
        %1345 = vmatpush.msra.mxu0 0.0
        %1346 = vmatpush.msra.mxu0 0.0
        %v1347 = vand.u32 %v702, 4294901760
        %1348 = vmatpush.msra.mxu0 %v1347
        %v1349 = vand.u32 %v701, 4294901760
        %1350 = vmatpush.msra.mxu0 %v1349
        %v1351 = vand.u32 %v1107, 4294901760
        %v1352 = vsub.f32 %v1107, %v1351
        %v1353 = vand.u32 %v1352, 4294901760
        %1354 = vmatmul.f32.gmra.mxu0 %v1353
        %v1355 = vpop.f32.mrf.mxu0
        %v1356 = vadd.f32 %v1296, %v1355
        %v1357 = vand.u32 %v1110, 4294901760
        %v1358 = vsub.f32 %v1110, %v1357
        %v1359 = vand.u32 %v1358, 4294901760
        %1360 = vmatmul.f32.gmra.mxu0 %v1359
        %v1361 = vpop.f32.mrf.mxu0
        %v1362 = vadd.f32 %v1301, %v1361
        %v1363 = vand.u32 %v1113, 4294901760
        %v1364 = vsub.f32 %v1113, %v1363
        %v1365 = vand.u32 %v1364, 4294901760
        %1366 = vmatmul.f32.gmra.mxu0 %v1365
        %v1367 = vpop.f32.mrf.mxu0
        %v1368 = vadd.f32 %v1306, %v1367
        %v1369 = vand.u32 %v1116, 4294901760
        %v1370 = vsub.f32 %v1116, %v1369
        %v1371 = vand.u32 %v1370, 4294901760
        %1372 = vmatmul.f32.gmra.mxu0 %v1371
        %v1373 = vpop.f32.mrf.mxu0
        %v1374 = vadd.f32 %v1311, %v1373
        %v1375 = vand.u32 %v1119, 4294901760
        %v1376 = vsub.f32 %v1119, %v1375
        %v1377 = vand.u32 %v1376, 4294901760
        %1378 = vmatmul.f32.gmra.mxu0 %v1377
        %v1379 = vpop.f32.mrf.mxu0
        %v1380 = vadd.f32 %v1316, %v1379
        %v1381 = vand.u32 %v1122, 4294901760
        %v1382 = vsub.f32 %v1122, %v1381
        %v1383 = vand.u32 %v1382, 4294901760
        %1384 = vmatmul.f32.gmra.mxu0 %v1383
        %v1385 = vpop.f32.mrf.mxu0
        %v1386 = vadd.f32 %v1321, %v1385
        %v1387 = vand.u32 %v1125, 4294901760
        %v1388 = vsub.f32 %v1125, %v1387
        %v1389 = vand.u32 %v1388, 4294901760
        %1390 = vmatmul.f32.gmra.mxu0 %v1389
        %v1391 = vpop.f32.mrf.mxu0
        %v1392 = vadd.f32 %v1326, %v1391
        %v1393 = vand.u32 %v1128, 4294901760
        %v1394 = vsub.f32 %v1128, %v1393
        %v1395 = vand.u32 %v1394, 4294901760
        %1396 = vmatmul.f32.gmra.mxu0 %v1395
        %v1397 = vpop.f32.mrf.mxu0
        %v1398 = vadd.f32 %v1331, %v1397
        %1399 = vdwg.mxu0
        %1400 = vmatpush.msra.mxu0 0.0
        %1401 = vmatpush.msra.mxu0 0.0
        %1402 = vmatpush.msra.mxu0 0.0
        %1403 = vmatpush.msra.mxu0 0.0
        %1404 = vmatpush.msra.mxu0 0.0
        %1405 = vmatpush.msra.mxu0 0.0
        %1406 = vmatpush.msra.mxu0 0.0
        %1407 = vmatpush.msra.mxu0 0.0
        %1408 = vmatpush.msra.mxu0 0.0
        %1409 = vmatpush.msra.mxu0 0.0
        %1410 = vmatpush.msra.mxu0 0.0
        %1411 = vmatpush.msra.mxu0 0.0
        %1412 = vmatpush.msra.mxu0 0.0
        %1413 = vmatpush.msra.mxu0 0.0
        %v1414 = vand.u32 %v702, 4294901760
        %v1415 = vsub.f32 %v702, %v1414
        %v1416 = vand.u32 %v1415, 4294901760
        %1417 = vmatpush.msra.mxu0 %v1416
        %v1418 = vand.u32 %v701, 4294901760
        %v1419 = vsub.f32 %v701, %v1418
        %v1420 = vand.u32 %v1419, 4294901760
        %1421 = vmatpush.msra.mxu0 %v1420
        %v1422 = vand.u32 %v1107, 4294901760
        %1423 = vmatmul.f32.gmra.mxu0 %v1422
        %v1424 = vpop.f32.mrf.mxu0
        %v1425 = vadd.f32 %v1356, %v1424
        %v1426 = vand.u32 %v1110, 4294901760
        %1427 = vmatmul.f32.gmra.mxu0 %v1426
        %v1428 = vpop.f32.mrf.mxu0
        %v1429 = vadd.f32 %v1362, %v1428
        %v1430 = vand.u32 %v1113, 4294901760
        %1431 = vmatmul.f32.gmra.mxu0 %v1430
        %v1432 = vpop.f32.mrf.mxu0
        %v1433 = vadd.f32 %v1368, %v1432
        %v1434 = vand.u32 %v1116, 4294901760
        %1435 = vmatmul.f32.gmra.mxu0 %v1434
        %v1436 = vpop.f32.mrf.mxu0
        %v1437 = vadd.f32 %v1374, %v1436
        %v1438 = vand.u32 %v1119, 4294901760
        %1439 = vmatmul.f32.gmra.mxu0 %v1438
        %v1440 = vpop.f32.mrf.mxu0
        %v1441 = vadd.f32 %v1380, %v1440
        %v1442 = vand.u32 %v1122, 4294901760
        %1443 = vmatmul.f32.gmra.mxu0 %v1442
        %v1444 = vpop.f32.mrf.mxu0
        %v1445 = vadd.f32 %v1386, %v1444
        %v1446 = vand.u32 %v1125, 4294901760
        %1447 = vmatmul.f32.gmra.mxu0 %v1446
        %v1448 = vpop.f32.mrf.mxu0
        %v1449 = vadd.f32 %v1392, %v1448
        %v1450 = vand.u32 %v1128, 4294901760
        %1451 = vmatmul.f32.gmra.mxu0 %v1450
        %v1452 = vpop.f32.mrf.mxu0
        %v1453 = vadd.f32 %v1398, %v1452
        %1454 = vdwg.mxu0
        %1455 = vmatpush.msra.mxu0 0.0
        %1456 = vmatpush.msra.mxu0 0.0
        %1457 = vmatpush.msra.mxu0 0.0
        %1458 = vmatpush.msra.mxu0 0.0
        %1459 = vmatpush.msra.mxu0 0.0
        %1460 = vmatpush.msra.mxu0 0.0
        %1461 = vmatpush.msra.mxu0 0.0
        %1462 = vmatpush.msra.mxu0 0.0
        %1463 = vmatpush.msra.mxu0 0.0
        %1464 = vmatpush.msra.mxu0 0.0
        %1465 = vmatpush.msra.mxu0 0.0
        %1466 = vmatpush.msra.mxu0 0.0
        %1467 = vmatpush.msra.mxu0 0.0
        %1468 = vmatpush.msra.mxu0 0.0
        %v1469 = vand.u32 %v702, 4294901760
        %1470 = vmatpush.msra.mxu0 %v1469
        %v1471 = vand.u32 %v701, 4294901760
        %1472 = vmatpush.msra.mxu0 %v1471
        %v1473 = vand.u32 %v1107, 4294901760
        %1474 = vmatmul.f32.gmra.mxu0 %v1473
        %v1475 = vpop.f32.mrf.mxu0
        %v1476 = vadd.f32 %v1425, %v1475
        %v1477 = vand.u32 %v1110, 4294901760
        %1478 = vmatmul.f32.gmra.mxu0 %v1477
        %v1479 = vpop.f32.mrf.mxu0
        %v1480 = vadd.f32 %v1429, %v1479
        %v1481 = vand.u32 %v1113, 4294901760
        %1482 = vmatmul.f32.gmra.mxu0 %v1481
        %v1483 = vpop.f32.mrf.mxu0
        %v1484 = vadd.f32 %v1433, %v1483
        %v1485 = vand.u32 %v1116, 4294901760
        %1486 = vmatmul.f32.gmra.mxu0 %v1485
        %v1487 = vpop.f32.mrf.mxu0
        %v1488 = vadd.f32 %v1437, %v1487
        %v1489 = vand.u32 %v1119, 4294901760
        %1490 = vmatmul.f32.gmra.mxu0 %v1489
        %v1491 = vpop.f32.mrf.mxu0
        %v1492 = vadd.f32 %v1441, %v1491
        %v1493 = vand.u32 %v1122, 4294901760
        %1494 = vmatmul.f32.gmra.mxu0 %v1493
        %v1495 = vpop.f32.mrf.mxu0
        %v1496 = vadd.f32 %v1445, %v1495
        %v1497 = vand.u32 %v1125, 4294901760
        %1498 = vmatmul.f32.gmra.mxu0 %v1497
        %v1499 = vpop.f32.mrf.mxu0
        %v1500 = vadd.f32 %v1449, %v1499
        %v1501 = vand.u32 %v1128, 4294901760
        %1502 = vmatmul.f32.gmra.mxu0 %v1501
        %v1503 = vpop.f32.mrf.mxu0
        %v1504 = vadd.f32 %v1453, %v1503
        %1505 = vdwg.mxu0
        %v1506 = vadd.f32 %v667, %v691
        %v1507 = vadd.f32 %v668, %v692
        %v1508 = vadd.f32 %v669, %v693
        %v1509 = vadd.f32 %v670, %v694
        %v1510 = vadd.f32 %v671, %v695
        %v1511 = vadd.f32 %v672, %v696
        %v1512 = vadd.f32 %v673, %v697
        %v1513 = vadd.f32 %v674, %v698
        %v1515 = vsel %vm705, %v1506, 0
        %v1518 = vsel %vm705, %v1507, 0
        %v1521 = vsel %vm705, %v1508, 0
        %v1524 = vsel %vm705, %v1509, 0
        %v1527 = vsel %vm705, %v1510, 0
        %v1530 = vsel %vm705, %v1511, 0
        %v1533 = vsel %vm705, %v1512, 0
        %v1536 = vsel %vm705, %v1513, 0
        %1538 = vmatpush.msra.mxu0 0.0
        %1539 = vmatpush.msra.mxu0 0.0
        %1540 = vmatpush.msra.mxu0 0.0
        %1541 = vmatpush.msra.mxu0 0.0
        %1542 = vmatpush.msra.mxu0 0.0
        %1543 = vmatpush.msra.mxu0 0.0
        %1544 = vmatpush.msra.mxu0 0.0
        %1545 = vmatpush.msra.mxu0 0.0
        %1546 = vmatpush.msra.mxu0 0.0
        %1547 = vmatpush.msra.mxu0 0.0
        %1548 = vmatpush.msra.mxu0 0.0
        %1549 = vmatpush.msra.mxu0 0.0
        %1550 = vmatpush.msra.mxu0 0.0
        %1551 = vmatpush.msra.mxu0 0.0
        %v1552 = vand.u32 %v704, 4294901760
        %1553 = vmatpush.msra.mxu0 %v1552
        %v1554 = vand.u32 %v703, 4294901760
        %1555 = vmatpush.msra.mxu0 %v1554
        %v1556 = vand.u32 %v1515, 4294901760
        %v1557 = vsub.f32 %v1515, %v1556
        %v1558 = vand.u32 %v1557, 4294901760
        %v1559 = vsub.f32 %v1557, %v1558
        %v1560 = vand.u32 %v1559, 4294901760
        %1561 = vmatmul.f32.gmra.mxu0 %v1560
        %v1562 = vpop.f32.mrf.mxu0
        %v1563 = vadd.f32 0.0, %v1562
        %v1564 = vand.u32 %v1518, 4294901760
        %v1565 = vsub.f32 %v1518, %v1564
        %v1566 = vand.u32 %v1565, 4294901760
        %v1567 = vsub.f32 %v1565, %v1566
        %v1568 = vand.u32 %v1567, 4294901760
        %1569 = vmatmul.f32.gmra.mxu0 %v1568
        %v1570 = vpop.f32.mrf.mxu0
        %v1571 = vadd.f32 0.0, %v1570
        %v1572 = vand.u32 %v1521, 4294901760
        %v1573 = vsub.f32 %v1521, %v1572
        %v1574 = vand.u32 %v1573, 4294901760
        %v1575 = vsub.f32 %v1573, %v1574
        %v1576 = vand.u32 %v1575, 4294901760
        %1577 = vmatmul.f32.gmra.mxu0 %v1576
        %v1578 = vpop.f32.mrf.mxu0
        %v1579 = vadd.f32 0.0, %v1578
        %v1580 = vand.u32 %v1524, 4294901760
        %v1581 = vsub.f32 %v1524, %v1580
        %v1582 = vand.u32 %v1581, 4294901760
        %v1583 = vsub.f32 %v1581, %v1582
        %v1584 = vand.u32 %v1583, 4294901760
        %1585 = vmatmul.f32.gmra.mxu0 %v1584
        %v1586 = vpop.f32.mrf.mxu0
        %v1587 = vadd.f32 0.0, %v1586
        %v1588 = vand.u32 %v1527, 4294901760
        %v1589 = vsub.f32 %v1527, %v1588
        %v1590 = vand.u32 %v1589, 4294901760
        %v1591 = vsub.f32 %v1589, %v1590
        %v1592 = vand.u32 %v1591, 4294901760
        %1593 = vmatmul.f32.gmra.mxu0 %v1592
        %v1594 = vpop.f32.mrf.mxu0
        %v1595 = vadd.f32 0.0, %v1594
        %v1596 = vand.u32 %v1530, 4294901760
        %v1597 = vsub.f32 %v1530, %v1596
        %v1598 = vand.u32 %v1597, 4294901760
        %v1599 = vsub.f32 %v1597, %v1598
        %v1600 = vand.u32 %v1599, 4294901760
        %1601 = vmatmul.f32.gmra.mxu0 %v1600
        %v1602 = vpop.f32.mrf.mxu0
        %v1603 = vadd.f32 0.0, %v1602
        %v1604 = vand.u32 %v1533, 4294901760
        %v1605 = vsub.f32 %v1533, %v1604
        %v1606 = vand.u32 %v1605, 4294901760
        %v1607 = vsub.f32 %v1605, %v1606
        %v1608 = vand.u32 %v1607, 4294901760
        %1609 = vmatmul.f32.gmra.mxu0 %v1608
        %v1610 = vpop.f32.mrf.mxu0
        %v1611 = vadd.f32 0.0, %v1610
        %v1612 = vand.u32 %v1536, 4294901760
        %v1613 = vsub.f32 %v1536, %v1612
        %v1614 = vand.u32 %v1613, 4294901760
        %v1615 = vsub.f32 %v1613, %v1614
        %v1616 = vand.u32 %v1615, 4294901760
        %1617 = vmatmul.f32.gmra.mxu0 %v1616
        %v1618 = vpop.f32.mrf.mxu0
        %v1619 = vadd.f32 0.0, %v1618
        %1620 = vdwg.mxu0
        %1621 = vmatpush.msra.mxu0 0.0
        %1622 = vmatpush.msra.mxu0 0.0
        %1623 = vmatpush.msra.mxu0 0.0
        %1624 = vmatpush.msra.mxu0 0.0
        %1625 = vmatpush.msra.mxu0 0.0
        %1626 = vmatpush.msra.mxu0 0.0
        %1627 = vmatpush.msra.mxu0 0.0
        %1628 = vmatpush.msra.mxu0 0.0
        %1629 = vmatpush.msra.mxu0 0.0
        %1630 = vmatpush.msra.mxu0 0.0
        %1631 = vmatpush.msra.mxu0 0.0
        %1632 = vmatpush.msra.mxu0 0.0
        %1633 = vmatpush.msra.mxu0 0.0
        %1634 = vmatpush.msra.mxu0 0.0
        %v1635 = vand.u32 %v704, 4294901760
        %v1636 = vsub.f32 %v704, %v1635
        %v1637 = vand.u32 %v1636, 4294901760
        %v1638 = vsub.f32 %v1636, %v1637
        %v1639 = vand.u32 %v1638, 4294901760
        %1640 = vmatpush.msra.mxu0 %v1639
        %v1641 = vand.u32 %v703, 4294901760
        %v1642 = vsub.f32 %v703, %v1641
        %v1643 = vand.u32 %v1642, 4294901760
        %v1644 = vsub.f32 %v1642, %v1643
        %v1645 = vand.u32 %v1644, 4294901760
        %1646 = vmatpush.msra.mxu0 %v1645
        %v1647 = vand.u32 %v1515, 4294901760
        %1648 = vmatmul.f32.gmra.mxu0 %v1647
        %v1649 = vpop.f32.mrf.mxu0
        %v1650 = vadd.f32 %v1563, %v1649
        %v1651 = vand.u32 %v1518, 4294901760
        %1652 = vmatmul.f32.gmra.mxu0 %v1651
        %v1653 = vpop.f32.mrf.mxu0
        %v1654 = vadd.f32 %v1571, %v1653
        %v1655 = vand.u32 %v1521, 4294901760
        %1656 = vmatmul.f32.gmra.mxu0 %v1655
        %v1657 = vpop.f32.mrf.mxu0
        %v1658 = vadd.f32 %v1579, %v1657
        %v1659 = vand.u32 %v1524, 4294901760
        %1660 = vmatmul.f32.gmra.mxu0 %v1659
        %v1661 = vpop.f32.mrf.mxu0
        %v1662 = vadd.f32 %v1587, %v1661
        %v1663 = vand.u32 %v1527, 4294901760
        %1664 = vmatmul.f32.gmra.mxu0 %v1663
        %v1665 = vpop.f32.mrf.mxu0
        %v1666 = vadd.f32 %v1595, %v1665
        %v1667 = vand.u32 %v1530, 4294901760
        %1668 = vmatmul.f32.gmra.mxu0 %v1667
        %v1669 = vpop.f32.mrf.mxu0
        %v1670 = vadd.f32 %v1603, %v1669
        %v1671 = vand.u32 %v1533, 4294901760
        %1672 = vmatmul.f32.gmra.mxu0 %v1671
        %v1673 = vpop.f32.mrf.mxu0
        %v1674 = vadd.f32 %v1611, %v1673
        %v1675 = vand.u32 %v1536, 4294901760
        %1676 = vmatmul.f32.gmra.mxu0 %v1675
        %v1677 = vpop.f32.mrf.mxu0
        %v1678 = vadd.f32 %v1619, %v1677
        %1679 = vdwg.mxu0
        %1680 = vmatpush.msra.mxu0 0.0
        %1681 = vmatpush.msra.mxu0 0.0
        %1682 = vmatpush.msra.mxu0 0.0
        %1683 = vmatpush.msra.mxu0 0.0
        %1684 = vmatpush.msra.mxu0 0.0
        %1685 = vmatpush.msra.mxu0 0.0
        %1686 = vmatpush.msra.mxu0 0.0
        %1687 = vmatpush.msra.mxu0 0.0
        %1688 = vmatpush.msra.mxu0 0.0
        %1689 = vmatpush.msra.mxu0 0.0
        %1690 = vmatpush.msra.mxu0 0.0
        %1691 = vmatpush.msra.mxu0 0.0
        %1692 = vmatpush.msra.mxu0 0.0
        %1693 = vmatpush.msra.mxu0 0.0
        %v1694 = vand.u32 %v704, 4294901760
        %v1695 = vsub.f32 %v704, %v1694
        %1696 = vmatpush.msra.mxu0 %v1695
        %v1697 = vand.u32 %v703, 4294901760
        %v1698 = vsub.f32 %v703, %v1697
        %1699 = vmatpush.msra.mxu0 %v1698
        %v1700 = vand.u32 %v1515, 4294901760
        %v1701 = vsub.f32 %v1515, %v1700
        %1702 = vmatmul.f32.gmra.mxu0 %v1701
        %v1703 = vpop.f32.mrf.mxu0
        %v1704 = vadd.f32 %v1650, %v1703
        %v1705 = vand.u32 %v1518, 4294901760
        %v1706 = vsub.f32 %v1518, %v1705
        %1707 = vmatmul.f32.gmra.mxu0 %v1706
        %v1708 = vpop.f32.mrf.mxu0
        %v1709 = vadd.f32 %v1654, %v1708
        %v1710 = vand.u32 %v1521, 4294901760
        %v1711 = vsub.f32 %v1521, %v1710
        %1712 = vmatmul.f32.gmra.mxu0 %v1711
        %v1713 = vpop.f32.mrf.mxu0
        %v1714 = vadd.f32 %v1658, %v1713
        %v1715 = vand.u32 %v1524, 4294901760
        %v1716 = vsub.f32 %v1524, %v1715
        %1717 = vmatmul.f32.gmra.mxu0 %v1716
        %v1718 = vpop.f32.mrf.mxu0
        %v1719 = vadd.f32 %v1662, %v1718
        %v1720 = vand.u32 %v1527, 4294901760
        %v1721 = vsub.f32 %v1527, %v1720
        %1722 = vmatmul.f32.gmra.mxu0 %v1721
        %v1723 = vpop.f32.mrf.mxu0
        %v1724 = vadd.f32 %v1666, %v1723
        %v1725 = vand.u32 %v1530, 4294901760
        %v1726 = vsub.f32 %v1530, %v1725
        %1727 = vmatmul.f32.gmra.mxu0 %v1726
        %v1728 = vpop.f32.mrf.mxu0
        %v1729 = vadd.f32 %v1670, %v1728
        %v1730 = vand.u32 %v1533, 4294901760
        %v1731 = vsub.f32 %v1533, %v1730
        %1732 = vmatmul.f32.gmra.mxu0 %v1731
        %v1733 = vpop.f32.mrf.mxu0
        %v1734 = vadd.f32 %v1674, %v1733
        %v1735 = vand.u32 %v1536, 4294901760
        %v1736 = vsub.f32 %v1536, %v1735
        %1737 = vmatmul.f32.gmra.mxu0 %v1736
        %v1738 = vpop.f32.mrf.mxu0
        %v1739 = vadd.f32 %v1678, %v1738
        %1740 = vdwg.mxu0
        %1741 = vmatpush.msra.mxu0 0.0
        %1742 = vmatpush.msra.mxu0 0.0
        %1743 = vmatpush.msra.mxu0 0.0
        %1744 = vmatpush.msra.mxu0 0.0
        %1745 = vmatpush.msra.mxu0 0.0
        %1746 = vmatpush.msra.mxu0 0.0
        %1747 = vmatpush.msra.mxu0 0.0
        %1748 = vmatpush.msra.mxu0 0.0
        %1749 = vmatpush.msra.mxu0 0.0
        %1750 = vmatpush.msra.mxu0 0.0
        %1751 = vmatpush.msra.mxu0 0.0
        %1752 = vmatpush.msra.mxu0 0.0
        %1753 = vmatpush.msra.mxu0 0.0
        %1754 = vmatpush.msra.mxu0 0.0
        %v1755 = vand.u32 %v704, 4294901760
        %1756 = vmatpush.msra.mxu0 %v1755
        %v1757 = vand.u32 %v703, 4294901760
        %1758 = vmatpush.msra.mxu0 %v1757
        %v1759 = vand.u32 %v1515, 4294901760
        %v1760 = vsub.f32 %v1515, %v1759
        %v1761 = vand.u32 %v1760, 4294901760
        %1762 = vmatmul.f32.gmra.mxu0 %v1761
        %v1763 = vpop.f32.mrf.mxu0
        %v1764 = vadd.f32 %v1704, %v1763
        %v1765 = vand.u32 %v1518, 4294901760
        %v1766 = vsub.f32 %v1518, %v1765
        %v1767 = vand.u32 %v1766, 4294901760
        %1768 = vmatmul.f32.gmra.mxu0 %v1767
        %v1769 = vpop.f32.mrf.mxu0
        %v1770 = vadd.f32 %v1709, %v1769
        %v1771 = vand.u32 %v1521, 4294901760
        %v1772 = vsub.f32 %v1521, %v1771
        %v1773 = vand.u32 %v1772, 4294901760
        %1774 = vmatmul.f32.gmra.mxu0 %v1773
        %v1775 = vpop.f32.mrf.mxu0
        %v1776 = vadd.f32 %v1714, %v1775
        %v1777 = vand.u32 %v1524, 4294901760
        %v1778 = vsub.f32 %v1524, %v1777
        %v1779 = vand.u32 %v1778, 4294901760
        %1780 = vmatmul.f32.gmra.mxu0 %v1779
        %v1781 = vpop.f32.mrf.mxu0
        %v1782 = vadd.f32 %v1719, %v1781
        %v1783 = vand.u32 %v1527, 4294901760
        %v1784 = vsub.f32 %v1527, %v1783
        %v1785 = vand.u32 %v1784, 4294901760
        %1786 = vmatmul.f32.gmra.mxu0 %v1785
        %v1787 = vpop.f32.mrf.mxu0
        %v1788 = vadd.f32 %v1724, %v1787
        %v1789 = vand.u32 %v1530, 4294901760
        %v1790 = vsub.f32 %v1530, %v1789
        %v1791 = vand.u32 %v1790, 4294901760
        %1792 = vmatmul.f32.gmra.mxu0 %v1791
        %v1793 = vpop.f32.mrf.mxu0
        %v1794 = vadd.f32 %v1729, %v1793
        %v1795 = vand.u32 %v1533, 4294901760
        %v1796 = vsub.f32 %v1533, %v1795
        %v1797 = vand.u32 %v1796, 4294901760
        %1798 = vmatmul.f32.gmra.mxu0 %v1797
        %v1799 = vpop.f32.mrf.mxu0
        %v1800 = vadd.f32 %v1734, %v1799
        %v1801 = vand.u32 %v1536, 4294901760
        %v1802 = vsub.f32 %v1536, %v1801
        %v1803 = vand.u32 %v1802, 4294901760
        %1804 = vmatmul.f32.gmra.mxu0 %v1803
        %v1805 = vpop.f32.mrf.mxu0
        %v1806 = vadd.f32 %v1739, %v1805
        %1807 = vdwg.mxu0
        %1808 = vmatpush.msra.mxu0 0.0
        %1809 = vmatpush.msra.mxu0 0.0
        %1810 = vmatpush.msra.mxu0 0.0
        %1811 = vmatpush.msra.mxu0 0.0
        %1812 = vmatpush.msra.mxu0 0.0
        %1813 = vmatpush.msra.mxu0 0.0
        %1814 = vmatpush.msra.mxu0 0.0
        %1815 = vmatpush.msra.mxu0 0.0
        %1816 = vmatpush.msra.mxu0 0.0
        %1817 = vmatpush.msra.mxu0 0.0
        %1818 = vmatpush.msra.mxu0 0.0
        %1819 = vmatpush.msra.mxu0 0.0
        %1820 = vmatpush.msra.mxu0 0.0
        %1821 = vmatpush.msra.mxu0 0.0
        %v1822 = vand.u32 %v704, 4294901760
        %v1823 = vsub.f32 %v704, %v1822
        %v1824 = vand.u32 %v1823, 4294901760
        %1825 = vmatpush.msra.mxu0 %v1824
        %v1826 = vand.u32 %v703, 4294901760
        %v1827 = vsub.f32 %v703, %v1826
        %v1828 = vand.u32 %v1827, 4294901760
        %1829 = vmatpush.msra.mxu0 %v1828
        %v1830 = vand.u32 %v1515, 4294901760
        %1831 = vmatmul.f32.gmra.mxu0 %v1830
        %v1832 = vpop.f32.mrf.mxu0
        %v1833 = vadd.f32 %v1764, %v1832
        %v1834 = vand.u32 %v1518, 4294901760
        %1835 = vmatmul.f32.gmra.mxu0 %v1834
        %v1836 = vpop.f32.mrf.mxu0
        %v1837 = vadd.f32 %v1770, %v1836
        %v1838 = vand.u32 %v1521, 4294901760
        %1839 = vmatmul.f32.gmra.mxu0 %v1838
        %v1840 = vpop.f32.mrf.mxu0
        %v1841 = vadd.f32 %v1776, %v1840
        %v1842 = vand.u32 %v1524, 4294901760
        %1843 = vmatmul.f32.gmra.mxu0 %v1842
        %v1844 = vpop.f32.mrf.mxu0
        %v1845 = vadd.f32 %v1782, %v1844
        %v1846 = vand.u32 %v1527, 4294901760
        %1847 = vmatmul.f32.gmra.mxu0 %v1846
        %v1848 = vpop.f32.mrf.mxu0
        %v1849 = vadd.f32 %v1788, %v1848
        %v1850 = vand.u32 %v1530, 4294901760
        %1851 = vmatmul.f32.gmra.mxu0 %v1850
        %v1852 = vpop.f32.mrf.mxu0
        %v1853 = vadd.f32 %v1794, %v1852
        %v1854 = vand.u32 %v1533, 4294901760
        %1855 = vmatmul.f32.gmra.mxu0 %v1854
        %v1856 = vpop.f32.mrf.mxu0
        %v1857 = vadd.f32 %v1800, %v1856
        %v1858 = vand.u32 %v1536, 4294901760
        %1859 = vmatmul.f32.gmra.mxu0 %v1858
        %v1860 = vpop.f32.mrf.mxu0
        %v1861 = vadd.f32 %v1806, %v1860
        %1862 = vdwg.mxu0
        %1863 = vmatpush.msra.mxu0 0.0
        %1864 = vmatpush.msra.mxu0 0.0
        %1865 = vmatpush.msra.mxu0 0.0
        %1866 = vmatpush.msra.mxu0 0.0
        %1867 = vmatpush.msra.mxu0 0.0
        %1868 = vmatpush.msra.mxu0 0.0
        %1869 = vmatpush.msra.mxu0 0.0
        %1870 = vmatpush.msra.mxu0 0.0
        %1871 = vmatpush.msra.mxu0 0.0
        %1872 = vmatpush.msra.mxu0 0.0
        %1873 = vmatpush.msra.mxu0 0.0
        %1874 = vmatpush.msra.mxu0 0.0
        %1875 = vmatpush.msra.mxu0 0.0
        %1876 = vmatpush.msra.mxu0 0.0
        %v1877 = vand.u32 %v704, 4294901760
        %1878 = vmatpush.msra.mxu0 %v1877
        %v1879 = vand.u32 %v703, 4294901760
        %1880 = vmatpush.msra.mxu0 %v1879
        %v1881 = vand.u32 %v1515, 4294901760
        %1882 = vmatmul.f32.gmra.mxu0 %v1881
        %v1883 = vpop.f32.mrf.mxu0
        %v1884 = vadd.f32 %v1833, %v1883
        %v1885 = vand.u32 %v1518, 4294901760
        %1886 = vmatmul.f32.gmra.mxu0 %v1885
        %v1887 = vpop.f32.mrf.mxu0
        %v1888 = vadd.f32 %v1837, %v1887
        %v1889 = vand.u32 %v1521, 4294901760
        %1890 = vmatmul.f32.gmra.mxu0 %v1889
        %v1891 = vpop.f32.mrf.mxu0
        %v1892 = vadd.f32 %v1841, %v1891
        %v1893 = vand.u32 %v1524, 4294901760
        %1894 = vmatmul.f32.gmra.mxu0 %v1893
        %v1895 = vpop.f32.mrf.mxu0
        %v1896 = vadd.f32 %v1845, %v1895
        %v1897 = vand.u32 %v1527, 4294901760
        %1898 = vmatmul.f32.gmra.mxu0 %v1897
        %v1899 = vpop.f32.mrf.mxu0
        %v1900 = vadd.f32 %v1849, %v1899
        %v1901 = vand.u32 %v1530, 4294901760
        %1902 = vmatmul.f32.gmra.mxu0 %v1901
        %v1903 = vpop.f32.mrf.mxu0
        %v1904 = vadd.f32 %v1853, %v1903
        %v1905 = vand.u32 %v1533, 4294901760
        %1906 = vmatmul.f32.gmra.mxu0 %v1905
        %v1907 = vpop.f32.mrf.mxu0
        %v1908 = vadd.f32 %v1857, %v1907
        %v1909 = vand.u32 %v1536, 4294901760
        %1910 = vmatmul.f32.gmra.mxu0 %v1909
        %v1911 = vpop.f32.mrf.mxu0
        %v1912 = vadd.f32 %v1861, %v1911
        %1913 = vdwg.mxu0
        %v1914 = vsub.f32 %v1076, %v1476
        %v1915 = vsub.f32 %v1080, %v1480
        %v1916 = vsub.f32 %v1084, %v1484
        %v1917 = vsub.f32 %v1088, %v1488
        %v1918 = vsub.f32 %v1092, %v1492
        %v1919 = vsub.f32 %v1096, %v1496
        %v1920 = vsub.f32 %v1100, %v1500
        %v1921 = vsub.f32 %v1104, %v1504
        %1922 = vst.msk [vmem:[#allocation2] sm:$0xff] %vm705, %v1914
        %1923 = vst.msk [vmem:[#allocation2 + $0x8] sm:$0xff] %vm705, %v1915
        %1924 = vst.msk [vmem:[#allocation2 + $0x10] sm:$0xff] %vm705, %v1916
        %1925 = vst.msk [vmem:[#allocation2 + $0x18] sm:$0xff] %vm705, %v1917
        %1926 = vst.msk [vmem:[#allocation2 + $0x20] sm:$0xff] %vm705, %v1918
        %1927 = vst.msk [vmem:[#allocation2 + $0x28] sm:$0xff] %vm705, %v1919
        %1928 = vst.msk [vmem:[#allocation2 + $0x30] sm:$0xff] %vm705, %v1920
        %1929 = vst.msk [vmem:[#allocation2 + $0x38] sm:$0xff] %vm705, %v1921
        %v1930 = vsub.f32 %v1884, %v1076
        %v1931 = vsub.f32 %v1888, %v1080
        %v1932 = vsub.f32 %v1892, %v1084
        %v1933 = vsub.f32 %v1896, %v1088
        %v1934 = vsub.f32 %v1900, %v1092
        %v1935 = vsub.f32 %v1904, %v1096
        %v1936 = vsub.f32 %v1908, %v1100
        %v1937 = vsub.f32 %v1912, %v1104
        %v1938 = vsub.f32 %v1930, %v1476
        %v1939 = vsub.f32 %v1931, %v1480
        %v1940 = vsub.f32 %v1932, %v1484
        %v1941 = vsub.f32 %v1933, %v1488
        %v1942 = vsub.f32 %v1934, %v1492
        %v1943 = vsub.f32 %v1935, %v1496
        %v1944 = vsub.f32 %v1936, %v1500
        %v1945 = vsub.f32 %v1937, %v1504
        %1946 = vst.msk [vmem:[#allocation3] sm:$0xff] %vm705, %v1938
        %1947 = vst.msk [vmem:[#allocation3 + $0x8] sm:$0xff] %vm705, %v1939
        %1948 = vst.msk [vmem:[#allocation3 + $0x10] sm:$0xff] %vm705, %v1940
        %1949 = vst.msk [vmem:[#allocation3 + $0x18] sm:$0xff] %vm705, %v1941
        %1950 = vst.msk [vmem:[#allocation3 + $0x20] sm:$0xff] %vm705, %v1942
        %1951 = vst.msk [vmem:[#allocation3 + $0x28] sm:$0xff] %vm705, %v1943
        %1952 = vst.msk [vmem:[#allocation3 + $0x30] sm:$0xff] %vm705, %v1944
        %1953 = vst.msk [vmem:[#allocation3 + $0x38] sm:$0xff] %vm705, %v1945
        %v1954 = vld [vmem:[#allocation15] sm:$0xff]
        %v1955 = vld [vmem:[#allocation15 + $0x8] sm:$0xff]
        %v1956 = vld [vmem:[#allocation16] sm:$0xff]
        %v1957 = vld [vmem:[#allocation16 + $0x8] sm:$0xff]
        %v1958 = vadd.f32 %v1954, %v1956
        %v1959 = vadd.f32 %v1955, %v1957
        %v1960 = vld [vmem:[#allocation2] sm:$0xff]
        %v1961 = vld [vmem:[#allocation2 + $0x8] sm:$0xff]
        %v1962 = vld [vmem:[#allocation3] sm:$0xff]
        %v1963 = vld [vmem:[#allocation3 + $0x8] sm:$0xff]
        %v1965 = vsel %vm705, %v1954, 0
        %v1968 = vsel %vm705, %v1955, 0
        %1970 = vmatpush.msra.mxu0 0.0
        %1971 = vmatpush.msra.mxu0 0.0
        %1972 = vmatpush.msra.mxu0 0.0
        %1973 = vmatpush.msra.mxu0 0.0
        %1974 = vmatpush.msra.mxu0 0.0
        %1975 = vmatpush.msra.mxu0 0.0
        %1976 = vmatpush.msra.mxu0 0.0
        %1977 = vmatpush.msra.mxu0 0.0
        %1978 = vmatpush.msra.mxu0 0.0
        %1979 = vmatpush.msra.mxu0 0.0
        %1980 = vmatpush.msra.mxu0 0.0
        %1981 = vmatpush.msra.mxu0 0.0
        %1982 = vmatpush.msra.mxu0 0.0
        %1983 = vmatpush.msra.mxu0 0.0
        %v1984 = vand.u32 %v1961, 4294901760
        %1985 = vmatpush.msra.mxu0 %v1984
        %v1986 = vand.u32 %v1960, 4294901760
        %1987 = vmatpush.msra.mxu0 %v1986
        %v1988 = vand.u32 %v1965, 4294901760
        %v1989 = vsub.f32 %v1965, %v1988
        %v1990 = vand.u32 %v1989, 4294901760
        %v1991 = vsub.f32 %v1989, %v1990
        %v1992 = vand.u32 %v1991, 4294901760
        %1993 = vmatmul.f32.gmra.mxu0 %v1992
        %v1994 = vpop.f32.mrf.mxu0
        %v1995 = vadd.f32 0.0, %v1994
        %v1996 = vand.u32 %v1968, 4294901760
        %v1997 = vsub.f32 %v1968, %v1996
        %v1998 = vand.u32 %v1997, 4294901760
        %v1999 = vsub.f32 %v1997, %v1998
        %v2000 = vand.u32 %v1999, 4294901760
        %2001 = vmatmul.f32.gmra.mxu0 %v2000
        %v2002 = vpop.f32.mrf.mxu0
        %v2003 = vadd.f32 0.0, %v2002
        %2004 = vdwg.mxu0
        %2005 = vmatpush.msra.mxu0 0.0
        %2006 = vmatpush.msra.mxu0 0.0
        %2007 = vmatpush.msra.mxu0 0.0
        %2008 = vmatpush.msra.mxu0 0.0
        %2009 = vmatpush.msra.mxu0 0.0
        %2010 = vmatpush.msra.mxu0 0.0
        %2011 = vmatpush.msra.mxu0 0.0
        %2012 = vmatpush.msra.mxu0 0.0
        %2013 = vmatpush.msra.mxu0 0.0
        %2014 = vmatpush.msra.mxu0 0.0
        %2015 = vmatpush.msra.mxu0 0.0
        %2016 = vmatpush.msra.mxu0 0.0
        %2017 = vmatpush.msra.mxu0 0.0
        %2018 = vmatpush.msra.mxu0 0.0
        %v2019 = vand.u32 %v1961, 4294901760
        %v2020 = vsub.f32 %v1961, %v2019
        %v2021 = vand.u32 %v2020, 4294901760
        %v2022 = vsub.f32 %v2020, %v2021
        %v2023 = vand.u32 %v2022, 4294901760
        %2024 = vmatpush.msra.mxu0 %v2023
        %v2025 = vand.u32 %v1960, 4294901760
        %v2026 = vsub.f32 %v1960, %v2025
        %v2027 = vand.u32 %v2026, 4294901760
        %v2028 = vsub.f32 %v2026, %v2027
        %v2029 = vand.u32 %v2028, 4294901760
        %2030 = vmatpush.msra.mxu0 %v2029
        %v2031 = vand.u32 %v1965, 4294901760
        %2032 = vmatmul.f32.gmra.mxu0 %v2031
        %v2033 = vpop.f32.mrf.mxu0
        %v2034 = vadd.f32 %v1995, %v2033
        %v2035 = vand.u32 %v1968, 4294901760
        %2036 = vmatmul.f32.gmra.mxu0 %v2035
        %v2037 = vpop.f32.mrf.mxu0
        %v2038 = vadd.f32 %v2003, %v2037
        %2039 = vdwg.mxu0
        %2040 = vmatpush.msra.mxu0 0.0
        %2041 = vmatpush.msra.mxu0 0.0
        %2042 = vmatpush.msra.mxu0 0.0
        %2043 = vmatpush.msra.mxu0 0.0
        %2044 = vmatpush.msra.mxu0 0.0
        %2045 = vmatpush.msra.mxu0 0.0
        %2046 = vmatpush.msra.mxu0 0.0
        %2047 = vmatpush.msra.mxu0 0.0
        %2048 = vmatpush.msra.mxu0 0.0
        %2049 = vmatpush.msra.mxu0 0.0
        %2050 = vmatpush.msra.mxu0 0.0
        %2051 = vmatpush.msra.mxu0 0.0
        %2052 = vmatpush.msra.mxu0 0.0
        %2053 = vmatpush.msra.mxu0 0.0
        %v2054 = vand.u32 %v1961, 4294901760
        %v2055 = vsub.f32 %v1961, %v2054
        %2056 = vmatpush.msra.mxu0 %v2055
        %v2057 = vand.u32 %v1960, 4294901760
        %v2058 = vsub.f32 %v1960, %v2057
        %2059 = vmatpush.msra.mxu0 %v2058
        %v2060 = vand.u32 %v1965, 4294901760
        %v2061 = vsub.f32 %v1965, %v2060
        %2062 = vmatmul.f32.gmra.mxu0 %v2061
        %v2063 = vpop.f32.mrf.mxu0
        %v2064 = vadd.f32 %v2034, %v2063
        %v2065 = vand.u32 %v1968, 4294901760
        %v2066 = vsub.f32 %v1968, %v2065
        %2067 = vmatmul.f32.gmra.mxu0 %v2066
        %v2068 = vpop.f32.mrf.mxu0
        %v2069 = vadd.f32 %v2038, %v2068
        %2070 = vdwg.mxu0
        %2071 = vmatpush.msra.mxu0 0.0
        %2072 = vmatpush.msra.mxu0 0.0
        %2073 = vmatpush.msra.mxu0 0.0
        %2074 = vmatpush.msra.mxu0 0.0
        %2075 = vmatpush.msra.mxu0 0.0
        %2076 = vmatpush.msra.mxu0 0.0
        %2077 = vmatpush.msra.mxu0 0.0
        %2078 = vmatpush.msra.mxu0 0.0
        %2079 = vmatpush.msra.mxu0 0.0
        %2080 = vmatpush.msra.mxu0 0.0
        %2081 = vmatpush.msra.mxu0 0.0
        %2082 = vmatpush.msra.mxu0 0.0
        %2083 = vmatpush.msra.mxu0 0.0
        %2084 = vmatpush.msra.mxu0 0.0
        %v2085 = vand.u32 %v1961, 4294901760
        %2086 = vmatpush.msra.mxu0 %v2085
        %v2087 = vand.u32 %v1960, 4294901760
        %2088 = vmatpush.msra.mxu0 %v2087
        %v2089 = vand.u32 %v1965, 4294901760
        %v2090 = vsub.f32 %v1965, %v2089
        %v2091 = vand.u32 %v2090, 4294901760
        %2092 = vmatmul.f32.gmra.mxu0 %v2091
        %v2093 = vpop.f32.mrf.mxu0
        %v2094 = vadd.f32 %v2064, %v2093
        %v2095 = vand.u32 %v1968, 4294901760
        %v2096 = vsub.f32 %v1968, %v2095
        %v2097 = vand.u32 %v2096, 4294901760
        %2098 = vmatmul.f32.gmra.mxu0 %v2097
        %v2099 = vpop.f32.mrf.mxu0
        %v2100 = vadd.f32 %v2069, %v2099
        %2101 = vdwg.mxu0
        %2102 = vmatpush.msra.mxu0 0.0
        %2103 = vmatpush.msra.mxu0 0.0
        %2104 = vmatpush.msra.mxu0 0.0
        %2105 = vmatpush.msra.mxu0 0.0
        %2106 = vmatpush.msra.mxu0 0.0
        %2107 = vmatpush.msra.mxu0 0.0
        %2108 = vmatpush.msra.mxu0 0.0
        %2109 = vmatpush.msra.mxu0 0.0
        %2110 = vmatpush.msra.mxu0 0.0
        %2111 = vmatpush.msra.mxu0 0.0
        %2112 = vmatpush.msra.mxu0 0.0
        %2113 = vmatpush.msra.mxu0 0.0
        %2114 = vmatpush.msra.mxu0 0.0
        %2115 = vmatpush.msra.mxu0 0.0
        %v2116 = vand.u32 %v1961, 4294901760
        %v2117 = vsub.f32 %v1961, %v2116
        %v2118 = vand.u32 %v2117, 4294901760
        %2119 = vmatpush.msra.mxu0 %v2118
        %v2120 = vand.u32 %v1960, 4294901760
        %v2121 = vsub.f32 %v1960, %v2120
        %v2122 = vand.u32 %v2121, 4294901760
        %2123 = vmatpush.msra.mxu0 %v2122
        %v2124 = vand.u32 %v1965, 4294901760
        %2125 = vmatmul.f32.gmra.mxu0 %v2124
        %v2126 = vpop.f32.mrf.mxu0
        %v2127 = vadd.f32 %v2094, %v2126
        %v2128 = vand.u32 %v1968, 4294901760
        %2129 = vmatmul.f32.gmra.mxu0 %v2128
        %v2130 = vpop.f32.mrf.mxu0
        %v2131 = vadd.f32 %v2100, %v2130
        %2132 = vdwg.mxu0
        %2133 = vmatpush.msra.mxu0 0.0
        %2134 = vmatpush.msra.mxu0 0.0
        %2135 = vmatpush.msra.mxu0 0.0
        %2136 = vmatpush.msra.mxu0 0.0
        %2137 = vmatpush.msra.mxu0 0.0
        %2138 = vmatpush.msra.mxu0 0.0
        %2139 = vmatpush.msra.mxu0 0.0
        %2140 = vmatpush.msra.mxu0 0.0
        %2141 = vmatpush.msra.mxu0 0.0
        %2142 = vmatpush.msra.mxu0 0.0
        %2143 = vmatpush.msra.mxu0 0.0
        %2144 = vmatpush.msra.mxu0 0.0
        %2145 = vmatpush.msra.mxu0 0.0
        %2146 = vmatpush.msra.mxu0 0.0
        %v2147 = vand.u32 %v1961, 4294901760
        %2148 = vmatpush.msra.mxu0 %v2147
        %v2149 = vand.u32 %v1960, 4294901760
        %2150 = vmatpush.msra.mxu0 %v2149
        %v2151 = vand.u32 %v1965, 4294901760
        %2152 = vmatmul.f32.gmra.mxu0 %v2151
        %v2153 = vpop.f32.mrf.mxu0
        %v2154 = vadd.f32 %v2127, %v2153
        %v2155 = vand.u32 %v1968, 4294901760
        %2156 = vmatmul.f32.gmra.mxu0 %v2155
        %v2157 = vpop.f32.mrf.mxu0
        %v2158 = vadd.f32 %v2131, %v2157
        %2159 = vdwg.mxu0
        %v2161 = vsel %vm705, %v1956, 0
        %v2164 = vsel %vm705, %v1957, 0
        %2166 = vmatpush.msra.mxu0 0.0
        %2167 = vmatpush.msra.mxu0 0.0
        %2168 = vmatpush.msra.mxu0 0.0
        %2169 = vmatpush.msra.mxu0 0.0
        %2170 = vmatpush.msra.mxu0 0.0
        %2171 = vmatpush.msra.mxu0 0.0
        %2172 = vmatpush.msra.mxu0 0.0
        %2173 = vmatpush.msra.mxu0 0.0
        %2174 = vmatpush.msra.mxu0 0.0
        %2175 = vmatpush.msra.mxu0 0.0
        %2176 = vmatpush.msra.mxu0 0.0
        %2177 = vmatpush.msra.mxu0 0.0
        %2178 = vmatpush.msra.mxu0 0.0
        %2179 = vmatpush.msra.mxu0 0.0
        %v2180 = vand.u32 %v1963, 4294901760
        %2181 = vmatpush.msra.mxu0 %v2180
        %v2182 = vand.u32 %v1962, 4294901760
        %2183 = vmatpush.msra.mxu0 %v2182
        %v2184 = vand.u32 %v2161, 4294901760
        %v2185 = vsub.f32 %v2161, %v2184
        %v2186 = vand.u32 %v2185, 4294901760
        %v2187 = vsub.f32 %v2185, %v2186
        %v2188 = vand.u32 %v2187, 4294901760
        %2189 = vmatmul.f32.gmra.mxu0 %v2188
        %v2190 = vpop.f32.mrf.mxu0
        %v2191 = vadd.f32 0.0, %v2190
        %v2192 = vand.u32 %v2164, 4294901760
        %v2193 = vsub.f32 %v2164, %v2192
        %v2194 = vand.u32 %v2193, 4294901760
        %v2195 = vsub.f32 %v2193, %v2194
        %v2196 = vand.u32 %v2195, 4294901760
        %2197 = vmatmul.f32.gmra.mxu0 %v2196
        %v2198 = vpop.f32.mrf.mxu0
        %v2199 = vadd.f32 0.0, %v2198
        %2200 = vdwg.mxu0
        %2201 = vmatpush.msra.mxu0 0.0
        %2202 = vmatpush.msra.mxu0 0.0
        %2203 = vmatpush.msra.mxu0 0.0
        %2204 = vmatpush.msra.mxu0 0.0
        %2205 = vmatpush.msra.mxu0 0.0
        %2206 = vmatpush.msra.mxu0 0.0
        %2207 = vmatpush.msra.mxu0 0.0
        %2208 = vmatpush.msra.mxu0 0.0
        %2209 = vmatpush.msra.mxu0 0.0
        %2210 = vmatpush.msra.mxu0 0.0
        %2211 = vmatpush.msra.mxu0 0.0
        %2212 = vmatpush.msra.mxu0 0.0
        %2213 = vmatpush.msra.mxu0 0.0
        %2214 = vmatpush.msra.mxu0 0.0
        %v2215 = vand.u32 %v1963, 4294901760
        %v2216 = vsub.f32 %v1963, %v2215
        %v2217 = vand.u32 %v2216, 4294901760
        %v2218 = vsub.f32 %v2216, %v2217
        %v2219 = vand.u32 %v2218, 4294901760
        %2220 = vmatpush.msra.mxu0 %v2219
        %v2221 = vand.u32 %v1962, 4294901760
        %v2222 = vsub.f32 %v1962, %v2221
        %v2223 = vand.u32 %v2222, 4294901760
        %v2224 = vsub.f32 %v2222, %v2223
        %v2225 = vand.u32 %v2224, 4294901760
        %2226 = vmatpush.msra.mxu0 %v2225
        %v2227 = vand.u32 %v2161, 4294901760
        %2228 = vmatmul.f32.gmra.mxu0 %v2227
        %v2229 = vpop.f32.mrf.mxu0
        %v2230 = vadd.f32 %v2191, %v2229
        %v2231 = vand.u32 %v2164, 4294901760
        %2232 = vmatmul.f32.gmra.mxu0 %v2231
        %v2233 = vpop.f32.mrf.mxu0
        %v2234 = vadd.f32 %v2199, %v2233
        %2235 = vdwg.mxu0
        %2236 = vmatpush.msra.mxu0 0.0
        %2237 = vmatpush.msra.mxu0 0.0
        %2238 = vmatpush.msra.mxu0 0.0
        %2239 = vmatpush.msra.mxu0 0.0
        %2240 = vmatpush.msra.mxu0 0.0
        %2241 = vmatpush.msra.mxu0 0.0
        %2242 = vmatpush.msra.mxu0 0.0
        %2243 = vmatpush.msra.mxu0 0.0
        %2244 = vmatpush.msra.mxu0 0.0
        %2245 = vmatpush.msra.mxu0 0.0
        %2246 = vmatpush.msra.mxu0 0.0
        %2247 = vmatpush.msra.mxu0 0.0
        %2248 = vmatpush.msra.mxu0 0.0
        %2249 = vmatpush.msra.mxu0 0.0
        %v2250 = vand.u32 %v1963, 4294901760
        %v2251 = vsub.f32 %v1963, %v2250
        %2252 = vmatpush.msra.mxu0 %v2251
        %v2253 = vand.u32 %v1962, 4294901760
        %v2254 = vsub.f32 %v1962, %v2253
        %2255 = vmatpush.msra.mxu0 %v2254
        %v2256 = vand.u32 %v2161, 4294901760
        %v2257 = vsub.f32 %v2161, %v2256
        %2258 = vmatmul.f32.gmra.mxu0 %v2257
        %v2259 = vpop.f32.mrf.mxu0
        %v2260 = vadd.f32 %v2230, %v2259
        %v2261 = vand.u32 %v2164, 4294901760
        %v2262 = vsub.f32 %v2164, %v2261
        %2263 = vmatmul.f32.gmra.mxu0 %v2262
        %v2264 = vpop.f32.mrf.mxu0
        %v2265 = vadd.f32 %v2234, %v2264
        %2266 = vdwg.mxu0
        %2267 = vmatpush.msra.mxu0 0.0
        %2268 = vmatpush.msra.mxu0 0.0
        %2269 = vmatpush.msra.mxu0 0.0
        %2270 = vmatpush.msra.mxu0 0.0
        %2271 = vmatpush.msra.mxu0 0.0
        %2272 = vmatpush.msra.mxu0 0.0
        %2273 = vmatpush.msra.mxu0 0.0
        %2274 = vmatpush.msra.mxu0 0.0
        %2275 = vmatpush.msra.mxu0 0.0
        %2276 = vmatpush.msra.mxu0 0.0
        %2277 = vmatpush.msra.mxu0 0.0
        %2278 = vmatpush.msra.mxu0 0.0
        %2279 = vmatpush.msra.mxu0 0.0
        %2280 = vmatpush.msra.mxu0 0.0
        %v2281 = vand.u32 %v1963, 4294901760
        %2282 = vmatpush.msra.mxu0 %v2281
        %v2283 = vand.u32 %v1962, 4294901760
        %2284 = vmatpush.msra.mxu0 %v2283
        %v2285 = vand.u32 %v2161, 4294901760
        %v2286 = vsub.f32 %v2161, %v2285
        %v2287 = vand.u32 %v2286, 4294901760
        %2288 = vmatmul.f32.gmra.mxu0 %v2287
        %v2289 = vpop.f32.mrf.mxu0
        %v2290 = vadd.f32 %v2260, %v2289
        %v2291 = vand.u32 %v2164, 4294901760
        %v2292 = vsub.f32 %v2164, %v2291
        %v2293 = vand.u32 %v2292, 4294901760
        %2294 = vmatmul.f32.gmra.mxu0 %v2293
        %v2295 = vpop.f32.mrf.mxu0
        %v2296 = vadd.f32 %v2265, %v2295
        %2297 = vdwg.mxu0
        %2298 = vmatpush.msra.mxu0 0.0
        %2299 = vmatpush.msra.mxu0 0.0
        %2300 = vmatpush.msra.mxu0 0.0
        %2301 = vmatpush.msra.mxu0 0.0
        %2302 = vmatpush.msra.mxu0 0.0
        %2303 = vmatpush.msra.mxu0 0.0
        %2304 = vmatpush.msra.mxu0 0.0
        %2305 = vmatpush.msra.mxu0 0.0
        %2306 = vmatpush.msra.mxu0 0.0
        %2307 = vmatpush.msra.mxu0 0.0
        %2308 = vmatpush.msra.mxu0 0.0
        %2309 = vmatpush.msra.mxu0 0.0
        %2310 = vmatpush.msra.mxu0 0.0
        %2311 = vmatpush.msra.mxu0 0.0
        %v2312 = vand.u32 %v1963, 4294901760
        %v2313 = vsub.f32 %v1963, %v2312
        %v2314 = vand.u32 %v2313, 4294901760
        %2315 = vmatpush.msra.mxu0 %v2314
        %v2316 = vand.u32 %v1962, 4294901760
        %v2317 = vsub.f32 %v1962, %v2316
        %v2318 = vand.u32 %v2317, 4294901760
        %2319 = vmatpush.msra.mxu0 %v2318
        %v2320 = vand.u32 %v2161, 4294901760
        %2321 = vmatmul.f32.gmra.mxu0 %v2320
        %v2322 = vpop.f32.mrf.mxu0
        %v2323 = vadd.f32 %v2290, %v2322
        %v2324 = vand.u32 %v2164, 4294901760
        %2325 = vmatmul.f32.gmra.mxu0 %v2324
        %v2326 = vpop.f32.mrf.mxu0
        %v2327 = vadd.f32 %v2296, %v2326
        %2328 = vdwg.mxu0
        %2329 = vmatpush.msra.mxu0 0.0
        %2330 = vmatpush.msra.mxu0 0.0
        %2331 = vmatpush.msra.mxu0 0.0
        %2332 = vmatpush.msra.mxu0 0.0
        %2333 = vmatpush.msra.mxu0 0.0
        %2334 = vmatpush.msra.mxu0 0.0
        %2335 = vmatpush.msra.mxu0 0.0
        %2336 = vmatpush.msra.mxu0 0.0
        %2337 = vmatpush.msra.mxu0 0.0
        %2338 = vmatpush.msra.mxu0 0.0
        %2339 = vmatpush.msra.mxu0 0.0
        %2340 = vmatpush.msra.mxu0 0.0
        %2341 = vmatpush.msra.mxu0 0.0
        %2342 = vmatpush.msra.mxu0 0.0
        %v2343 = vand.u32 %v1963, 4294901760
        %2344 = vmatpush.msra.mxu0 %v2343
        %v2345 = vand.u32 %v1962, 4294901760
        %2346 = vmatpush.msra.mxu0 %v2345
        %v2347 = vand.u32 %v2161, 4294901760
        %2348 = vmatmul.f32.gmra.mxu0 %v2347
        %v2349 = vpop.f32.mrf.mxu0
        %v2350 = vadd.f32 %v2323, %v2349
        %v2351 = vand.u32 %v2164, 4294901760
        %2352 = vmatmul.f32.gmra.mxu0 %v2351
        %v2353 = vpop.f32.mrf.mxu0
        %v2354 = vadd.f32 %v2327, %v2353
        %2355 = vdwg.mxu0
        %v2356 = vadd.f32 %v1960, %v1962
        %v2357 = vadd.f32 %v1961, %v1963
        %v2359 = vsel %vm705, %v1958, 0
        %v2362 = vsel %vm705, %v1959, 0
        %2364 = vmatpush.msra.mxu0 0.0
        %2365 = vmatpush.msra.mxu0 0.0
        %2366 = vmatpush.msra.mxu0 0.0
        %2367 = vmatpush.msra.mxu0 0.0
        %2368 = vmatpush.msra.mxu0 0.0
        %2369 = vmatpush.msra.mxu0 0.0
        %2370 = vmatpush.msra.mxu0 0.0
        %2371 = vmatpush.msra.mxu0 0.0
        %2372 = vmatpush.msra.mxu0 0.0
        %2373 = vmatpush.msra.mxu0 0.0
        %2374 = vmatpush.msra.mxu0 0.0
        %2375 = vmatpush.msra.mxu0 0.0
        %2376 = vmatpush.msra.mxu0 0.0
        %2377 = vmatpush.msra.mxu0 0.0
        %v2378 = vand.u32 %v2357, 4294901760
        %2379 = vmatpush.msra.mxu0 %v2378
        %v2380 = vand.u32 %v2356, 4294901760
        %2381 = vmatpush.msra.mxu0 %v2380
        %v2382 = vand.u32 %v2359, 4294901760
        %v2383 = vsub.f32 %v2359, %v2382
        %v2384 = vand.u32 %v2383, 4294901760
        %v2385 = vsub.f32 %v2383, %v2384
        %v2386 = vand.u32 %v2385, 4294901760
        %2387 = vmatmul.f32.gmra.mxu0 %v2386
        %v2388 = vpop.f32.mrf.mxu0
        %v2389 = vadd.f32 0.0, %v2388
        %v2390 = vand.u32 %v2362, 4294901760
        %v2391 = vsub.f32 %v2362, %v2390
        %v2392 = vand.u32 %v2391, 4294901760
        %v2393 = vsub.f32 %v2391, %v2392
        %v2394 = vand.u32 %v2393, 4294901760
        %2395 = vmatmul.f32.gmra.mxu0 %v2394
        %v2396 = vpop.f32.mrf.mxu0
        %v2397 = vadd.f32 0.0, %v2396
        %2398 = vdwg.mxu0
        %2399 = vmatpush.msra.mxu0 0.0
        %2400 = vmatpush.msra.mxu0 0.0
        %2401 = vmatpush.msra.mxu0 0.0
        %2402 = vmatpush.msra.mxu0 0.0
        %2403 = vmatpush.msra.mxu0 0.0
        %2404 = vmatpush.msra.mxu0 0.0
        %2405 = vmatpush.msra.mxu0 0.0
        %2406 = vmatpush.msra.mxu0 0.0
        %2407 = vmatpush.msra.mxu0 0.0
        %2408 = vmatpush.msra.mxu0 0.0
        %2409 = vmatpush.msra.mxu0 0.0
        %2410 = vmatpush.msra.mxu0 0.0
        %2411 = vmatpush.msra.mxu0 0.0
        %2412 = vmatpush.msra.mxu0 0.0
        %v2413 = vand.u32 %v2357, 4294901760
        %v2414 = vsub.f32 %v2357, %v2413
        %v2415 = vand.u32 %v2414, 4294901760
        %v2416 = vsub.f32 %v2414, %v2415
        %v2417 = vand.u32 %v2416, 4294901760
        %2418 = vmatpush.msra.mxu0 %v2417
        %v2419 = vand.u32 %v2356, 4294901760
        %v2420 = vsub.f32 %v2356, %v2419
        %v2421 = vand.u32 %v2420, 4294901760
        %v2422 = vsub.f32 %v2420, %v2421
        %v2423 = vand.u32 %v2422, 4294901760
        %2424 = vmatpush.msra.mxu0 %v2423
        %v2425 = vand.u32 %v2359, 4294901760
        %2426 = vmatmul.f32.gmra.mxu0 %v2425
        %v2427 = vpop.f32.mrf.mxu0
        %v2428 = vadd.f32 %v2389, %v2427
        %v2429 = vand.u32 %v2362, 4294901760
        %2430 = vmatmul.f32.gmra.mxu0 %v2429
        %v2431 = vpop.f32.mrf.mxu0
        %v2432 = vadd.f32 %v2397, %v2431
        %2433 = vdwg.mxu0
        %2434 = vmatpush.msra.mxu0 0.0
        %2435 = vmatpush.msra.mxu0 0.0
        %2436 = vmatpush.msra.mxu0 0.0
        %2437 = vmatpush.msra.mxu0 0.0
        %2438 = vmatpush.msra.mxu0 0.0
        %2439 = vmatpush.msra.mxu0 0.0
        %2440 = vmatpush.msra.mxu0 0.0
        %2441 = vmatpush.msra.mxu0 0.0
        %2442 = vmatpush.msra.mxu0 0.0
        %2443 = vmatpush.msra.mxu0 0.0
        %2444 = vmatpush.msra.mxu0 0.0
        %2445 = vmatpush.msra.mxu0 0.0
        %2446 = vmatpush.msra.mxu0 0.0
        %2447 = vmatpush.msra.mxu0 0.0
        %v2448 = vand.u32 %v2357, 4294901760
        %v2449 = vsub.f32 %v2357, %v2448
        %2450 = vmatpush.msra.mxu0 %v2449
        %v2451 = vand.u32 %v2356, 4294901760
        %v2452 = vsub.f32 %v2356, %v2451
        %2453 = vmatpush.msra.mxu0 %v2452
        %v2454 = vand.u32 %v2359, 4294901760
        %v2455 = vsub.f32 %v2359, %v2454
        %2456 = vmatmul.f32.gmra.mxu0 %v2455
        %v2457 = vpop.f32.mrf.mxu0
        %v2458 = vadd.f32 %v2428, %v2457
        %v2459 = vand.u32 %v2362, 4294901760
        %v2460 = vsub.f32 %v2362, %v2459
        %2461 = vmatmul.f32.gmra.mxu0 %v2460
        %v2462 = vpop.f32.mrf.mxu0
        %v2463 = vadd.f32 %v2432, %v2462
        %2464 = vdwg.mxu0
        %2465 = vmatpush.msra.mxu0 0.0
        %2466 = vmatpush.msra.mxu0 0.0
        %2467 = vmatpush.msra.mxu0 0.0
        %2468 = vmatpush.msra.mxu0 0.0
        %2469 = vmatpush.msra.mxu0 0.0
        %2470 = vmatpush.msra.mxu0 0.0
        %2471 = vmatpush.msra.mxu0 0.0
        %2472 = vmatpush.msra.mxu0 0.0
        %2473 = vmatpush.msra.mxu0 0.0
        %2474 = vmatpush.msra.mxu0 0.0
        %2475 = vmatpush.msra.mxu0 0.0
        %2476 = vmatpush.msra.mxu0 0.0
        %2477 = vmatpush.msra.mxu0 0.0
        %2478 = vmatpush.msra.mxu0 0.0
        %v2479 = vand.u32 %v2357, 4294901760
        %2480 = vmatpush.msra.mxu0 %v2479
        %v2481 = vand.u32 %v2356, 4294901760
        %2482 = vmatpush.msra.mxu0 %v2481
        %v2483 = vand.u32 %v2359, 4294901760
        %v2484 = vsub.f32 %v2359, %v2483
        %v2485 = vand.u32 %v2484, 4294901760
        %2486 = vmatmul.f32.gmra.mxu0 %v2485
        %v2487 = vpop.f32.mrf.mxu0
        %v2488 = vadd.f32 %v2458, %v2487
        %v2489 = vand.u32 %v2362, 4294901760
        %v2490 = vsub.f32 %v2362, %v2489
        %v2491 = vand.u32 %v2490, 4294901760
        %2492 = vmatmul.f32.gmra.mxu0 %v2491
        %v2493 = vpop.f32.mrf.mxu0
        %v2494 = vadd.f32 %v2463, %v2493
        %2495 = vdwg.mxu0
        %2496 = vmatpush.msra.mxu0 0.0
        %2497 = vmatpush.msra.mxu0 0.0
        %2498 = vmatpush.msra.mxu0 0.0
        %2499 = vmatpush.msra.mxu0 0.0
        %2500 = vmatpush.msra.mxu0 0.0
        %2501 = vmatpush.msra.mxu0 0.0
        %2502 = vmatpush.msra.mxu0 0.0
        %2503 = vmatpush.msra.mxu0 0.0
        %2504 = vmatpush.msra.mxu0 0.0
        %2505 = vmatpush.msra.mxu0 0.0
        %2506 = vmatpush.msra.mxu0 0.0
        %2507 = vmatpush.msra.mxu0 0.0
        %2508 = vmatpush.msra.mxu0 0.0
        %2509 = vmatpush.msra.mxu0 0.0
        %v2510 = vand.u32 %v2357, 4294901760
        %v2511 = vsub.f32 %v2357, %v2510
        %v2512 = vand.u32 %v2511, 4294901760
        %2513 = vmatpush.msra.mxu0 %v2512
        %v2514 = vand.u32 %v2356, 4294901760
        %v2515 = vsub.f32 %v2356, %v2514
        %v2516 = vand.u32 %v2515, 4294901760
        %2517 = vmatpush.msra.mxu0 %v2516
        %v2518 = vand.u32 %v2359, 4294901760
        %2519 = vmatmul.f32.gmra.mxu0 %v2518
        %v2520 = vpop.f32.mrf.mxu0
        %v2521 = vadd.f32 %v2488, %v2520
        %v2522 = vand.u32 %v2362, 4294901760
        %2523 = vmatmul.f32.gmra.mxu0 %v2522
        %v2524 = vpop.f32.mrf.mxu0
        %v2525 = vadd.f32 %v2494, %v2524
        %2526 = vdwg.mxu0
        %2527 = vmatpush.msra.mxu0 0.0
        %2528 = vmatpush.msra.mxu0 0.0
        %2529 = vmatpush.msra.mxu0 0.0
        %2530 = vmatpush.msra.mxu0 0.0
        %2531 = vmatpush.msra.mxu0 0.0
        %2532 = vmatpush.msra.mxu0 0.0
        %2533 = vmatpush.msra.mxu0 0.0
        %2534 = vmatpush.msra.mxu0 0.0
        %2535 = vmatpush.msra.mxu0 0.0
        %2536 = vmatpush.msra.mxu0 0.0
        %2537 = vmatpush.msra.mxu0 0.0
        %2538 = vmatpush.msra.mxu0 0.0
        %2539 = vmatpush.msra.mxu0 0.0
        %2540 = vmatpush.msra.mxu0 0.0
        %v2541 = vand.u32 %v2357, 4294901760
        %2542 = vmatpush.msra.mxu0 %v2541
        %v2543 = vand.u32 %v2356, 4294901760
        %2544 = vmatpush.msra.mxu0 %v2543
        %v2545 = vand.u32 %v2359, 4294901760
        %2546 = vmatmul.f32.gmra.mxu0 %v2545
        %v2547 = vpop.f32.mrf.mxu0
        %v2548 = vadd.f32 %v2521, %v2547
        %v2549 = vand.u32 %v2362, 4294901760
        %2550 = vmatmul.f32.gmra.mxu0 %v2549
        %v2551 = vpop.f32.mrf.mxu0
        %v2552 = vadd.f32 %v2525, %v2551
        %2553 = vdwg.mxu0
        %v2554 = vsub.f32 %v2154, %v2350
        %v2555 = vsub.f32 %v2158, %v2354
        %2556 = vst.msk [vmem:[%s619] sm:$0xff] %vm705, %v2554
        %2557 = vst.msk [vmem:[%s619 + $0x8] sm:$0xff] %vm705, %v2555
        %v2558 = vsub.f32 %v2548, %v2154
        %v2559 = vsub.f32 %v2552, %v2158
        %v2560 = vsub.f32 %v2558, %v2350
        %v2561 = vsub.f32 %v2559, %v2354
        %2562 = vst.msk [vmem:[%s626] sm:$0xff] %vm705, %v2560
        %2563 = vst.msk [vmem:[%s626 + $0x8] sm:$0xff] %vm705, %v2561
        %s2564 = scalar_lea.vmem [#allocation2], 16
        %v2565 = vld [vmem:[%s2564] sm:$0xff]
        %v2566 = vld [vmem:[%s2564 + $0x8] sm:$0xff]
        %s2567 = scalar_lea.vmem [#allocation3], 16
        %v2568 = vld [vmem:[%s2567] sm:$0xff]
        %v2569 = vld [vmem:[%s2567 + $0x8] sm:$0xff]
        %2570 = vmatpush.msra.mxu0 0.0
        %2571 = vmatpush.msra.mxu0 0.0
        %2572 = vmatpush.msra.mxu0 0.0
        %2573 = vmatpush.msra.mxu0 0.0
        %2574 = vmatpush.msra.mxu0 0.0
        %2575 = vmatpush.msra.mxu0 0.0
        %2576 = vmatpush.msra.mxu0 0.0
        %2577 = vmatpush.msra.mxu0 0.0
        %2578 = vmatpush.msra.mxu0 0.0
        %2579 = vmatpush.msra.mxu0 0.0
        %2580 = vmatpush.msra.mxu0 0.0
        %2581 = vmatpush.msra.mxu0 0.0
        %2582 = vmatpush.msra.mxu0 0.0
        %2583 = vmatpush.msra.mxu0 0.0
        %v2584 = vand.u32 %v2566, 4294901760
        %2585 = vmatpush.msra.mxu0 %v2584
        %v2586 = vand.u32 %v2565, 4294901760
        %2587 = vmatpush.msra.mxu0 %v2586
        %v2588 = vand.u32 %v1965, 4294901760
        %v2589 = vsub.f32 %v1965, %v2588
        %v2590 = vand.u32 %v2589, 4294901760
        %v2591 = vsub.f32 %v2589, %v2590
        %v2592 = vand.u32 %v2591, 4294901760
        %2593 = vmatmul.f32.gmra.mxu0 %v2592
        %v2594 = vpop.f32.mrf.mxu0
        %v2595 = vadd.f32 0.0, %v2594
        %v2596 = vand.u32 %v1968, 4294901760
        %v2597 = vsub.f32 %v1968, %v2596
        %v2598 = vand.u32 %v2597, 4294901760
        %v2599 = vsub.f32 %v2597, %v2598
        %v2600 = vand.u32 %v2599, 4294901760
        %2601 = vmatmul.f32.gmra.mxu0 %v2600
        %v2602 = vpop.f32.mrf.mxu0
        %v2603 = vadd.f32 0.0, %v2602
        %2604 = vdwg.mxu0
        %2605 = vmatpush.msra.mxu0 0.0
        %2606 = vmatpush.msra.mxu0 0.0
        %2607 = vmatpush.msra.mxu0 0.0
        %2608 = vmatpush.msra.mxu0 0.0
        %2609 = vmatpush.msra.mxu0 0.0
        %2610 = vmatpush.msra.mxu0 0.0
        %2611 = vmatpush.msra.mxu0 0.0
        %2612 = vmatpush.msra.mxu0 0.0
        %2613 = vmatpush.msra.mxu0 0.0
        %2614 = vmatpush.msra.mxu0 0.0
        %2615 = vmatpush.msra.mxu0 0.0
        %2616 = vmatpush.msra.mxu0 0.0
        %2617 = vmatpush.msra.mxu0 0.0
        %2618 = vmatpush.msra.mxu0 0.0
        %v2619 = vand.u32 %v2566, 4294901760
        %v2620 = vsub.f32 %v2566, %v2619
        %v2621 = vand.u32 %v2620, 4294901760
        %v2622 = vsub.f32 %v2620, %v2621
        %v2623 = vand.u32 %v2622, 4294901760
        %2624 = vmatpush.msra.mxu0 %v2623
        %v2625 = vand.u32 %v2565, 4294901760
        %v2626 = vsub.f32 %v2565, %v2625
        %v2627 = vand.u32 %v2626, 4294901760
        %v2628 = vsub.f32 %v2626, %v2627
        %v2629 = vand.u32 %v2628, 4294901760
        %2630 = vmatpush.msra.mxu0 %v2629
        %v2631 = vand.u32 %v1965, 4294901760
        %2632 = vmatmul.f32.gmra.mxu0 %v2631
        %v2633 = vpop.f32.mrf.mxu0
        %v2634 = vadd.f32 %v2595, %v2633
        %v2635 = vand.u32 %v1968, 4294901760
        %2636 = vmatmul.f32.gmra.mxu0 %v2635
        %v2637 = vpop.f32.mrf.mxu0
        %v2638 = vadd.f32 %v2603, %v2637
        %2639 = vdwg.mxu0
        %2640 = vmatpush.msra.mxu0 0.0
        %2641 = vmatpush.msra.mxu0 0.0
        %2642 = vmatpush.msra.mxu0 0.0
        %2643 = vmatpush.msra.mxu0 0.0
        %2644 = vmatpush.msra.mxu0 0.0
        %2645 = vmatpush.msra.mxu0 0.0
        %2646 = vmatpush.msra.mxu0 0.0
        %2647 = vmatpush.msra.mxu0 0.0
        %2648 = vmatpush.msra.mxu0 0.0
        %2649 = vmatpush.msra.mxu0 0.0
        %2650 = vmatpush.msra.mxu0 0.0
        %2651 = vmatpush.msra.mxu0 0.0
        %2652 = vmatpush.msra.mxu0 0.0
        %2653 = vmatpush.msra.mxu0 0.0
        %v2654 = vand.u32 %v2566, 4294901760
        %v2655 = vsub.f32 %v2566, %v2654
        %2656 = vmatpush.msra.mxu0 %v2655
        %v2657 = vand.u32 %v2565, 4294901760
        %v2658 = vsub.f32 %v2565, %v2657
        %2659 = vmatpush.msra.mxu0 %v2658
        %v2660 = vand.u32 %v1965, 4294901760
        %v2661 = vsub.f32 %v1965, %v2660
        %2662 = vmatmul.f32.gmra.mxu0 %v2661
        %v2663 = vpop.f32.mrf.mxu0
        %v2664 = vadd.f32 %v2634, %v2663
        %v2665 = vand.u32 %v1968, 4294901760
        %v2666 = vsub.f32 %v1968, %v2665
        %2667 = vmatmul.f32.gmra.mxu0 %v2666
        %v2668 = vpop.f32.mrf.mxu0
        %v2669 = vadd.f32 %v2638, %v2668
        %2670 = vdwg.mxu0
        %2671 = vmatpush.msra.mxu0 0.0
        %2672 = vmatpush.msra.mxu0 0.0
        %2673 = vmatpush.msra.mxu0 0.0
        %2674 = vmatpush.msra.mxu0 0.0
        %2675 = vmatpush.msra.mxu0 0.0
        %2676 = vmatpush.msra.mxu0 0.0
        %2677 = vmatpush.msra.mxu0 0.0
        %2678 = vmatpush.msra.mxu0 0.0
        %2679 = vmatpush.msra.mxu0 0.0
        %2680 = vmatpush.msra.mxu0 0.0
        %2681 = vmatpush.msra.mxu0 0.0
        %2682 = vmatpush.msra.mxu0 0.0
        %2683 = vmatpush.msra.mxu0 0.0
        %2684 = vmatpush.msra.mxu0 0.0
        %v2685 = vand.u32 %v2566, 4294901760
        %2686 = vmatpush.msra.mxu0 %v2685
        %v2687 = vand.u32 %v2565, 4294901760
        %2688 = vmatpush.msra.mxu0 %v2687
        %v2689 = vand.u32 %v1965, 4294901760
        %v2690 = vsub.f32 %v1965, %v2689
        %v2691 = vand.u32 %v2690, 4294901760
        %2692 = vmatmul.f32.gmra.mxu0 %v2691
        %v2693 = vpop.f32.mrf.mxu0
        %v2694 = vadd.f32 %v2664, %v2693
        %v2695 = vand.u32 %v1968, 4294901760
        %v2696 = vsub.f32 %v1968, %v2695
        %v2697 = vand.u32 %v2696, 4294901760
        %2698 = vmatmul.f32.gmra.mxu0 %v2697
        %v2699 = vpop.f32.mrf.mxu0
        %v2700 = vadd.f32 %v2669, %v2699
        %2701 = vdwg.mxu0
        %2702 = vmatpush.msra.mxu0 0.0
        %2703 = vmatpush.msra.mxu0 0.0
        %2704 = vmatpush.msra.mxu0 0.0
        %2705 = vmatpush.msra.mxu0 0.0
        %2706 = vmatpush.msra.mxu0 0.0
        %2707 = vmatpush.msra.mxu0 0.0
        %2708 = vmatpush.msra.mxu0 0.0
        %2709 = vmatpush.msra.mxu0 0.0
        %2710 = vmatpush.msra.mxu0 0.0
        %2711 = vmatpush.msra.mxu0 0.0
        %2712 = vmatpush.msra.mxu0 0.0
        %2713 = vmatpush.msra.mxu0 0.0
        %2714 = vmatpush.msra.mxu0 0.0
        %2715 = vmatpush.msra.mxu0 0.0
        %v2716 = vand.u32 %v2566, 4294901760
        %v2717 = vsub.f32 %v2566, %v2716
        %v2718 = vand.u32 %v2717, 4294901760
        %2719 = vmatpush.msra.mxu0 %v2718
        %v2720 = vand.u32 %v2565, 4294901760
        %v2721 = vsub.f32 %v2565, %v2720
        %v2722 = vand.u32 %v2721, 4294901760
        %2723 = vmatpush.msra.mxu0 %v2722
        %v2724 = vand.u32 %v1965, 4294901760
        %2725 = vmatmul.f32.gmra.mxu0 %v2724
        %v2726 = vpop.f32.mrf.mxu0
        %v2727 = vadd.f32 %v2694, %v2726
        %v2728 = vand.u32 %v1968, 4294901760
        %2729 = vmatmul.f32.gmra.mxu0 %v2728
        %v2730 = vpop.f32.mrf.mxu0
        %v2731 = vadd.f32 %v2700, %v2730
        %2732 = vdwg.mxu0
        %2733 = vmatpush.msra.mxu0 0.0
        %2734 = vmatpush.msra.mxu0 0.0
        %2735 = vmatpush.msra.mxu0 0.0
        %2736 = vmatpush.msra.mxu0 0.0
        %2737 = vmatpush.msra.mxu0 0.0
        %2738 = vmatpush.msra.mxu0 0.0
        %2739 = vmatpush.msra.mxu0 0.0
        %2740 = vmatpush.msra.mxu0 0.0
        %2741 = vmatpush.msra.mxu0 0.0
        %2742 = vmatpush.msra.mxu0 0.0
        %2743 = vmatpush.msra.mxu0 0.0
        %2744 = vmatpush.msra.mxu0 0.0
        %2745 = vmatpush.msra.mxu0 0.0
        %2746 = vmatpush.msra.mxu0 0.0
        %v2747 = vand.u32 %v2566, 4294901760
        %2748 = vmatpush.msra.mxu0 %v2747
        %v2749 = vand.u32 %v2565, 4294901760
        %2750 = vmatpush.msra.mxu0 %v2749
        %v2751 = vand.u32 %v1965, 4294901760
        %2752 = vmatmul.f32.gmra.mxu0 %v2751
        %v2753 = vpop.f32.mrf.mxu0
        %v2754 = vadd.f32 %v2727, %v2753
        %v2755 = vand.u32 %v1968, 4294901760
        %2756 = vmatmul.f32.gmra.mxu0 %v2755
        %v2757 = vpop.f32.mrf.mxu0
        %v2758 = vadd.f32 %v2731, %v2757
        %2759 = vdwg.mxu0
        %2760 = vmatpush.msra.mxu0 0.0
        %2761 = vmatpush.msra.mxu0 0.0
        %2762 = vmatpush.msra.mxu0 0.0
        %2763 = vmatpush.msra.mxu0 0.0
        %2764 = vmatpush.msra.mxu0 0.0
        %2765 = vmatpush.msra.mxu0 0.0
        %2766 = vmatpush.msra.mxu0 0.0
        %2767 = vmatpush.msra.mxu0 0.0
        %2768 = vmatpush.msra.mxu0 0.0
        %2769 = vmatpush.msra.mxu0 0.0
        %2770 = vmatpush.msra.mxu0 0.0
        %2771 = vmatpush.msra.mxu0 0.0
        %2772 = vmatpush.msra.mxu0 0.0
        %2773 = vmatpush.msra.mxu0 0.0
        %v2774 = vand.u32 %v2569, 4294901760
        %2775 = vmatpush.msra.mxu0 %v2774
        %v2776 = vand.u32 %v2568, 4294901760
        %2777 = vmatpush.msra.mxu0 %v2776
        %v2778 = vand.u32 %v2161, 4294901760
        %v2779 = vsub.f32 %v2161, %v2778
        %v2780 = vand.u32 %v2779, 4294901760
        %v2781 = vsub.f32 %v2779, %v2780
        %v2782 = vand.u32 %v2781, 4294901760
        %2783 = vmatmul.f32.gmra.mxu0 %v2782
        %v2784 = vpop.f32.mrf.mxu0
        %v2785 = vadd.f32 0.0, %v2784
        %v2786 = vand.u32 %v2164, 4294901760
        %v2787 = vsub.f32 %v2164, %v2786
        %v2788 = vand.u32 %v2787, 4294901760
        %v2789 = vsub.f32 %v2787, %v2788
        %v2790 = vand.u32 %v2789, 4294901760
        %2791 = vmatmul.f32.gmra.mxu0 %v2790
        %v2792 = vpop.f32.mrf.mxu0
        %v2793 = vadd.f32 0.0, %v2792
        %2794 = vdwg.mxu0
        %2795 = vmatpush.msra.mxu0 0.0
        %2796 = vmatpush.msra.mxu0 0.0
        %2797 = vmatpush.msra.mxu0 0.0
        %2798 = vmatpush.msra.mxu0 0.0
        %2799 = vmatpush.msra.mxu0 0.0
        %2800 = vmatpush.msra.mxu0 0.0
        %2801 = vmatpush.msra.mxu0 0.0
        %2802 = vmatpush.msra.mxu0 0.0
        %2803 = vmatpush.msra.mxu0 0.0
        %2804 = vmatpush.msra.mxu0 0.0
        %2805 = vmatpush.msra.mxu0 0.0
        %2806 = vmatpush.msra.mxu0 0.0
        %2807 = vmatpush.msra.mxu0 0.0
        %2808 = vmatpush.msra.mxu0 0.0
        %v2809 = vand.u32 %v2569, 4294901760
        %v2810 = vsub.f32 %v2569, %v2809
        %v2811 = vand.u32 %v2810, 4294901760
        %v2812 = vsub.f32 %v2810, %v2811
        %v2813 = vand.u32 %v2812, 4294901760
        %2814 = vmatpush.msra.mxu0 %v2813
        %v2815 = vand.u32 %v2568, 4294901760
        %v2816 = vsub.f32 %v2568, %v2815
        %v2817 = vand.u32 %v2816, 4294901760
        %v2818 = vsub.f32 %v2816, %v2817
        %v2819 = vand.u32 %v2818, 4294901760
        %2820 = vmatpush.msra.mxu0 %v2819
        %v2821 = vand.u32 %v2161, 4294901760
        %2822 = vmatmul.f32.gmra.mxu0 %v2821
        %v2823 = vpop.f32.mrf.mxu0
        %v2824 = vadd.f32 %v2785, %v2823
        %v2825 = vand.u32 %v2164, 4294901760
        %2826 = vmatmul.f32.gmra.mxu0 %v2825
        %v2827 = vpop.f32.mrf.mxu0
        %v2828 = vadd.f32 %v2793, %v2827
        %2829 = vdwg.mxu0
        %2830 = vmatpush.msra.mxu0 0.0
        %2831 = vmatpush.msra.mxu0 0.0
        %2832 = vmatpush.msra.mxu0 0.0
        %2833 = vmatpush.msra.mxu0 0.0
        %2834 = vmatpush.msra.mxu0 0.0
        %2835 = vmatpush.msra.mxu0 0.0
        %2836 = vmatpush.msra.mxu0 0.0
        %2837 = vmatpush.msra.mxu0 0.0
        %2838 = vmatpush.msra.mxu0 0.0
        %2839 = vmatpush.msra.mxu0 0.0
        %2840 = vmatpush.msra.mxu0 0.0
        %2841 = vmatpush.msra.mxu0 0.0
        %2842 = vmatpush.msra.mxu0 0.0
        %2843 = vmatpush.msra.mxu0 0.0
        %v2844 = vand.u32 %v2569, 4294901760
        %v2845 = vsub.f32 %v2569, %v2844
        %2846 = vmatpush.msra.mxu0 %v2845
        %v2847 = vand.u32 %v2568, 4294901760
        %v2848 = vsub.f32 %v2568, %v2847
        %2849 = vmatpush.msra.mxu0 %v2848
        %v2850 = vand.u32 %v2161, 4294901760
        %v2851 = vsub.f32 %v2161, %v2850
        %2852 = vmatmul.f32.gmra.mxu0 %v2851
        %v2853 = vpop.f32.mrf.mxu0
        %v2854 = vadd.f32 %v2824, %v2853
        %v2855 = vand.u32 %v2164, 4294901760
        %v2856 = vsub.f32 %v2164, %v2855
        %2857 = vmatmul.f32.gmra.mxu0 %v2856
        %v2858 = vpop.f32.mrf.mxu0
        %v2859 = vadd.f32 %v2828, %v2858
        %2860 = vdwg.mxu0
        %2861 = vmatpush.msra.mxu0 0.0
        %2862 = vmatpush.msra.mxu0 0.0
        %2863 = vmatpush.msra.mxu0 0.0
        %2864 = vmatpush.msra.mxu0 0.0
        %2865 = vmatpush.msra.mxu0 0.0
        %2866 = vmatpush.msra.mxu0 0.0
        %2867 = vmatpush.msra.mxu0 0.0
        %2868 = vmatpush.msra.mxu0 0.0
        %2869 = vmatpush.msra.mxu0 0.0
        %2870 = vmatpush.msra.mxu0 0.0
        %2871 = vmatpush.msra.mxu0 0.0
        %2872 = vmatpush.msra.mxu0 0.0
        %2873 = vmatpush.msra.mxu0 0.0
        %2874 = vmatpush.msra.mxu0 0.0
        %v2875 = vand.u32 %v2569, 4294901760
        %2876 = vmatpush.msra.mxu0 %v2875
        %v2877 = vand.u32 %v2568, 4294901760
        %2878 = vmatpush.msra.mxu0 %v2877
        %v2879 = vand.u32 %v2161, 4294901760
        %v2880 = vsub.f32 %v2161, %v2879
        %v2881 = vand.u32 %v2880, 4294901760
        %2882 = vmatmul.f32.gmra.mxu0 %v2881
        %v2883 = vpop.f32.mrf.mxu0
        %v2884 = vadd.f32 %v2854, %v2883
        %v2885 = vand.u32 %v2164, 4294901760
        %v2886 = vsub.f32 %v2164, %v2885
        %v2887 = vand.u32 %v2886, 4294901760
        %2888 = vmatmul.f32.gmra.mxu0 %v2887
        %v2889 = vpop.f32.mrf.mxu0
        %v2890 = vadd.f32 %v2859, %v2889
        %2891 = vdwg.mxu0
        %2892 = vmatpush.msra.mxu0 0.0
        %2893 = vmatpush.msra.mxu0 0.0
        %2894 = vmatpush.msra.mxu0 0.0
        %2895 = vmatpush.msra.mxu0 0.0
        %2896 = vmatpush.msra.mxu0 0.0
        %2897 = vmatpush.msra.mxu0 0.0
        %2898 = vmatpush.msra.mxu0 0.0
        %2899 = vmatpush.msra.mxu0 0.0
        %2900 = vmatpush.msra.mxu0 0.0
        %2901 = vmatpush.msra.mxu0 0.0
        %2902 = vmatpush.msra.mxu0 0.0
        %2903 = vmatpush.msra.mxu0 0.0
        %2904 = vmatpush.msra.mxu0 0.0
        %2905 = vmatpush.msra.mxu0 0.0
        %v2906 = vand.u32 %v2569, 4294901760
        %v2907 = vsub.f32 %v2569, %v2906
        %v2908 = vand.u32 %v2907, 4294901760
        %2909 = vmatpush.msra.mxu0 %v2908
        %v2910 = vand.u32 %v2568, 4294901760
        %v2911 = vsub.f32 %v2568, %v2910
        %v2912 = vand.u32 %v2911, 4294901760
        %2913 = vmatpush.msra.mxu0 %v2912
        %v2914 = vand.u32 %v2161, 4294901760
        %2915 = vmatmul.f32.gmra.mxu0 %v2914
        %v2916 = vpop.f32.mrf.mxu0
        %v2917 = vadd.f32 %v2884, %v2916
        %v2918 = vand.u32 %v2164, 4294901760
        %2919 = vmatmul.f32.gmra.mxu0 %v2918
        %v2920 = vpop.f32.mrf.mxu0
        %v2921 = vadd.f32 %v2890, %v2920
        %2922 = vdwg.mxu0
        %2923 = vmatpush.msra.mxu0 0.0
        %2924 = vmatpush.msra.mxu0 0.0
        %2925 = vmatpush.msra.mxu0 0.0
        %2926 = vmatpush.msra.mxu0 0.0
        %2927 = vmatpush.msra.mxu0 0.0
        %2928 = vmatpush.msra.mxu0 0.0
        %2929 = vmatpush.msra.mxu0 0.0
        %2930 = vmatpush.msra.mxu0 0.0
        %2931 = vmatpush.msra.mxu0 0.0
        %2932 = vmatpush.msra.mxu0 0.0
        %2933 = vmatpush.msra.mxu0 0.0
        %2934 = vmatpush.msra.mxu0 0.0
        %2935 = vmatpush.msra.mxu0 0.0
        %2936 = vmatpush.msra.mxu0 0.0
        %v2937 = vand.u32 %v2569, 4294901760
        %2938 = vmatpush.msra.mxu0 %v2937
        %v2939 = vand.u32 %v2568, 4294901760
        %2940 = vmatpush.msra.mxu0 %v2939
        %v2941 = vand.u32 %v2161, 4294901760
        %2942 = vmatmul.f32.gmra.mxu0 %v2941
        %v2943 = vpop.f32.mrf.mxu0
        %v2944 = vadd.f32 %v2917, %v2943
        %v2945 = vand.u32 %v2164, 4294901760
        %2946 = vmatmul.f32.gmra.mxu0 %v2945
        %v2947 = vpop.f32.mrf.mxu0
        %v2948 = vadd.f32 %v2921, %v2947
        %2949 = vdwg.mxu0
        %v2950 = vadd.f32 %v2565, %v2568
        %v2951 = vadd.f32 %v2566, %v2569
        %2952 = vmatpush.msra.mxu0 0.0
        %2953 = vmatpush.msra.mxu0 0.0
        %2954 = vmatpush.msra.mxu0 0.0
        %2955 = vmatpush.msra.mxu0 0.0
        %2956 = vmatpush.msra.mxu0 0.0
        %2957 = vmatpush.msra.mxu0 0.0
        %2958 = vmatpush.msra.mxu0 0.0
        %2959 = vmatpush.msra.mxu0 0.0
        %2960 = vmatpush.msra.mxu0 0.0
        %2961 = vmatpush.msra.mxu0 0.0
        %2962 = vmatpush.msra.mxu0 0.0
        %2963 = vmatpush.msra.mxu0 0.0
        %2964 = vmatpush.msra.mxu0 0.0
        %2965 = vmatpush.msra.mxu0 0.0
        %v2966 = vand.u32 %v2951, 4294901760
        %2967 = vmatpush.msra.mxu0 %v2966
        %v2968 = vand.u32 %v2950, 4294901760
        %2969 = vmatpush.msra.mxu0 %v2968
        %v2970 = vand.u32 %v2359, 4294901760
        %v2971 = vsub.f32 %v2359, %v2970
        %v2972 = vand.u32 %v2971, 4294901760
        %v2973 = vsub.f32 %v2971, %v2972
        %v2974 = vand.u32 %v2973, 4294901760
        %2975 = vmatmul.f32.gmra.mxu0 %v2974
        %v2976 = vpop.f32.mrf.mxu0
        %v2977 = vadd.f32 0.0, %v2976
        %v2978 = vand.u32 %v2362, 4294901760
        %v2979 = vsub.f32 %v2362, %v2978
        %v2980 = vand.u32 %v2979, 4294901760
        %v2981 = vsub.f32 %v2979, %v2980
        %v2982 = vand.u32 %v2981, 4294901760
        %2983 = vmatmul.f32.gmra.mxu0 %v2982
        %v2984 = vpop.f32.mrf.mxu0
        %v2985 = vadd.f32 0.0, %v2984
        %2986 = vdwg.mxu0
        %2987 = vmatpush.msra.mxu0 0.0
        %2988 = vmatpush.msra.mxu0 0.0
        %2989 = vmatpush.msra.mxu0 0.0
        %2990 = vmatpush.msra.mxu0 0.0
        %2991 = vmatpush.msra.mxu0 0.0
        %2992 = vmatpush.msra.mxu0 0.0
        %2993 = vmatpush.msra.mxu0 0.0
        %2994 = vmatpush.msra.mxu0 0.0
        %2995 = vmatpush.msra.mxu0 0.0
        %2996 = vmatpush.msra.mxu0 0.0
        %2997 = vmatpush.msra.mxu0 0.0
        %2998 = vmatpush.msra.mxu0 0.0
        %2999 = vmatpush.msra.mxu0 0.0
        %3000 = vmatpush.msra.mxu0 0.0
        %v3001 = vand.u32 %v2951, 4294901760
        %v3002 = vsub.f32 %v2951, %v3001
        %v3003 = vand.u32 %v3002, 4294901760
        %v3004 = vsub.f32 %v3002, %v3003
        %v3005 = vand.u32 %v3004, 4294901760
        %3006 = vmatpush.msra.mxu0 %v3005
        %v3007 = vand.u32 %v2950, 4294901760
        %v3008 = vsub.f32 %v2950, %v3007
        %v3009 = vand.u32 %v3008, 4294901760
        %v3010 = vsub.f32 %v3008, %v3009
        %v3011 = vand.u32 %v3010, 4294901760
        %3012 = vmatpush.msra.mxu0 %v3011
        %v3013 = vand.u32 %v2359, 4294901760
        %3014 = vmatmul.f32.gmra.mxu0 %v3013
        %v3015 = vpop.f32.mrf.mxu0
        %v3016 = vadd.f32 %v2977, %v3015
        %v3017 = vand.u32 %v2362, 4294901760
        %3018 = vmatmul.f32.gmra.mxu0 %v3017
        %v3019 = vpop.f32.mrf.mxu0
        %v3020 = vadd.f32 %v2985, %v3019
        %3021 = vdwg.mxu0
        %3022 = vmatpush.msra.mxu0 0.0
        %3023 = vmatpush.msra.mxu0 0.0
        %3024 = vmatpush.msra.mxu0 0.0
        %3025 = vmatpush.msra.mxu0 0.0
        %3026 = vmatpush.msra.mxu0 0.0
        %3027 = vmatpush.msra.mxu0 0.0
        %3028 = vmatpush.msra.mxu0 0.0
        %3029 = vmatpush.msra.mxu0 0.0
        %3030 = vmatpush.msra.mxu0 0.0
        %3031 = vmatpush.msra.mxu0 0.0
        %3032 = vmatpush.msra.mxu0 0.0
        %3033 = vmatpush.msra.mxu0 0.0
        %3034 = vmatpush.msra.mxu0 0.0
        %3035 = vmatpush.msra.mxu0 0.0
        %v3036 = vand.u32 %v2951, 4294901760
        %v3037 = vsub.f32 %v2951, %v3036
        %3038 = vmatpush.msra.mxu0 %v3037
        %v3039 = vand.u32 %v2950, 4294901760
        %v3040 = vsub.f32 %v2950, %v3039
        %3041 = vmatpush.msra.mxu0 %v3040
        %v3042 = vand.u32 %v2359, 4294901760
        %v3043 = vsub.f32 %v2359, %v3042
        %3044 = vmatmul.f32.gmra.mxu0 %v3043
        %v3045 = vpop.f32.mrf.mxu0
        %v3046 = vadd.f32 %v3016, %v3045
        %v3047 = vand.u32 %v2362, 4294901760
        %v3048 = vsub.f32 %v2362, %v3047
        %3049 = vmatmul.f32.gmra.mxu0 %v3048
        %v3050 = vpop.f32.mrf.mxu0
        %v3051 = vadd.f32 %v3020, %v3050
        %3052 = vdwg.mxu0
        %3053 = vmatpush.msra.mxu0 0.0
        %3054 = vmatpush.msra.mxu0 0.0
        %3055 = vmatpush.msra.mxu0 0.0
        %3056 = vmatpush.msra.mxu0 0.0
        %3057 = vmatpush.msra.mxu0 0.0
        %3058 = vmatpush.msra.mxu0 0.0
        %3059 = vmatpush.msra.mxu0 0.0
        %3060 = vmatpush.msra.mxu0 0.0
        %3061 = vmatpush.msra.mxu0 0.0
        %3062 = vmatpush.msra.mxu0 0.0
        %3063 = vmatpush.msra.mxu0 0.0
        %3064 = vmatpush.msra.mxu0 0.0
        %3065 = vmatpush.msra.mxu0 0.0
        %3066 = vmatpush.msra.mxu0 0.0
        %v3067 = vand.u32 %v2951, 4294901760
        %3068 = vmatpush.msra.mxu0 %v3067
        %v3069 = vand.u32 %v2950, 4294901760
        %3070 = vmatpush.msra.mxu0 %v3069
        %v3071 = vand.u32 %v2359, 4294901760
        %v3072 = vsub.f32 %v2359, %v3071
        %v3073 = vand.u32 %v3072, 4294901760
        %3074 = vmatmul.f32.gmra.mxu0 %v3073
        %v3075 = vpop.f32.mrf.mxu0
        %v3076 = vadd.f32 %v3046, %v3075
        %v3077 = vand.u32 %v2362, 4294901760
        %v3078 = vsub.f32 %v2362, %v3077
        %v3079 = vand.u32 %v3078, 4294901760
        %3080 = vmatmul.f32.gmra.mxu0 %v3079
        %v3081 = vpop.f32.mrf.mxu0
        %v3082 = vadd.f32 %v3051, %v3081
        %3083 = vdwg.mxu0
        %3084 = vmatpush.msra.mxu0 0.0
        %3085 = vmatpush.msra.mxu0 0.0
        %3086 = vmatpush.msra.mxu0 0.0
        %3087 = vmatpush.msra.mxu0 0.0
        %3088 = vmatpush.msra.mxu0 0.0
        %3089 = vmatpush.msra.mxu0 0.0
        %3090 = vmatpush.msra.mxu0 0.0
        %3091 = vmatpush.msra.mxu0 0.0
        %3092 = vmatpush.msra.mxu0 0.0
        %3093 = vmatpush.msra.mxu0 0.0
        %3094 = vmatpush.msra.mxu0 0.0
        %3095 = vmatpush.msra.mxu0 0.0
        %3096 = vmatpush.msra.mxu0 0.0
        %3097 = vmatpush.msra.mxu0 0.0
        %v3098 = vand.u32 %v2951, 4294901760
        %v3099 = vsub.f32 %v2951, %v3098
        %v3100 = vand.u32 %v3099, 4294901760
        %3101 = vmatpush.msra.mxu0 %v3100
        %v3102 = vand.u32 %v2950, 4294901760
        %v3103 = vsub.f32 %v2950, %v3102
        %v3104 = vand.u32 %v3103, 4294901760
        %3105 = vmatpush.msra.mxu0 %v3104
        %v3106 = vand.u32 %v2359, 4294901760
        %3107 = vmatmul.f32.gmra.mxu0 %v3106
        %v3108 = vpop.f32.mrf.mxu0
        %v3109 = vadd.f32 %v3076, %v3108
        %v3110 = vand.u32 %v2362, 4294901760
        %3111 = vmatmul.f32.gmra.mxu0 %v3110
        %v3112 = vpop.f32.mrf.mxu0
        %v3113 = vadd.f32 %v3082, %v3112
        %3114 = vdwg.mxu0
        %3115 = vmatpush.msra.mxu0 0.0
        %3116 = vmatpush.msra.mxu0 0.0
        %3117 = vmatpush.msra.mxu0 0.0
        %3118 = vmatpush.msra.mxu0 0.0
        %3119 = vmatpush.msra.mxu0 0.0
        %3120 = vmatpush.msra.mxu0 0.0
        %3121 = vmatpush.msra.mxu0 0.0
        %3122 = vmatpush.msra.mxu0 0.0
        %3123 = vmatpush.msra.mxu0 0.0
        %3124 = vmatpush.msra.mxu0 0.0
        %3125 = vmatpush.msra.mxu0 0.0
        %3126 = vmatpush.msra.mxu0 0.0
        %3127 = vmatpush.msra.mxu0 0.0
        %3128 = vmatpush.msra.mxu0 0.0
        %v3129 = vand.u32 %v2951, 4294901760
        %3130 = vmatpush.msra.mxu0 %v3129
        %v3131 = vand.u32 %v2950, 4294901760
        %3132 = vmatpush.msra.mxu0 %v3131
        %v3133 = vand.u32 %v2359, 4294901760
        %3134 = vmatmul.f32.gmra.mxu0 %v3133
        %v3135 = vpop.f32.mrf.mxu0
        %v3136 = vadd.f32 %v3109, %v3135
        %v3137 = vand.u32 %v2362, 4294901760
        %3138 = vmatmul.f32.gmra.mxu0 %v3137
        %v3139 = vpop.f32.mrf.mxu0
        %v3140 = vadd.f32 %v3113, %v3139
        %3141 = vdwg.mxu0
        %v3142 = vsub.f32 %v2754, %v2944
        %v3143 = vsub.f32 %v2758, %v2948
        %s3144 = scalar_lea.vmem %s619, 16 [#allocation18]
        %3145 = vst.msk [vmem:[%s3144] sm:$0xff] %vm705, %v3142
        %3146 = vst.msk [vmem:[%s3144 + $0x8] sm:$0xff] %vm705, %v3143
        %v3147 = vsub.f32 %v3136, %v2754
        %v3148 = vsub.f32 %v3140, %v2758
        %v3149 = vsub.f32 %v3147, %v2944
        %v3150 = vsub.f32 %v3148, %v2948
        %s3151 = scalar_lea.vmem %s626, 16 [#allocation19]
        %3152 = vst.msk [vmem:[%s3151] sm:$0xff] %vm705, %v3149
        %3153 = vst.msk [vmem:[%s3151 + $0x8] sm:$0xff] %vm705, %v3150
        %s3154 = scalar_lea.vmem [#allocation2], 32
        %v3155 = vld [vmem:[%s3154] sm:$0xff]
        %v3156 = vld [vmem:[%s3154 + $0x8] sm:$0xff]
        %s3157 = scalar_lea.vmem [#allocation3], 32
        %v3158 = vld [vmem:[%s3157] sm:$0xff]
        %v3159 = vld [vmem:[%s3157 + $0x8] sm:$0xff]
        %3160 = vmatpush.msra.mxu0 0.0
        %3161 = vmatpush.msra.mxu0 0.0
        %3162 = vmatpush.msra.mxu0 0.0
        %3163 = vmatpush.msra.mxu0 0.0
        %3164 = vmatpush.msra.mxu0 0.0
        %3165 = vmatpush.msra.mxu0 0.0
        %3166 = vmatpush.msra.mxu0 0.0
        %3167 = vmatpush.msra.mxu0 0.0
        %3168 = vmatpush.msra.mxu0 0.0
        %3169 = vmatpush.msra.mxu0 0.0
        %3170 = vmatpush.msra.mxu0 0.0
        %3171 = vmatpush.msra.mxu0 0.0
        %3172 = vmatpush.msra.mxu0 0.0
        %3173 = vmatpush.msra.mxu0 0.0
        %v3174 = vand.u32 %v3156, 4294901760
        %3175 = vmatpush.msra.mxu0 %v3174
        %v3176 = vand.u32 %v3155, 4294901760
        %3177 = vmatpush.msra.mxu0 %v3176
        %v3178 = vand.u32 %v1965, 4294901760
        %v3179 = vsub.f32 %v1965, %v3178
        %v3180 = vand.u32 %v3179, 4294901760
        %v3181 = vsub.f32 %v3179, %v3180
        %v3182 = vand.u32 %v3181, 4294901760
        %3183 = vmatmul.f32.gmra.mxu0 %v3182
        %v3184 = vpop.f32.mrf.mxu0
        %v3185 = vadd.f32 0.0, %v3184
        %v3186 = vand.u32 %v1968, 4294901760
        %v3187 = vsub.f32 %v1968, %v3186
        %v3188 = vand.u32 %v3187, 4294901760
        %v3189 = vsub.f32 %v3187, %v3188
        %v3190 = vand.u32 %v3189, 4294901760
        %3191 = vmatmul.f32.gmra.mxu0 %v3190
        %v3192 = vpop.f32.mrf.mxu0
        %v3193 = vadd.f32 0.0, %v3192
        %3194 = vdwg.mxu0
        %3195 = vmatpush.msra.mxu0 0.0
        %3196 = vmatpush.msra.mxu0 0.0
        %3197 = vmatpush.msra.mxu0 0.0
        %3198 = vmatpush.msra.mxu0 0.0
        %3199 = vmatpush.msra.mxu0 0.0
        %3200 = vmatpush.msra.mxu0 0.0
        %3201 = vmatpush.msra.mxu0 0.0
        %3202 = vmatpush.msra.mxu0 0.0
        %3203 = vmatpush.msra.mxu0 0.0
        %3204 = vmatpush.msra.mxu0 0.0
        %3205 = vmatpush.msra.mxu0 0.0
        %3206 = vmatpush.msra.mxu0 0.0
        %3207 = vmatpush.msra.mxu0 0.0
        %3208 = vmatpush.msra.mxu0 0.0
        %v3209 = vand.u32 %v3156, 4294901760
        %v3210 = vsub.f32 %v3156, %v3209
        %v3211 = vand.u32 %v3210, 4294901760
        %v3212 = vsub.f32 %v3210, %v3211
        %v3213 = vand.u32 %v3212, 4294901760
        %3214 = vmatpush.msra.mxu0 %v3213
        %v3215 = vand.u32 %v3155, 4294901760
        %v3216 = vsub.f32 %v3155, %v3215
        %v3217 = vand.u32 %v3216, 4294901760
        %v3218 = vsub.f32 %v3216, %v3217
        %v3219 = vand.u32 %v3218, 4294901760
        %3220 = vmatpush.msra.mxu0 %v3219
        %v3221 = vand.u32 %v1965, 4294901760
        %3222 = vmatmul.f32.gmra.mxu0 %v3221
        %v3223 = vpop.f32.mrf.mxu0
        %v3224 = vadd.f32 %v3185, %v3223
        %v3225 = vand.u32 %v1968, 4294901760
        %3226 = vmatmul.f32.gmra.mxu0 %v3225
        %v3227 = vpop.f32.mrf.mxu0
        %v3228 = vadd.f32 %v3193, %v3227
        %3229 = vdwg.mxu0
        %3230 = vmatpush.msra.mxu0 0.0
        %3231 = vmatpush.msra.mxu0 0.0
        %3232 = vmatpush.msra.mxu0 0.0
        %3233 = vmatpush.msra.mxu0 0.0
        %3234 = vmatpush.msra.mxu0 0.0
        %3235 = vmatpush.msra.mxu0 0.0
        %3236 = vmatpush.msra.mxu0 0.0
        %3237 = vmatpush.msra.mxu0 0.0
        %3238 = vmatpush.msra.mxu0 0.0
        %3239 = vmatpush.msra.mxu0 0.0
        %3240 = vmatpush.msra.mxu0 0.0
        %3241 = vmatpush.msra.mxu0 0.0
        %3242 = vmatpush.msra.mxu0 0.0
        %3243 = vmatpush.msra.mxu0 0.0
        %v3244 = vand.u32 %v3156, 4294901760
        %v3245 = vsub.f32 %v3156, %v3244
        %3246 = vmatpush.msra.mxu0 %v3245
        %v3247 = vand.u32 %v3155, 4294901760
        %v3248 = vsub.f32 %v3155, %v3247
        %3249 = vmatpush.msra.mxu0 %v3248
        %v3250 = vand.u32 %v1965, 4294901760
        %v3251 = vsub.f32 %v1965, %v3250
        %3252 = vmatmul.f32.gmra.mxu0 %v3251
        %v3253 = vpop.f32.mrf.mxu0
        %v3254 = vadd.f32 %v3224, %v3253
        %v3255 = vand.u32 %v1968, 4294901760
        %v3256 = vsub.f32 %v1968, %v3255
        %3257 = vmatmul.f32.gmra.mxu0 %v3256
        %v3258 = vpop.f32.mrf.mxu0
        %v3259 = vadd.f32 %v3228, %v3258
        %3260 = vdwg.mxu0
        %3261 = vmatpush.msra.mxu0 0.0
        %3262 = vmatpush.msra.mxu0 0.0
        %3263 = vmatpush.msra.mxu0 0.0
        %3264 = vmatpush.msra.mxu0 0.0
        %3265 = vmatpush.msra.mxu0 0.0
        %3266 = vmatpush.msra.mxu0 0.0
        %3267 = vmatpush.msra.mxu0 0.0
        %3268 = vmatpush.msra.mxu0 0.0
        %3269 = vmatpush.msra.mxu0 0.0
        %3270 = vmatpush.msra.mxu0 0.0
        %3271 = vmatpush.msra.mxu0 0.0
        %3272 = vmatpush.msra.mxu0 0.0
        %3273 = vmatpush.msra.mxu0 0.0
        %3274 = vmatpush.msra.mxu0 0.0
        %v3275 = vand.u32 %v3156, 4294901760
        %3276 = vmatpush.msra.mxu0 %v3275
        %v3277 = vand.u32 %v3155, 4294901760
        %3278 = vmatpush.msra.mxu0 %v3277
        %v3279 = vand.u32 %v1965, 4294901760
        %v3280 = vsub.f32 %v1965, %v3279
        %v3281 = vand.u32 %v3280, 4294901760
        %3282 = vmatmul.f32.gmra.mxu0 %v3281
        %v3283 = vpop.f32.mrf.mxu0
        %v3284 = vadd.f32 %v3254, %v3283
        %v3285 = vand.u32 %v1968, 4294901760
        %v3286 = vsub.f32 %v1968, %v3285
        %v3287 = vand.u32 %v3286, 4294901760
        %3288 = vmatmul.f32.gmra.mxu0 %v3287
        %v3289 = vpop.f32.mrf.mxu0
        %v3290 = vadd.f32 %v3259, %v3289
        %3291 = vdwg.mxu0
        %3292 = vmatpush.msra.mxu0 0.0
        %3293 = vmatpush.msra.mxu0 0.0
        %3294 = vmatpush.msra.mxu0 0.0
        %3295 = vmatpush.msra.mxu0 0.0
        %3296 = vmatpush.msra.mxu0 0.0
        %3297 = vmatpush.msra.mxu0 0.0
        %3298 = vmatpush.msra.mxu0 0.0
        %3299 = vmatpush.msra.mxu0 0.0
        %3300 = vmatpush.msra.mxu0 0.0
        %3301 = vmatpush.msra.mxu0 0.0
        %3302 = vmatpush.msra.mxu0 0.0
        %3303 = vmatpush.msra.mxu0 0.0
        %3304 = vmatpush.msra.mxu0 0.0
        %3305 = vmatpush.msra.mxu0 0.0
        %v3306 = vand.u32 %v3156, 4294901760
        %v3307 = vsub.f32 %v3156, %v3306
        %v3308 = vand.u32 %v3307, 4294901760
        %3309 = vmatpush.msra.mxu0 %v3308
        %v3310 = vand.u32 %v3155, 4294901760
        %v3311 = vsub.f32 %v3155, %v3310
        %v3312 = vand.u32 %v3311, 4294901760
        %3313 = vmatpush.msra.mxu0 %v3312
        %v3314 = vand.u32 %v1965, 4294901760
        %3315 = vmatmul.f32.gmra.mxu0 %v3314
        %v3316 = vpop.f32.mrf.mxu0
        %v3317 = vadd.f32 %v3284, %v3316
        %v3318 = vand.u32 %v1968, 4294901760
        %3319 = vmatmul.f32.gmra.mxu0 %v3318
        %v3320 = vpop.f32.mrf.mxu0
        %v3321 = vadd.f32 %v3290, %v3320
        %3322 = vdwg.mxu0
        %3323 = vmatpush.msra.mxu0 0.0
        %3324 = vmatpush.msra.mxu0 0.0
        %3325 = vmatpush.msra.mxu0 0.0
        %3326 = vmatpush.msra.mxu0 0.0
        %3327 = vmatpush.msra.mxu0 0.0
        %3328 = vmatpush.msra.mxu0 0.0
        %3329 = vmatpush.msra.mxu0 0.0
        %3330 = vmatpush.msra.mxu0 0.0
        %3331 = vmatpush.msra.mxu0 0.0
        %3332 = vmatpush.msra.mxu0 0.0
        %3333 = vmatpush.msra.mxu0 0.0
        %3334 = vmatpush.msra.mxu0 0.0
        %3335 = vmatpush.msra.mxu0 0.0
        %3336 = vmatpush.msra.mxu0 0.0
        %v3337 = vand.u32 %v3156, 4294901760
        %3338 = vmatpush.msra.mxu0 %v3337
        %v3339 = vand.u32 %v3155, 4294901760
        %3340 = vmatpush.msra.mxu0 %v3339
        %v3341 = vand.u32 %v1965, 4294901760
        %3342 = vmatmul.f32.gmra.mxu0 %v3341
        %v3343 = vpop.f32.mrf.mxu0
        %v3344 = vadd.f32 %v3317, %v3343
        %v3345 = vand.u32 %v1968, 4294901760
        %3346 = vmatmul.f32.gmra.mxu0 %v3345
        %v3347 = vpop.f32.mrf.mxu0
        %v3348 = vadd.f32 %v3321, %v3347
        %3349 = vdwg.mxu0
        %3350 = vmatpush.msra.mxu0 0.0
        %3351 = vmatpush.msra.mxu0 0.0
        %3352 = vmatpush.msra.mxu0 0.0
        %3353 = vmatpush.msra.mxu0 0.0
        %3354 = vmatpush.msra.mxu0 0.0
        %3355 = vmatpush.msra.mxu0 0.0
        %3356 = vmatpush.msra.mxu0 0.0
        %3357 = vmatpush.msra.mxu0 0.0
        %3358 = vmatpush.msra.mxu0 0.0
        %3359 = vmatpush.msra.mxu0 0.0
        %3360 = vmatpush.msra.mxu0 0.0
        %3361 = vmatpush.msra.mxu0 0.0
        %3362 = vmatpush.msra.mxu0 0.0
        %3363 = vmatpush.msra.mxu0 0.0
        %v3364 = vand.u32 %v3159, 4294901760
        %3365 = vmatpush.msra.mxu0 %v3364
        %v3366 = vand.u32 %v3158, 4294901760
        %3367 = vmatpush.msra.mxu0 %v3366
        %v3368 = vand.u32 %v2161, 4294901760
        %v3369 = vsub.f32 %v2161, %v3368
        %v3370 = vand.u32 %v3369, 4294901760
        %v3371 = vsub.f32 %v3369, %v3370
        %v3372 = vand.u32 %v3371, 4294901760
        %3373 = vmatmul.f32.gmra.mxu0 %v3372
        %v3374 = vpop.f32.mrf.mxu0
        %v3375 = vadd.f32 0.0, %v3374
        %v3376 = vand.u32 %v2164, 4294901760
        %v3377 = vsub.f32 %v2164, %v3376
        %v3378 = vand.u32 %v3377, 4294901760
        %v3379 = vsub.f32 %v3377, %v3378
        %v3380 = vand.u32 %v3379, 4294901760
        %3381 = vmatmul.f32.gmra.mxu0 %v3380
        %v3382 = vpop.f32.mrf.mxu0
        %v3383 = vadd.f32 0.0, %v3382
        %3384 = vdwg.mxu0
        %3385 = vmatpush.msra.mxu0 0.0
        %3386 = vmatpush.msra.mxu0 0.0
        %3387 = vmatpush.msra.mxu0 0.0
        %3388 = vmatpush.msra.mxu0 0.0
        %3389 = vmatpush.msra.mxu0 0.0
        %3390 = vmatpush.msra.mxu0 0.0
        %3391 = vmatpush.msra.mxu0 0.0
        %3392 = vmatpush.msra.mxu0 0.0
        %3393 = vmatpush.msra.mxu0 0.0
        %3394 = vmatpush.msra.mxu0 0.0
        %3395 = vmatpush.msra.mxu0 0.0
        %3396 = vmatpush.msra.mxu0 0.0
        %3397 = vmatpush.msra.mxu0 0.0
        %3398 = vmatpush.msra.mxu0 0.0
        %v3399 = vand.u32 %v3159, 4294901760
        %v3400 = vsub.f32 %v3159, %v3399
        %v3401 = vand.u32 %v3400, 4294901760
        %v3402 = vsub.f32 %v3400, %v3401
        %v3403 = vand.u32 %v3402, 4294901760
        %3404 = vmatpush.msra.mxu0 %v3403
        %v3405 = vand.u32 %v3158, 4294901760
        %v3406 = vsub.f32 %v3158, %v3405
        %v3407 = vand.u32 %v3406, 4294901760
        %v3408 = vsub.f32 %v3406, %v3407
        %v3409 = vand.u32 %v3408, 4294901760
        %3410 = vmatpush.msra.mxu0 %v3409
        %v3411 = vand.u32 %v2161, 4294901760
        %3412 = vmatmul.f32.gmra.mxu0 %v3411
        %v3413 = vpop.f32.mrf.mxu0
        %v3414 = vadd.f32 %v3375, %v3413
        %v3415 = vand.u32 %v2164, 4294901760
        %3416 = vmatmul.f32.gmra.mxu0 %v3415
        %v3417 = vpop.f32.mrf.mxu0
        %v3418 = vadd.f32 %v3383, %v3417
        %3419 = vdwg.mxu0
        %3420 = vmatpush.msra.mxu0 0.0
        %3421 = vmatpush.msra.mxu0 0.0
        %3422 = vmatpush.msra.mxu0 0.0
        %3423 = vmatpush.msra.mxu0 0.0
        %3424 = vmatpush.msra.mxu0 0.0
        %3425 = vmatpush.msra.mxu0 0.0
        %3426 = vmatpush.msra.mxu0 0.0
        %3427 = vmatpush.msra.mxu0 0.0
        %3428 = vmatpush.msra.mxu0 0.0
        %3429 = vmatpush.msra.mxu0 0.0
        %3430 = vmatpush.msra.mxu0 0.0
        %3431 = vmatpush.msra.mxu0 0.0
        %3432 = vmatpush.msra.mxu0 0.0
        %3433 = vmatpush.msra.mxu0 0.0
        %v3434 = vand.u32 %v3159, 4294901760
        %v3435 = vsub.f32 %v3159, %v3434
        %3436 = vmatpush.msra.mxu0 %v3435
        %v3437 = vand.u32 %v3158, 4294901760
        %v3438 = vsub.f32 %v3158, %v3437
        %3439 = vmatpush.msra.mxu0 %v3438
        %v3440 = vand.u32 %v2161, 4294901760
        %v3441 = vsub.f32 %v2161, %v3440
        %3442 = vmatmul.f32.gmra.mxu0 %v3441
        %v3443 = vpop.f32.mrf.mxu0
        %v3444 = vadd.f32 %v3414, %v3443
        %v3445 = vand.u32 %v2164, 4294901760
        %v3446 = vsub.f32 %v2164, %v3445
        %3447 = vmatmul.f32.gmra.mxu0 %v3446
        %v3448 = vpop.f32.mrf.mxu0
        %v3449 = vadd.f32 %v3418, %v3448
        %3450 = vdwg.mxu0
        %3451 = vmatpush.msra.mxu0 0.0
        %3452 = vmatpush.msra.mxu0 0.0
        %3453 = vmatpush.msra.mxu0 0.0
        %3454 = vmatpush.msra.mxu0 0.0
        %3455 = vmatpush.msra.mxu0 0.0
        %3456 = vmatpush.msra.mxu0 0.0
        %3457 = vmatpush.msra.mxu0 0.0
        %3458 = vmatpush.msra.mxu0 0.0
        %3459 = vmatpush.msra.mxu0 0.0
        %3460 = vmatpush.msra.mxu0 0.0
        %3461 = vmatpush.msra.mxu0 0.0
        %3462 = vmatpush.msra.mxu0 0.0
        %3463 = vmatpush.msra.mxu0 0.0
        %3464 = vmatpush.msra.mxu0 0.0
        %v3465 = vand.u32 %v3159, 4294901760
        %3466 = vmatpush.msra.mxu0 %v3465
        %v3467 = vand.u32 %v3158, 4294901760
        %3468 = vmatpush.msra.mxu0 %v3467
        %v3469 = vand.u32 %v2161, 4294901760
        %v3470 = vsub.f32 %v2161, %v3469
        %v3471 = vand.u32 %v3470, 4294901760
        %3472 = vmatmul.f32.gmra.mxu0 %v3471
        %v3473 = vpop.f32.mrf.mxu0
        %v3474 = vadd.f32 %v3444, %v3473
        %v3475 = vand.u32 %v2164, 4294901760
        %v3476 = vsub.f32 %v2164, %v3475
        %v3477 = vand.u32 %v3476, 4294901760
        %3478 = vmatmul.f32.gmra.mxu0 %v3477
        %v3479 = vpop.f32.mrf.mxu0
        %v3480 = vadd.f32 %v3449, %v3479
        %3481 = vdwg.mxu0
        %3482 = vmatpush.msra.mxu0 0.0
        %3483 = vmatpush.msra.mxu0 0.0
        %3484 = vmatpush.msra.mxu0 0.0
        %3485 = vmatpush.msra.mxu0 0.0
        %3486 = vmatpush.msra.mxu0 0.0
        %3487 = vmatpush.msra.mxu0 0.0
        %3488 = vmatpush.msra.mxu0 0.0
        %3489 = vmatpush.msra.mxu0 0.0
        %3490 = vmatpush.msra.mxu0 0.0
        %3491 = vmatpush.msra.mxu0 0.0
        %3492 = vmatpush.msra.mxu0 0.0
        %3493 = vmatpush.msra.mxu0 0.0
        %3494 = vmatpush.msra.mxu0 0.0
        %3495 = vmatpush.msra.mxu0 0.0
        %v3496 = vand.u32 %v3159, 4294901760
        %v3497 = vsub.f32 %v3159, %v3496
        %v3498 = vand.u32 %v3497, 4294901760
        %3499 = vmatpush.msra.mxu0 %v3498
        %v3500 = vand.u32 %v3158, 4294901760
        %v3501 = vsub.f32 %v3158, %v3500
        %v3502 = vand.u32 %v3501, 4294901760
        %3503 = vmatpush.msra.mxu0 %v3502
        %v3504 = vand.u32 %v2161, 4294901760
        %3505 = vmatmul.f32.gmra.mxu0 %v3504
        %v3506 = vpop.f32.mrf.mxu0
        %v3507 = vadd.f32 %v3474, %v3506
        %v3508 = vand.u32 %v2164, 4294901760
        %3509 = vmatmul.f32.gmra.mxu0 %v3508
        %v3510 = vpop.f32.mrf.mxu0
        %v3511 = vadd.f32 %v3480, %v3510
        %3512 = vdwg.mxu0
        %3513 = vmatpush.msra.mxu0 0.0
        %3514 = vmatpush.msra.mxu0 0.0
        %3515 = vmatpush.msra.mxu0 0.0
        %3516 = vmatpush.msra.mxu0 0.0
        %3517 = vmatpush.msra.mxu0 0.0
        %3518 = vmatpush.msra.mxu0 0.0
        %3519 = vmatpush.msra.mxu0 0.0
        %3520 = vmatpush.msra.mxu0 0.0
        %3521 = vmatpush.msra.mxu0 0.0
        %3522 = vmatpush.msra.mxu0 0.0
        %3523 = vmatpush.msra.mxu0 0.0
        %3524 = vmatpush.msra.mxu0 0.0
        %3525 = vmatpush.msra.mxu0 0.0
        %3526 = vmatpush.msra.mxu0 0.0
        %v3527 = vand.u32 %v3159, 4294901760
        %3528 = vmatpush.msra.mxu0 %v3527
        %v3529 = vand.u32 %v3158, 4294901760
        %3530 = vmatpush.msra.mxu0 %v3529
        %v3531 = vand.u32 %v2161, 4294901760
        %3532 = vmatmul.f32.gmra.mxu0 %v3531
        %v3533 = vpop.f32.mrf.mxu0
        %v3534 = vadd.f32 %v3507, %v3533
        %v3535 = vand.u32 %v2164, 4294901760
        %3536 = vmatmul.f32.gmra.mxu0 %v3535
        %v3537 = vpop.f32.mrf.mxu0
        %v3538 = vadd.f32 %v3511, %v3537
        %3539 = vdwg.mxu0
        %v3540 = vadd.f32 %v3155, %v3158
        %v3541 = vadd.f32 %v3156, %v3159
        %3542 = vmatpush.msra.mxu0 0.0
        %3543 = vmatpush.msra.mxu0 0.0
        %3544 = vmatpush.msra.mxu0 0.0
        %3545 = vmatpush.msra.mxu0 0.0
        %3546 = vmatpush.msra.mxu0 0.0
        %3547 = vmatpush.msra.mxu0 0.0
        %3548 = vmatpush.msra.mxu0 0.0
        %3549 = vmatpush.msra.mxu0 0.0
        %3550 = vmatpush.msra.mxu0 0.0
        %3551 = vmatpush.msra.mxu0 0.0
        %3552 = vmatpush.msra.mxu0 0.0
        %3553 = vmatpush.msra.mxu0 0.0
        %3554 = vmatpush.msra.mxu0 0.0
        %3555 = vmatpush.msra.mxu0 0.0
        %v3556 = vand.u32 %v3541, 4294901760
        %3557 = vmatpush.msra.mxu0 %v3556
        %v3558 = vand.u32 %v3540, 4294901760
        %3559 = vmatpush.msra.mxu0 %v3558
        %v3560 = vand.u32 %v2359, 4294901760
        %v3561 = vsub.f32 %v2359, %v3560
        %v3562 = vand.u32 %v3561, 4294901760
        %v3563 = vsub.f32 %v3561, %v3562
        %v3564 = vand.u32 %v3563, 4294901760
        %3565 = vmatmul.f32.gmra.mxu0 %v3564
        %v3566 = vpop.f32.mrf.mxu0
        %v3567 = vadd.f32 0.0, %v3566
        %v3568 = vand.u32 %v2362, 4294901760
        %v3569 = vsub.f32 %v2362, %v3568
        %v3570 = vand.u32 %v3569, 4294901760
        %v3571 = vsub.f32 %v3569, %v3570
        %v3572 = vand.u32 %v3571, 4294901760
        %3573 = vmatmul.f32.gmra.mxu0 %v3572
        %v3574 = vpop.f32.mrf.mxu0
        %v3575 = vadd.f32 0.0, %v3574
        %3576 = vdwg.mxu0
        %3577 = vmatpush.msra.mxu0 0.0
        %3578 = vmatpush.msra.mxu0 0.0
        %3579 = vmatpush.msra.mxu0 0.0
        %3580 = vmatpush.msra.mxu0 0.0
        %3581 = vmatpush.msra.mxu0 0.0
        %3582 = vmatpush.msra.mxu0 0.0
        %3583 = vmatpush.msra.mxu0 0.0
        %3584 = vmatpush.msra.mxu0 0.0
        %3585 = vmatpush.msra.mxu0 0.0
        %3586 = vmatpush.msra.mxu0 0.0
        %3587 = vmatpush.msra.mxu0 0.0
        %3588 = vmatpush.msra.mxu0 0.0
        %3589 = vmatpush.msra.mxu0 0.0
        %3590 = vmatpush.msra.mxu0 0.0
        %v3591 = vand.u32 %v3541, 4294901760
        %v3592 = vsub.f32 %v3541, %v3591
        %v3593 = vand.u32 %v3592, 4294901760
        %v3594 = vsub.f32 %v3592, %v3593
        %v3595 = vand.u32 %v3594, 4294901760
        %3596 = vmatpush.msra.mxu0 %v3595
        %v3597 = vand.u32 %v3540, 4294901760
        %v3598 = vsub.f32 %v3540, %v3597
        %v3599 = vand.u32 %v3598, 4294901760
        %v3600 = vsub.f32 %v3598, %v3599
        %v3601 = vand.u32 %v3600, 4294901760
        %3602 = vmatpush.msra.mxu0 %v3601
        %v3603 = vand.u32 %v2359, 4294901760
        %3604 = vmatmul.f32.gmra.mxu0 %v3603
        %v3605 = vpop.f32.mrf.mxu0
        %v3606 = vadd.f32 %v3567, %v3605
        %v3607 = vand.u32 %v2362, 4294901760
        %3608 = vmatmul.f32.gmra.mxu0 %v3607
        %v3609 = vpop.f32.mrf.mxu0
        %v3610 = vadd.f32 %v3575, %v3609
        %3611 = vdwg.mxu0
        %3612 = vmatpush.msra.mxu0 0.0
        %3613 = vmatpush.msra.mxu0 0.0
        %3614 = vmatpush.msra.mxu0 0.0
        %3615 = vmatpush.msra.mxu0 0.0
        %3616 = vmatpush.msra.mxu0 0.0
        %3617 = vmatpush.msra.mxu0 0.0
        %3618 = vmatpush.msra.mxu0 0.0
        %3619 = vmatpush.msra.mxu0 0.0
        %3620 = vmatpush.msra.mxu0 0.0
        %3621 = vmatpush.msra.mxu0 0.0
        %3622 = vmatpush.msra.mxu0 0.0
        %3623 = vmatpush.msra.mxu0 0.0
        %3624 = vmatpush.msra.mxu0 0.0
        %3625 = vmatpush.msra.mxu0 0.0
        %v3626 = vand.u32 %v3541, 4294901760
        %v3627 = vsub.f32 %v3541, %v3626
        %3628 = vmatpush.msra.mxu0 %v3627
        %v3629 = vand.u32 %v3540, 4294901760
        %v3630 = vsub.f32 %v3540, %v3629
        %3631 = vmatpush.msra.mxu0 %v3630
        %v3632 = vand.u32 %v2359, 4294901760
        %v3633 = vsub.f32 %v2359, %v3632
        %3634 = vmatmul.f32.gmra.mxu0 %v3633
        %v3635 = vpop.f32.mrf.mxu0
        %v3636 = vadd.f32 %v3606, %v3635
        %v3637 = vand.u32 %v2362, 4294901760
        %v3638 = vsub.f32 %v2362, %v3637
        %3639 = vmatmul.f32.gmra.mxu0 %v3638
        %v3640 = vpop.f32.mrf.mxu0
        %v3641 = vadd.f32 %v3610, %v3640
        %3642 = vdwg.mxu0
        %3643 = vmatpush.msra.mxu0 0.0
        %3644 = vmatpush.msra.mxu0 0.0
        %3645 = vmatpush.msra.mxu0 0.0
        %3646 = vmatpush.msra.mxu0 0.0
        %3647 = vmatpush.msra.mxu0 0.0
        %3648 = vmatpush.msra.mxu0 0.0
        %3649 = vmatpush.msra.mxu0 0.0
        %3650 = vmatpush.msra.mxu0 0.0
        %3651 = vmatpush.msra.mxu0 0.0
        %3652 = vmatpush.msra.mxu0 0.0
        %3653 = vmatpush.msra.mxu0 0.0
        %3654 = vmatpush.msra.mxu0 0.0
        %3655 = vmatpush.msra.mxu0 0.0
        %3656 = vmatpush.msra.mxu0 0.0
        %v3657 = vand.u32 %v3541, 4294901760
        %3658 = vmatpush.msra.mxu0 %v3657
        %v3659 = vand.u32 %v3540, 4294901760
        %3660 = vmatpush.msra.mxu0 %v3659
        %v3661 = vand.u32 %v2359, 4294901760
        %v3662 = vsub.f32 %v2359, %v3661
        %v3663 = vand.u32 %v3662, 4294901760
        %3664 = vmatmul.f32.gmra.mxu0 %v3663
        %v3665 = vpop.f32.mrf.mxu0
        %v3666 = vadd.f32 %v3636, %v3665
        %v3667 = vand.u32 %v2362, 4294901760
        %v3668 = vsub.f32 %v2362, %v3667
        %v3669 = vand.u32 %v3668, 4294901760
        %3670 = vmatmul.f32.gmra.mxu0 %v3669
        %v3671 = vpop.f32.mrf.mxu0
        %v3672 = vadd.f32 %v3641, %v3671
        %3673 = vdwg.mxu0
        %3674 = vmatpush.msra.mxu0 0.0
        %3675 = vmatpush.msra.mxu0 0.0
        %3676 = vmatpush.msra.mxu0 0.0
        %3677 = vmatpush.msra.mxu0 0.0
        %3678 = vmatpush.msra.mxu0 0.0
        %3679 = vmatpush.msra.mxu0 0.0
        %3680 = vmatpush.msra.mxu0 0.0
        %3681 = vmatpush.msra.mxu0 0.0
        %3682 = vmatpush.msra.mxu0 0.0
        %3683 = vmatpush.msra.mxu0 0.0
        %3684 = vmatpush.msra.mxu0 0.0
        %3685 = vmatpush.msra.mxu0 0.0
        %3686 = vmatpush.msra.mxu0 0.0
        %3687 = vmatpush.msra.mxu0 0.0
        %v3688 = vand.u32 %v3541, 4294901760
        %v3689 = vsub.f32 %v3541, %v3688
        %v3690 = vand.u32 %v3689, 4294901760
        %3691 = vmatpush.msra.mxu0 %v3690
        %v3692 = vand.u32 %v3540, 4294901760
        %v3693 = vsub.f32 %v3540, %v3692
        %v3694 = vand.u32 %v3693, 4294901760
        %3695 = vmatpush.msra.mxu0 %v3694
        %v3696 = vand.u32 %v2359, 4294901760
        %3697 = vmatmul.f32.gmra.mxu0 %v3696
        %v3698 = vpop.f32.mrf.mxu0
        %v3699 = vadd.f32 %v3666, %v3698
        %v3700 = vand.u32 %v2362, 4294901760
        %3701 = vmatmul.f32.gmra.mxu0 %v3700
        %v3702 = vpop.f32.mrf.mxu0
        %v3703 = vadd.f32 %v3672, %v3702
        %3704 = vdwg.mxu0
        %3705 = vmatpush.msra.mxu0 0.0
        %3706 = vmatpush.msra.mxu0 0.0
        %3707 = vmatpush.msra.mxu0 0.0
        %3708 = vmatpush.msra.mxu0 0.0
        %3709 = vmatpush.msra.mxu0 0.0
        %3710 = vmatpush.msra.mxu0 0.0
        %3711 = vmatpush.msra.mxu0 0.0
        %3712 = vmatpush.msra.mxu0 0.0
        %3713 = vmatpush.msra.mxu0 0.0
        %3714 = vmatpush.msra.mxu0 0.0
        %3715 = vmatpush.msra.mxu0 0.0
        %3716 = vmatpush.msra.mxu0 0.0
        %3717 = vmatpush.msra.mxu0 0.0
        %3718 = vmatpush.msra.mxu0 0.0
        %v3719 = vand.u32 %v3541, 4294901760
        %3720 = vmatpush.msra.mxu0 %v3719
        %v3721 = vand.u32 %v3540, 4294901760
        %3722 = vmatpush.msra.mxu0 %v3721
        %v3723 = vand.u32 %v2359, 4294901760
        %3724 = vmatmul.f32.gmra.mxu0 %v3723
        %v3725 = vpop.f32.mrf.mxu0
        %v3726 = vadd.f32 %v3699, %v3725
        %v3727 = vand.u32 %v2362, 4294901760
        %3728 = vmatmul.f32.gmra.mxu0 %v3727
        %v3729 = vpop.f32.mrf.mxu0
        %v3730 = vadd.f32 %v3703, %v3729
        %3731 = vdwg.mxu0
        %v3732 = vsub.f32 %v3344, %v3534
        %v3733 = vsub.f32 %v3348, %v3538
        %s3734 = scalar_lea.vmem %s619, 32 [#allocation18]
        %3735 = vst.msk [vmem:[%s3734] sm:$0xff] %vm705, %v3732
        %3736 = vst.msk [vmem:[%s3734 + $0x8] sm:$0xff] %vm705, %v3733
        %v3737 = vsub.f32 %v3726, %v3344
        %v3738 = vsub.f32 %v3730, %v3348
        %v3739 = vsub.f32 %v3737, %v3534
        %v3740 = vsub.f32 %v3738, %v3538
        %s3741 = scalar_lea.vmem %s626, 32 [#allocation19]
        %3742 = vst.msk [vmem:[%s3741] sm:$0xff] %vm705, %v3739
        %3743 = vst.msk [vmem:[%s3741 + $0x8] sm:$0xff] %vm705, %v3740
        %s3744 = scalar_lea.vmem [#allocation2], 48
        %v3745 = vld [vmem:[%s3744] sm:$0xff]
        %v3746 = vld [vmem:[%s3744 + $0x8] sm:$0xff]
        %s3747 = scalar_lea.vmem [#allocation3], 48
        %v3748 = vld [vmem:[%s3747] sm:$0xff]
        %v3749 = vld [vmem:[%s3747 + $0x8] sm:$0xff]
        %3750 = vmatpush.msra.mxu0 0.0
        %3751 = vmatpush.msra.mxu0 0.0
        %3752 = vmatpush.msra.mxu0 0.0
        %3753 = vmatpush.msra.mxu0 0.0
        %3754 = vmatpush.msra.mxu0 0.0
        %3755 = vmatpush.msra.mxu0 0.0
        %3756 = vmatpush.msra.mxu0 0.0
        %3757 = vmatpush.msra.mxu0 0.0
        %3758 = vmatpush.msra.mxu0 0.0
        %3759 = vmatpush.msra.mxu0 0.0
        %3760 = vmatpush.msra.mxu0 0.0
        %3761 = vmatpush.msra.mxu0 0.0
        %3762 = vmatpush.msra.mxu0 0.0
        %3763 = vmatpush.msra.mxu0 0.0
        %v3764 = vand.u32 %v3746, 4294901760
        %3765 = vmatpush.msra.mxu0 %v3764
        %v3766 = vand.u32 %v3745, 4294901760
        %3767 = vmatpush.msra.mxu0 %v3766
        %v3768 = vand.u32 %v1965, 4294901760
        %v3769 = vsub.f32 %v1965, %v3768
        %v3770 = vand.u32 %v3769, 4294901760
        %v3771 = vsub.f32 %v3769, %v3770
        %v3772 = vand.u32 %v3771, 4294901760
        %3773 = vmatmul.f32.gmra.mxu0 %v3772
        %v3774 = vpop.f32.mrf.mxu0
        %v3775 = vadd.f32 0.0, %v3774
        %v3776 = vand.u32 %v1968, 4294901760
        %v3777 = vsub.f32 %v1968, %v3776
        %v3778 = vand.u32 %v3777, 4294901760
        %v3779 = vsub.f32 %v3777, %v3778
        %v3780 = vand.u32 %v3779, 4294901760
        %3781 = vmatmul.f32.gmra.mxu0 %v3780
        %v3782 = vpop.f32.mrf.mxu0
        %v3783 = vadd.f32 0.0, %v3782
        %3784 = vdwg.mxu0
        %3785 = vmatpush.msra.mxu0 0.0
        %3786 = vmatpush.msra.mxu0 0.0
        %3787 = vmatpush.msra.mxu0 0.0
        %3788 = vmatpush.msra.mxu0 0.0
        %3789 = vmatpush.msra.mxu0 0.0
        %3790 = vmatpush.msra.mxu0 0.0
        %3791 = vmatpush.msra.mxu0 0.0
        %3792 = vmatpush.msra.mxu0 0.0
        %3793 = vmatpush.msra.mxu0 0.0
        %3794 = vmatpush.msra.mxu0 0.0
        %3795 = vmatpush.msra.mxu0 0.0
        %3796 = vmatpush.msra.mxu0 0.0
        %3797 = vmatpush.msra.mxu0 0.0
        %3798 = vmatpush.msra.mxu0 0.0
        %v3799 = vand.u32 %v3746, 4294901760
        %v3800 = vsub.f32 %v3746, %v3799
        %v3801 = vand.u32 %v3800, 4294901760
        %v3802 = vsub.f32 %v3800, %v3801
        %v3803 = vand.u32 %v3802, 4294901760
        %3804 = vmatpush.msra.mxu0 %v3803
        %v3805 = vand.u32 %v3745, 4294901760
        %v3806 = vsub.f32 %v3745, %v3805
        %v3807 = vand.u32 %v3806, 4294901760
        %v3808 = vsub.f32 %v3806, %v3807
        %v3809 = vand.u32 %v3808, 4294901760
        %3810 = vmatpush.msra.mxu0 %v3809
        %v3811 = vand.u32 %v1965, 4294901760
        %3812 = vmatmul.f32.gmra.mxu0 %v3811
        %v3813 = vpop.f32.mrf.mxu0
        %v3814 = vadd.f32 %v3775, %v3813
        %v3815 = vand.u32 %v1968, 4294901760
        %3816 = vmatmul.f32.gmra.mxu0 %v3815
        %v3817 = vpop.f32.mrf.mxu0
        %v3818 = vadd.f32 %v3783, %v3817
        %3819 = vdwg.mxu0
        %3820 = vmatpush.msra.mxu0 0.0
        %3821 = vmatpush.msra.mxu0 0.0
        %3822 = vmatpush.msra.mxu0 0.0
        %3823 = vmatpush.msra.mxu0 0.0
        %3824 = vmatpush.msra.mxu0 0.0
        %3825 = vmatpush.msra.mxu0 0.0
        %3826 = vmatpush.msra.mxu0 0.0
        %3827 = vmatpush.msra.mxu0 0.0
        %3828 = vmatpush.msra.mxu0 0.0
        %3829 = vmatpush.msra.mxu0 0.0
        %3830 = vmatpush.msra.mxu0 0.0
        %3831 = vmatpush.msra.mxu0 0.0
        %3832 = vmatpush.msra.mxu0 0.0
        %3833 = vmatpush.msra.mxu0 0.0
        %v3834 = vand.u32 %v3746, 4294901760
        %v3835 = vsub.f32 %v3746, %v3834
        %3836 = vmatpush.msra.mxu0 %v3835
        %v3837 = vand.u32 %v3745, 4294901760
        %v3838 = vsub.f32 %v3745, %v3837
        %3839 = vmatpush.msra.mxu0 %v3838
        %v3840 = vand.u32 %v1965, 4294901760
        %v3841 = vsub.f32 %v1965, %v3840
        %3842 = vmatmul.f32.gmra.mxu0 %v3841
        %v3843 = vpop.f32.mrf.mxu0
        %v3844 = vadd.f32 %v3814, %v3843
        %v3845 = vand.u32 %v1968, 4294901760
        %v3846 = vsub.f32 %v1968, %v3845
        %3847 = vmatmul.f32.gmra.mxu0 %v3846
        %v3848 = vpop.f32.mrf.mxu0
        %v3849 = vadd.f32 %v3818, %v3848
        %3850 = vdwg.mxu0
        %3851 = vmatpush.msra.mxu0 0.0
        %3852 = vmatpush.msra.mxu0 0.0
        %3853 = vmatpush.msra.mxu0 0.0
        %3854 = vmatpush.msra.mxu0 0.0
        %3855 = vmatpush.msra.mxu0 0.0
        %3856 = vmatpush.msra.mxu0 0.0
        %3857 = vmatpush.msra.mxu0 0.0
        %3858 = vmatpush.msra.mxu0 0.0
        %3859 = vmatpush.msra.mxu0 0.0
        %3860 = vmatpush.msra.mxu0 0.0
        %3861 = vmatpush.msra.mxu0 0.0
        %3862 = vmatpush.msra.mxu0 0.0
        %3863 = vmatpush.msra.mxu0 0.0
        %3864 = vmatpush.msra.mxu0 0.0
        %v3865 = vand.u32 %v3746, 4294901760
        %3866 = vmatpush.msra.mxu0 %v3865
        %v3867 = vand.u32 %v3745, 4294901760
        %3868 = vmatpush.msra.mxu0 %v3867
        %v3869 = vand.u32 %v1965, 4294901760
        %v3870 = vsub.f32 %v1965, %v3869
        %v3871 = vand.u32 %v3870, 4294901760
        %3872 = vmatmul.f32.gmra.mxu0 %v3871
        %v3873 = vpop.f32.mrf.mxu0
        %v3874 = vadd.f32 %v3844, %v3873
        %v3875 = vand.u32 %v1968, 4294901760
        %v3876 = vsub.f32 %v1968, %v3875
        %v3877 = vand.u32 %v3876, 4294901760
        %3878 = vmatmul.f32.gmra.mxu0 %v3877
        %v3879 = vpop.f32.mrf.mxu0
        %v3880 = vadd.f32 %v3849, %v3879
        %3881 = vdwg.mxu0
        %3882 = vmatpush.msra.mxu0 0.0
        %3883 = vmatpush.msra.mxu0 0.0
        %3884 = vmatpush.msra.mxu0 0.0
        %3885 = vmatpush.msra.mxu0 0.0
        %3886 = vmatpush.msra.mxu0 0.0
        %3887 = vmatpush.msra.mxu0 0.0
        %3888 = vmatpush.msra.mxu0 0.0
        %3889 = vmatpush.msra.mxu0 0.0
        %3890 = vmatpush.msra.mxu0 0.0
        %3891 = vmatpush.msra.mxu0 0.0
        %3892 = vmatpush.msra.mxu0 0.0
        %3893 = vmatpush.msra.mxu0 0.0
        %3894 = vmatpush.msra.mxu0 0.0
        %3895 = vmatpush.msra.mxu0 0.0
        %v3896 = vand.u32 %v3746, 4294901760
        %v3897 = vsub.f32 %v3746, %v3896
        %v3898 = vand.u32 %v3897, 4294901760
        %3899 = vmatpush.msra.mxu0 %v3898
        %v3900 = vand.u32 %v3745, 4294901760
        %v3901 = vsub.f32 %v3745, %v3900
        %v3902 = vand.u32 %v3901, 4294901760
        %3903 = vmatpush.msra.mxu0 %v3902
        %v3904 = vand.u32 %v1965, 4294901760
        %3905 = vmatmul.f32.gmra.mxu0 %v3904
        %v3906 = vpop.f32.mrf.mxu0
        %v3907 = vadd.f32 %v3874, %v3906
        %v3908 = vand.u32 %v1968, 4294901760
        %3909 = vmatmul.f32.gmra.mxu0 %v3908
        %v3910 = vpop.f32.mrf.mxu0
        %v3911 = vadd.f32 %v3880, %v3910
        %3912 = vdwg.mxu0
        %3913 = vmatpush.msra.mxu0 0.0
        %3914 = vmatpush.msra.mxu0 0.0
        %3915 = vmatpush.msra.mxu0 0.0
        %3916 = vmatpush.msra.mxu0 0.0
        %3917 = vmatpush.msra.mxu0 0.0
        %3918 = vmatpush.msra.mxu0 0.0
        %3919 = vmatpush.msra.mxu0 0.0
        %3920 = vmatpush.msra.mxu0 0.0
        %3921 = vmatpush.msra.mxu0 0.0
        %3922 = vmatpush.msra.mxu0 0.0
        %3923 = vmatpush.msra.mxu0 0.0
        %3924 = vmatpush.msra.mxu0 0.0
        %3925 = vmatpush.msra.mxu0 0.0
        %3926 = vmatpush.msra.mxu0 0.0
        %v3927 = vand.u32 %v3746, 4294901760
        %3928 = vmatpush.msra.mxu0 %v3927
        %v3929 = vand.u32 %v3745, 4294901760
        %3930 = vmatpush.msra.mxu0 %v3929
        %v3931 = vand.u32 %v1965, 4294901760
        %3932 = vmatmul.f32.gmra.mxu0 %v3931
        %v3933 = vpop.f32.mrf.mxu0
        %v3934 = vadd.f32 %v3907, %v3933
        %v3935 = vand.u32 %v1968, 4294901760
        %3936 = vmatmul.f32.gmra.mxu0 %v3935
        %v3937 = vpop.f32.mrf.mxu0
        %v3938 = vadd.f32 %v3911, %v3937
        %3939 = vdwg.mxu0
        %3940 = vmatpush.msra.mxu0 0.0
        %3941 = vmatpush.msra.mxu0 0.0
        %3942 = vmatpush.msra.mxu0 0.0
        %3943 = vmatpush.msra.mxu0 0.0
        %3944 = vmatpush.msra.mxu0 0.0
        %3945 = vmatpush.msra.mxu0 0.0
        %3946 = vmatpush.msra.mxu0 0.0
        %3947 = vmatpush.msra.mxu0 0.0
        %3948 = vmatpush.msra.mxu0 0.0
        %3949 = vmatpush.msra.mxu0 0.0
        %3950 = vmatpush.msra.mxu0 0.0
        %3951 = vmatpush.msra.mxu0 0.0
        %3952 = vmatpush.msra.mxu0 0.0
        %3953 = vmatpush.msra.mxu0 0.0
        %v3954 = vand.u32 %v3749, 4294901760
        %3955 = vmatpush.msra.mxu0 %v3954
        %v3956 = vand.u32 %v3748, 4294901760
        %3957 = vmatpush.msra.mxu0 %v3956
        %v3958 = vand.u32 %v2161, 4294901760
        %v3959 = vsub.f32 %v2161, %v3958
        %v3960 = vand.u32 %v3959, 4294901760
        %v3961 = vsub.f32 %v3959, %v3960
        %v3962 = vand.u32 %v3961, 4294901760
        %3963 = vmatmul.f32.gmra.mxu0 %v3962
        %v3964 = vpop.f32.mrf.mxu0
        %v3965 = vadd.f32 0.0, %v3964
        %v3966 = vand.u32 %v2164, 4294901760
        %v3967 = vsub.f32 %v2164, %v3966
        %v3968 = vand.u32 %v3967, 4294901760
        %v3969 = vsub.f32 %v3967, %v3968
        %v3970 = vand.u32 %v3969, 4294901760
        %3971 = vmatmul.f32.gmra.mxu0 %v3970
        %v3972 = vpop.f32.mrf.mxu0
        %v3973 = vadd.f32 0.0, %v3972
        %3974 = vdwg.mxu0
        %3975 = vmatpush.msra.mxu0 0.0
        %3976 = vmatpush.msra.mxu0 0.0
        %3977 = vmatpush.msra.mxu0 0.0
        %3978 = vmatpush.msra.mxu0 0.0
        %3979 = vmatpush.msra.mxu0 0.0
        %3980 = vmatpush.msra.mxu0 0.0
        %3981 = vmatpush.msra.mxu0 0.0
        %3982 = vmatpush.msra.mxu0 0.0
        %3983 = vmatpush.msra.mxu0 0.0
        %3984 = vmatpush.msra.mxu0 0.0
        %3985 = vmatpush.msra.mxu0 0.0
        %3986 = vmatpush.msra.mxu0 0.0
        %3987 = vmatpush.msra.mxu0 0.0
        %3988 = vmatpush.msra.mxu0 0.0
        %v3989 = vand.u32 %v3749, 4294901760
        %v3990 = vsub.f32 %v3749, %v3989
        %v3991 = vand.u32 %v3990, 4294901760
        %v3992 = vsub.f32 %v3990, %v3991
        %v3993 = vand.u32 %v3992, 4294901760
        %3994 = vmatpush.msra.mxu0 %v3993
        %v3995 = vand.u32 %v3748, 4294901760
        %v3996 = vsub.f32 %v3748, %v3995
        %v3997 = vand.u32 %v3996, 4294901760
        %v3998 = vsub.f32 %v3996, %v3997
        %v3999 = vand.u32 %v3998, 4294901760
        %4000 = vmatpush.msra.mxu0 %v3999
        %v4001 = vand.u32 %v2161, 4294901760
        %4002 = vmatmul.f32.gmra.mxu0 %v4001
        %v4003 = vpop.f32.mrf.mxu0
        %v4004 = vadd.f32 %v3965, %v4003
        %v4005 = vand.u32 %v2164, 4294901760
        %4006 = vmatmul.f32.gmra.mxu0 %v4005
        %v4007 = vpop.f32.mrf.mxu0
        %v4008 = vadd.f32 %v3973, %v4007
        %4009 = vdwg.mxu0
        %4010 = vmatpush.msra.mxu0 0.0
        %4011 = vmatpush.msra.mxu0 0.0
        %4012 = vmatpush.msra.mxu0 0.0
        %4013 = vmatpush.msra.mxu0 0.0
        %4014 = vmatpush.msra.mxu0 0.0
        %4015 = vmatpush.msra.mxu0 0.0
        %4016 = vmatpush.msra.mxu0 0.0
        %4017 = vmatpush.msra.mxu0 0.0
        %4018 = vmatpush.msra.mxu0 0.0
        %4019 = vmatpush.msra.mxu0 0.0
        %4020 = vmatpush.msra.mxu0 0.0
        %4021 = vmatpush.msra.mxu0 0.0
        %4022 = vmatpush.msra.mxu0 0.0
        %4023 = vmatpush.msra.mxu0 0.0
        %v4024 = vand.u32 %v3749, 4294901760
        %v4025 = vsub.f32 %v3749, %v4024
        %4026 = vmatpush.msra.mxu0 %v4025
        %v4027 = vand.u32 %v3748, 4294901760
        %v4028 = vsub.f32 %v3748, %v4027
        %4029 = vmatpush.msra.mxu0 %v4028
        %v4030 = vand.u32 %v2161, 4294901760
        %v4031 = vsub.f32 %v2161, %v4030
        %4032 = vmatmul.f32.gmra.mxu0 %v4031
        %v4033 = vpop.f32.mrf.mxu0
        %v4034 = vadd.f32 %v4004, %v4033
        %v4035 = vand.u32 %v2164, 4294901760
        %v4036 = vsub.f32 %v2164, %v4035
        %4037 = vmatmul.f32.gmra.mxu0 %v4036
        %v4038 = vpop.f32.mrf.mxu0
        %v4039 = vadd.f32 %v4008, %v4038
        %4040 = vdwg.mxu0
        %4041 = vmatpush.msra.mxu0 0.0
        %4042 = vmatpush.msra.mxu0 0.0
        %4043 = vmatpush.msra.mxu0 0.0
        %4044 = vmatpush.msra.mxu0 0.0
        %4045 = vmatpush.msra.mxu0 0.0
        %4046 = vmatpush.msra.mxu0 0.0
        %4047 = vmatpush.msra.mxu0 0.0
        %4048 = vmatpush.msra.mxu0 0.0
        %4049 = vmatpush.msra.mxu0 0.0
        %4050 = vmatpush.msra.mxu0 0.0
        %4051 = vmatpush.msra.mxu0 0.0
        %4052 = vmatpush.msra.mxu0 0.0
        %4053 = vmatpush.msra.mxu0 0.0
        %4054 = vmatpush.msra.mxu0 0.0
        %v4055 = vand.u32 %v3749, 4294901760
        %4056 = vmatpush.msra.mxu0 %v4055
        %v4057 = vand.u32 %v3748, 4294901760
        %4058 = vmatpush.msra.mxu0 %v4057
        %v4059 = vand.u32 %v2161, 4294901760
        %v4060 = vsub.f32 %v2161, %v4059
        %v4061 = vand.u32 %v4060, 4294901760
        %4062 = vmatmul.f32.gmra.mxu0 %v4061
        %v4063 = vpop.f32.mrf.mxu0
        %v4064 = vadd.f32 %v4034, %v4063
        %v4065 = vand.u32 %v2164, 4294901760
        %v4066 = vsub.f32 %v2164, %v4065
        %v4067 = vand.u32 %v4066, 4294901760
        %4068 = vmatmul.f32.gmra.mxu0 %v4067
        %v4069 = vpop.f32.mrf.mxu0
        %v4070 = vadd.f32 %v4039, %v4069
        %4071 = vdwg.mxu0
        %4072 = vmatpush.msra.mxu0 0.0
        %4073 = vmatpush.msra.mxu0 0.0
        %4074 = vmatpush.msra.mxu0 0.0
        %4075 = vmatpush.msra.mxu0 0.0
        %4076 = vmatpush.msra.mxu0 0.0
        %4077 = vmatpush.msra.mxu0 0.0
        %4078 = vmatpush.msra.mxu0 0.0
        %4079 = vmatpush.msra.mxu0 0.0
        %4080 = vmatpush.msra.mxu0 0.0
        %4081 = vmatpush.msra.mxu0 0.0
        %4082 = vmatpush.msra.mxu0 0.0
        %4083 = vmatpush.msra.mxu0 0.0
        %4084 = vmatpush.msra.mxu0 0.0
        %4085 = vmatpush.msra.mxu0 0.0
        %v4086 = vand.u32 %v3749, 4294901760
        %v4087 = vsub.f32 %v3749, %v4086
        %v4088 = vand.u32 %v4087, 4294901760
        %4089 = vmatpush.msra.mxu0 %v4088
        %v4090 = vand.u32 %v3748, 4294901760
        %v4091 = vsub.f32 %v3748, %v4090
        %v4092 = vand.u32 %v4091, 4294901760
        %4093 = vmatpush.msra.mxu0 %v4092
        %v4094 = vand.u32 %v2161, 4294901760
        %4095 = vmatmul.f32.gmra.mxu0 %v4094
        %v4096 = vpop.f32.mrf.mxu0
        %v4097 = vadd.f32 %v4064, %v4096
        %v4098 = vand.u32 %v2164, 4294901760
        %4099 = vmatmul.f32.gmra.mxu0 %v4098
        %v4100 = vpop.f32.mrf.mxu0
        %v4101 = vadd.f32 %v4070, %v4100
        %4102 = vdwg.mxu0
        %4103 = vmatpush.msra.mxu0 0.0
        %4104 = vmatpush.msra.mxu0 0.0
        %4105 = vmatpush.msra.mxu0 0.0
        %4106 = vmatpush.msra.mxu0 0.0
        %4107 = vmatpush.msra.mxu0 0.0
        %4108 = vmatpush.msra.mxu0 0.0
        %4109 = vmatpush.msra.mxu0 0.0
        %4110 = vmatpush.msra.mxu0 0.0
        %4111 = vmatpush.msra.mxu0 0.0
        %4112 = vmatpush.msra.mxu0 0.0
        %4113 = vmatpush.msra.mxu0 0.0
        %4114 = vmatpush.msra.mxu0 0.0
        %4115 = vmatpush.msra.mxu0 0.0
        %4116 = vmatpush.msra.mxu0 0.0
        %v4117 = vand.u32 %v3749, 4294901760
        %4118 = vmatpush.msra.mxu0 %v4117
        %v4119 = vand.u32 %v3748, 4294901760
        %4120 = vmatpush.msra.mxu0 %v4119
        %v4121 = vand.u32 %v2161, 4294901760
        %4122 = vmatmul.f32.gmra.mxu0 %v4121
        %v4123 = vpop.f32.mrf.mxu0
        %v4124 = vadd.f32 %v4097, %v4123
        %v4125 = vand.u32 %v2164, 4294901760
        %4126 = vmatmul.f32.gmra.mxu0 %v4125
        %v4127 = vpop.f32.mrf.mxu0
        %v4128 = vadd.f32 %v4101, %v4127
        %4129 = vdwg.mxu0
        %v4130 = vadd.f32 %v3745, %v3748
        %v4131 = vadd.f32 %v3746, %v3749
        %4132 = vmatpush.msra.mxu0 0.0
        %4133 = vmatpush.msra.mxu0 0.0
        %4134 = vmatpush.msra.mxu0 0.0
        %4135 = vmatpush.msra.mxu0 0.0
        %4136 = vmatpush.msra.mxu0 0.0
        %4137 = vmatpush.msra.mxu0 0.0
        %4138 = vmatpush.msra.mxu0 0.0
        %4139 = vmatpush.msra.mxu0 0.0
        %4140 = vmatpush.msra.mxu0 0.0
        %4141 = vmatpush.msra.mxu0 0.0
        %4142 = vmatpush.msra.mxu0 0.0
        %4143 = vmatpush.msra.mxu0 0.0
        %4144 = vmatpush.msra.mxu0 0.0
        %4145 = vmatpush.msra.mxu0 0.0
        %v4146 = vand.u32 %v4131, 4294901760
        %4147 = vmatpush.msra.mxu0 %v4146
        %v4148 = vand.u32 %v4130, 4294901760
        %4149 = vmatpush.msra.mxu0 %v4148
        %v4150 = vand.u32 %v2359, 4294901760
        %v4151 = vsub.f32 %v2359, %v4150
        %v4152 = vand.u32 %v4151, 4294901760
        %v4153 = vsub.f32 %v4151, %v4152
        %v4154 = vand.u32 %v4153, 4294901760
        %4155 = vmatmul.f32.gmra.mxu0 %v4154
        %v4156 = vpop.f32.mrf.mxu0
        %v4157 = vadd.f32 0.0, %v4156
        %v4158 = vand.u32 %v2362, 4294901760
        %v4159 = vsub.f32 %v2362, %v4158
        %v4160 = vand.u32 %v4159, 4294901760
        %v4161 = vsub.f32 %v4159, %v4160
        %v4162 = vand.u32 %v4161, 4294901760
        %4163 = vmatmul.f32.gmra.mxu0 %v4162
        %v4164 = vpop.f32.mrf.mxu0
        %v4165 = vadd.f32 0.0, %v4164
        %4166 = vdwg.mxu0
        %4167 = vmatpush.msra.mxu0 0.0
        %4168 = vmatpush.msra.mxu0 0.0
        %4169 = vmatpush.msra.mxu0 0.0
        %4170 = vmatpush.msra.mxu0 0.0
        %4171 = vmatpush.msra.mxu0 0.0
        %4172 = vmatpush.msra.mxu0 0.0
        %4173 = vmatpush.msra.mxu0 0.0
        %4174 = vmatpush.msra.mxu0 0.0
        %4175 = vmatpush.msra.mxu0 0.0
        %4176 = vmatpush.msra.mxu0 0.0
        %4177 = vmatpush.msra.mxu0 0.0
        %4178 = vmatpush.msra.mxu0 0.0
        %4179 = vmatpush.msra.mxu0 0.0
        %4180 = vmatpush.msra.mxu0 0.0
        %v4181 = vand.u32 %v4131, 4294901760
        %v4182 = vsub.f32 %v4131, %v4181
        %v4183 = vand.u32 %v4182, 4294901760
        %v4184 = vsub.f32 %v4182, %v4183
        %v4185 = vand.u32 %v4184, 4294901760
        %4186 = vmatpush.msra.mxu0 %v4185
        %v4187 = vand.u32 %v4130, 4294901760
        %v4188 = vsub.f32 %v4130, %v4187
        %v4189 = vand.u32 %v4188, 4294901760
        %v4190 = vsub.f32 %v4188, %v4189
        %v4191 = vand.u32 %v4190, 4294901760
        %4192 = vmatpush.msra.mxu0 %v4191
        %v4193 = vand.u32 %v2359, 4294901760
        %4194 = vmatmul.f32.gmra.mxu0 %v4193
        %v4195 = vpop.f32.mrf.mxu0
        %v4196 = vadd.f32 %v4157, %v4195
        %v4197 = vand.u32 %v2362, 4294901760
        %4198 = vmatmul.f32.gmra.mxu0 %v4197
        %v4199 = vpop.f32.mrf.mxu0
        %v4200 = vadd.f32 %v4165, %v4199
        %4201 = vdwg.mxu0
        %4202 = vmatpush.msra.mxu0 0.0
        %4203 = vmatpush.msra.mxu0 0.0
        %4204 = vmatpush.msra.mxu0 0.0
        %4205 = vmatpush.msra.mxu0 0.0
        %4206 = vmatpush.msra.mxu0 0.0
        %4207 = vmatpush.msra.mxu0 0.0
        %4208 = vmatpush.msra.mxu0 0.0
        %4209 = vmatpush.msra.mxu0 0.0
        %4210 = vmatpush.msra.mxu0 0.0
        %4211 = vmatpush.msra.mxu0 0.0
        %4212 = vmatpush.msra.mxu0 0.0
        %4213 = vmatpush.msra.mxu0 0.0
        %4214 = vmatpush.msra.mxu0 0.0
        %4215 = vmatpush.msra.mxu0 0.0
        %v4216 = vand.u32 %v4131, 4294901760
        %v4217 = vsub.f32 %v4131, %v4216
        %4218 = vmatpush.msra.mxu0 %v4217
        %v4219 = vand.u32 %v4130, 4294901760
        %v4220 = vsub.f32 %v4130, %v4219
        %4221 = vmatpush.msra.mxu0 %v4220
        %v4222 = vand.u32 %v2359, 4294901760
        %v4223 = vsub.f32 %v2359, %v4222
        %4224 = vmatmul.f32.gmra.mxu0 %v4223
        %v4225 = vpop.f32.mrf.mxu0
        %v4226 = vadd.f32 %v4196, %v4225
        %v4227 = vand.u32 %v2362, 4294901760
        %v4228 = vsub.f32 %v2362, %v4227
        %4229 = vmatmul.f32.gmra.mxu0 %v4228
        %v4230 = vpop.f32.mrf.mxu0
        %v4231 = vadd.f32 %v4200, %v4230
        %4232 = vdwg.mxu0
        %4233 = vmatpush.msra.mxu0 0.0
        %4234 = vmatpush.msra.mxu0 0.0
        %4235 = vmatpush.msra.mxu0 0.0
        %4236 = vmatpush.msra.mxu0 0.0
        %4237 = vmatpush.msra.mxu0 0.0
        %4238 = vmatpush.msra.mxu0 0.0
        %4239 = vmatpush.msra.mxu0 0.0
        %4240 = vmatpush.msra.mxu0 0.0
        %4241 = vmatpush.msra.mxu0 0.0
        %4242 = vmatpush.msra.mxu0 0.0
        %4243 = vmatpush.msra.mxu0 0.0
        %4244 = vmatpush.msra.mxu0 0.0
        %4245 = vmatpush.msra.mxu0 0.0
        %4246 = vmatpush.msra.mxu0 0.0
        %v4247 = vand.u32 %v4131, 4294901760
        %4248 = vmatpush.msra.mxu0 %v4247
        %v4249 = vand.u32 %v4130, 4294901760
        %4250 = vmatpush.msra.mxu0 %v4249
        %v4251 = vand.u32 %v2359, 4294901760
        %v4252 = vsub.f32 %v2359, %v4251
        %v4253 = vand.u32 %v4252, 4294901760
        %4254 = vmatmul.f32.gmra.mxu0 %v4253
        %v4255 = vpop.f32.mrf.mxu0
        %v4256 = vadd.f32 %v4226, %v4255
        %v4257 = vand.u32 %v2362, 4294901760
        %v4258 = vsub.f32 %v2362, %v4257
        %v4259 = vand.u32 %v4258, 4294901760
        %4260 = vmatmul.f32.gmra.mxu0 %v4259
        %v4261 = vpop.f32.mrf.mxu0
        %v4262 = vadd.f32 %v4231, %v4261
        %4263 = vdwg.mxu0
        %4264 = vmatpush.msra.mxu0 0.0
        %4265 = vmatpush.msra.mxu0 0.0
        %4266 = vmatpush.msra.mxu0 0.0
        %4267 = vmatpush.msra.mxu0 0.0
        %4268 = vmatpush.msra.mxu0 0.0
        %4269 = vmatpush.msra.mxu0 0.0
        %4270 = vmatpush.msra.mxu0 0.0
        %4271 = vmatpush.msra.mxu0 0.0
        %4272 = vmatpush.msra.mxu0 0.0
        %4273 = vmatpush.msra.mxu0 0.0
        %4274 = vmatpush.msra.mxu0 0.0
        %4275 = vmatpush.msra.mxu0 0.0
        %4276 = vmatpush.msra.mxu0 0.0
        %4277 = vmatpush.msra.mxu0 0.0
        %v4278 = vand.u32 %v4131, 4294901760
        %v4279 = vsub.f32 %v4131, %v4278
        %v4280 = vand.u32 %v4279, 4294901760
        %4281 = vmatpush.msra.mxu0 %v4280
        %v4282 = vand.u32 %v4130, 4294901760
        %v4283 = vsub.f32 %v4130, %v4282
        %v4284 = vand.u32 %v4283, 4294901760
        %4285 = vmatpush.msra.mxu0 %v4284
        %v4286 = vand.u32 %v2359, 4294901760
        %4287 = vmatmul.f32.gmra.mxu0 %v4286
        %v4288 = vpop.f32.mrf.mxu0
        %v4289 = vadd.f32 %v4256, %v4288
        %v4290 = vand.u32 %v2362, 4294901760
        %4291 = vmatmul.f32.gmra.mxu0 %v4290
        %v4292 = vpop.f32.mrf.mxu0
        %v4293 = vadd.f32 %v4262, %v4292
        %4294 = vdwg.mxu0
        %4295 = vmatpush.msra.mxu0 0.0
        %4296 = vmatpush.msra.mxu0 0.0
        %4297 = vmatpush.msra.mxu0 0.0
        %4298 = vmatpush.msra.mxu0 0.0
        %4299 = vmatpush.msra.mxu0 0.0
        %4300 = vmatpush.msra.mxu0 0.0
        %4301 = vmatpush.msra.mxu0 0.0
        %4302 = vmatpush.msra.mxu0 0.0
        %4303 = vmatpush.msra.mxu0 0.0
        %4304 = vmatpush.msra.mxu0 0.0
        %4305 = vmatpush.msra.mxu0 0.0
        %4306 = vmatpush.msra.mxu0 0.0
        %4307 = vmatpush.msra.mxu0 0.0
        %4308 = vmatpush.msra.mxu0 0.0
        %v4309 = vand.u32 %v4131, 4294901760
        %4310 = vmatpush.msra.mxu0 %v4309
        %v4311 = vand.u32 %v4130, 4294901760
        %4312 = vmatpush.msra.mxu0 %v4311
        %v4313 = vand.u32 %v2359, 4294901760
        %4314 = vmatmul.f32.gmra.mxu0 %v4313
        %v4315 = vpop.f32.mrf.mxu0
        %v4316 = vadd.f32 %v4289, %v4315
        %v4317 = vand.u32 %v2362, 4294901760
        %4318 = vmatmul.f32.gmra.mxu0 %v4317
        %v4319 = vpop.f32.mrf.mxu0
        %v4320 = vadd.f32 %v4293, %v4319
        %4321 = vdwg.mxu0
        %v4322 = vsub.f32 %v3934, %v4124
        %v4323 = vsub.f32 %v3938, %v4128
        %s4324 = scalar_lea.vmem %s619, 48 [#allocation18]
        %4325 = vst.msk [vmem:[%s4324] sm:$0xff] %vm705, %v4322
        %4326 = vst.msk [vmem:[%s4324 + $0x8] sm:$0xff] %vm705, %v4323
        %v4327 = vsub.f32 %v4316, %v3934
        %v4328 = vsub.f32 %v4320, %v3938
        %v4329 = vsub.f32 %v4327, %v4124
        %v4330 = vsub.f32 %v4328, %v4128
        %s4331 = scalar_lea.vmem %s626, 48 [#allocation19]
        %4332 = vst.msk [vmem:[%s4331] sm:$0xff] %vm705, %v4329
        %4333 = vst.msk [vmem:[%s4331 + $0x8] sm:$0xff] %vm705, %v4330
        %s4334 = sand.u32 %s264, 1
        %s4335 = scalar_lea.sflag [#allocation6], %s4334
        %s4336 = sand.u32 %s264, 1
        %s4337 = smul.addr %s4336, 64
        %s4338 = scalar_lea.vmem [#allocation18], %s4337
        %s4339 = sand.u32 %s292, 1
        %s4340 = scalar_lea.sflag [#allocation20], %s4339
        %s4341 = sand.u32 %s292, 1
        %s4342 = smul.addr %s4341, 64
        %s4343 = scalar_lea.vmem [#allocation19], %s4342
        // Predicated region
        $region85: #{tpu_custom_call.1} parent=51 // pred_check
          %p4344 = pneg %p274
        $region86: #{tpu_custom_call.1} parent=51 // pred_check_branch
          %4346 = sbr.rel (%p4344) target = $region88
        $region87: #{tpu_custom_call.1} parent=51 // pred_region
          %s4347 = smul.u32 4, %s45
          %4349 = vsyncadd %s4335, 0
          %s4350 = smul.addr %s4347, 2
          %s4351 = smul.addr %s44, 8
          %s4352 = sadd.s32 %s4350, %s4351
          %s4353 = smul.addr %s4352, 8
          %s4354 = scalar_lea.hbm %s8, %s4353
          %s4355 = sshll.u32 %s4338, 4
          %s4356 = int_to_ptr.vmem [resolvable:$true] %s4355
          %s4357 = sshll.u32 %s4354, 4
          %s4358 = int_to_ptr.hbm [resolvable:$true] %s4357
          %4363 = dma.vmem_to_hbm [thread:$0]  %s4356, 1024, %s4358, %s4335, 128, 128, 8
        $region88: #{tpu_custom_call.1} parent=51 // pred_fallthru
          _
        // Predicated region
        $region89: #{tpu_custom_call.1} parent=51 // pred_check
          %p4364 = pneg %p302
        $region90: #{tpu_custom_call.1} parent=51 // pred_check_branch
          %4366 = sbr.rel (%p4364) target = $region92
        $region91: #{tpu_custom_call.1} parent=51 // pred_region
          %s4367 = smul.u32 4, %s45
          %4369 = vsyncadd %s4340, 0
          %s4370 = smul.addr %s4367, 2
          %s4371 = smul.addr %s44, 8
          %s4372 = sadd.s32 %s4370, %s4371
          %s4373 = smul.addr %s4372, 8
          %s4374 = scalar_lea.hbm %s9, %s4373
          %s4375 = sshll.u32 %s4343, 4
          %s4376 = int_to_ptr.vmem [resolvable:$true] %s4375
          %s4377 = sshll.u32 %s4374, 4
          %s4378 = int_to_ptr.hbm [resolvable:$true] %s4377
          %4383 = dma.vmem_to_hbm [thread:$0]  %s4376, 1024, %s4378, %s4340, 128, 128, 8
        $region92: #{tpu_custom_call.1} parent=51 // pred_fallthru
          _
      $region52: #{tpu_custom_call.1} parent=5 // pred_fallthru
        _
      %p4384 = scmp.le.s32.totalorder 2, %s35
      // Predicated region
      $region93: #{tpu_custom_call.1} parent=5 // pred_check
        %p4385 = pneg %p4384
      $region94: #{tpu_custom_call.1} parent=5 // pred_check_branch
        %4387 = sbr.rel (%p4385) target = $region96
      $region95: #{tpu_custom_call.1} parent=5 // pred_region
        %s4388 = ssub.s32 %s35, 2
        // Predicated region
        $region97: #{tpu_custom_call.1} parent=95 // pred_check
          %p4389 = pneg %p280
        $region98: #{tpu_custom_call.1} parent=95 // pred_check_branch
          %4391 = sbr.rel (%p4389) target = $region100
        $region99: #{tpu_custom_call.1} parent=95 // pred_region
          %s4392 = sand.u32 %s265, 1
          %s4393 = scalar_lea.sflag [#allocation6], %s4392
          %s4394 = sand.u32 %s265, 1
          %s4395 = smul.addr %s4394, 64
          %s4396 = scalar_lea.vmem [#allocation18], %s4395
          %4398 = dma.done %s4393, 1024
        $region100: #{tpu_custom_call.1} parent=95 // pred_fallthru
          _
        // Predicated region
        $region101: #{tpu_custom_call.1} parent=95 // pred_check
          %p4399 = pneg %p308
        $region102: #{tpu_custom_call.1} parent=95 // pred_check_branch
          %4401 = sbr.rel (%p4399) target = $region104
        $region103: #{tpu_custom_call.1} parent=95 // pred_region
          %s4402 = sand.u32 %s293, 1
          %s4403 = scalar_lea.sflag [#allocation20], %s4402
          %s4404 = sand.u32 %s293, 1
          %s4405 = smul.addr %s4404, 64
          %s4406 = scalar_lea.vmem [#allocation19], %s4405
          %4408 = dma.done %s4403, 1024
        $region104: #{tpu_custom_call.1} parent=95 // pred_fallthru
          _
      $region96: #{tpu_custom_call.1} parent=5 // pred_fallthru
        _
    $region6: #{tpu_custom_call.1} parent=1 // loop_footer
      %s39 = sadd.s32 1, %s35
    $region7: #{tpu_custom_call.1} parent=1 // loop_footer_branch
      %34 = sbr.rel target = $region3
    $region8: #{tpu_custom_call.1} parent=1 // loop_exit
      _
    %4409 = vsyncpa [#allocation5], 1
    %s4410 = scalar_lea.sflag [#allocation5], 1
    %4411 = vsyncpa %s4410, 1
    %4412 = vsyncpa [#allocation8], 1
    %s4413 = scalar_lea.sflag [#allocation8], 1
    %4414 = vsyncpa %s4413, 1
    %4415 = vsyncpa [#allocation11], 1
    %s4416 = scalar_lea.sflag [#allocation11], 1
    %4417 = vsyncpa %s4416, 1
    %4418 = vsyncpa [#allocation14], 1
    %s4419 = scalar_lea.sflag [#allocation14], 1
    %4420 = vsyncpa %s4419, 1
    %4421 = vsyncpa [#allocation17], 1
    %4422 = vsyncpa [#allocation6], 1
    %s4423 = scalar_lea.sflag [#allocation6], 1
    %4424 = vsyncpa %s4423, 1
    %4425 = vsyncpa [#allocation20], 1
    %s4426 = scalar_lea.sflag [#allocation20], 1
    %4427 = vsyncpa %s4426, 1

</llo_original>
